<compile_context>
chip_gen: v6e
topology: v6e:2x2x1
jax: 0.10.0
libtpu: 0.0.40
codegen_flags: <defaults>
</compile_context>

<pallas_src>
from functools import partial

import jax
import jax.numpy as jnp
from jax.experimental import pallas as pl
from jax.experimental.pallas import tpu as pltpu

BN_EPS = 1e-5
IN_CHANS = 3
STEM_SIZE = 32

LANE = 128                    # all channel dims zero-padded to this (lane-dense)
MAX_TILE_M = 1024             # matmul row-tile upper bound
MXU_DTYPE = jnp.bfloat16      # MXU operand dtype (f32 accumulation)
ACT_DTYPE = jnp.bfloat16      # inter-layer activation storage dtype


def _pick_vmem_limit():
    """Generation-aware scoped-VMEM budget (~half of physical VMEM)."""
    try:
        cap = pltpu.get_tpu_info().vmem_capacity_bytes
    except Exception:                      # fall back to a v7x-safe budget
        cap = 64 * 1024 * 1024
    return int(min(max(cap // 2, 32 * 1024 * 1024), 96 * 1024 * 1024))


VMEM_LIMIT = _pick_vmem_limit()


def _round_up(x, m):
    return (x + m - 1) // m * m


def _pad_axis(x, axis, target):
    pad = target - x.shape[axis]
    if pad <= 0:
        return x
    cfg = [(0, 0)] * x.ndim
    cfg[axis] = (0, pad)
    return jnp.pad(x, cfg)


# ----------------------------- Pallas kernels -----------------------------

def _matmul_bias_act_kernel(a_ref, b_ref, bias_ref, o_ref, *, act):
    # y = act(A @ B + bias); BN scale pre-folded into B, BN shift into bias.
    acc = jnp.dot(a_ref[...], b_ref[...], preferred_element_type=jnp.float32)
    y = acc + bias_ref[...]
    if act == "relu":
        y = jnp.maximum(y, 0.0)
    o_ref[...] = y.astype(o_ref.dtype)


def matmul_bias_act(a, b, bias, act="none"):
    """Row-tiled fused (1x1 conv / im2col conv) matmul + bias + activation.

    `a` / `b` are expected pre-cast to bf16, `bias` pre-reshaped to (1, N) f32.
    Output is bf16 (activation storage dtype).
    """
    M, K = a.shape
    N = b.shape[1]
    # Largest tile <= MAX_TILE_M that still yields >= 2 "parallel" grid steps
    # whenever M >= 16 (v7x has 2 TensorCores per chip).
    tm = min(MAX_TILE_M, max(8, _round_up((M + 1) // 2, 8)))
    m_pad = _round_up(M, tm)
    if m_pad != M:
        a = _pad_axis(a, 0, m_pad)
    out = pl.pallas_call(
        partial(_matmul_bias_act_kernel, act=act),
        out_shape=jax.ShapeDtypeStruct((m_pad, N), ACT_DTYPE),
        grid=(m_pad // tm,),
        in_specs=[
            pl.BlockSpec((tm, K), lambda i: (i, 0)),     # tiled activations
            pl.BlockSpec((K, N), lambda i: (0, 0)),      # full (folded) weight
            pl.BlockSpec((1, N), lambda i: (0, 0)),      # full bias
        ],
        out_specs=pl.BlockSpec((tm, N), lambda i: (i, 0)),
        compiler_params=pltpu.CompilerParams(
            dimension_semantics=("parallel",),
            vmem_limit_bytes=VMEM_LIMIT),
    )(a, b, bias)
    return out[:M]


def _dw_se_kernel(src_ref, w_ref, b_ref, w1_ref, b1_ref, w2_ref, b2_ref, o_ref,
                  *, tap_map, oh, ow):
    """Fused 3x3 depthwise conv (BN folded) + ReLU + SqueezeExcite for one image.

    src_ref: [P, 1, HS, WS, C] padded (stride 1) or phase-split (stride 2) input.
    tap_map[t] = (phase, row_off, col_off) so every tap is a static rectangular
    slice -- no HBM im2col, no strided loads.
    """
    c = o_ref.shape[-1]
    acc = jnp.zeros((oh, ow, c), jnp.float32)
    for t, (p, r0, c0) in enumerate(tap_map):           # 9 taps, static unroll
        tap = src_ref[p, 0, r0:r0 + oh, c0:c0 + ow, :].astype(jnp.float32)
        acc = acc + tap * w_ref[t]                      # w_ref[t]: [1, C]
    y = jnp.maximum(acc + b_ref[...], 0.0)              # folded BN shift + ReLU

    # SqueezeExcite, fused: pool over the full per-image plane held in VMEM.
    pooled = jnp.mean(jnp.mean(y, axis=0), axis=0, keepdims=True)       # [1, C]
    h = jnp.dot(pooled, w1_ref[...], preferred_element_type=jnp.float32) + b1_ref[...]
    h = jnp.maximum(h, 0.0)
    g = jnp.dot(h, w2_ref[...], preferred_element_type=jnp.float32) + b2_ref[...]
    g = 1.0 / (1.0 + jnp.exp(-g))                       # exact sigmoid (tiny)
    o_ref[0] = (y * g).astype(o_ref.dtype)


def dw_se_block(x_nhwc, dw_prm, se_prm, stride):
    """3x3 depthwise conv + BN + ReLU + SE, one batch image per grid step."""
    N, H, W, C = x_nhwc.shape
    OH = (H + 2 - 3) // stride + 1
    OW = (W + 2 - 3) // stride + 1
    xp = jnp.pad(x_nhwc, ((0, 0), (1, 1), (1, 1), (0, 0)))      # spatial halo

    if stride == 1:
        src = xp[None]                                   # [1, N, H+2, W+2, C]
        tap_map = tuple((0, kh, kw) for kh in range(3) for kw in range(3))
    else:
        # Space-to-depth phase split (XLA strided slices, ~1.5x bytes vs 9x im2col).
        # phase p = 2*kw + (kh % 2); tap (kh, kw) = phases[p][:, kh//2 : kh//2+OH].
        need_rows = 2 * OH + 2
        if xp.shape[1] < need_rows:
            xp = jnp.pad(xp, ((0, 0), (0, need_rows - xp.shape[1]), (0, 0), (0, 0)))
        phases = []
        for kw in range(3):
            col = jax.lax.slice_in_dim(xp, kw, kw + 2 * (OW - 1) + 1, 2, axis=2)
            for par in range(2):
                phases.append(
                    jax.lax.slice_in_dim(col, par, par + 2 * OH + 1, 2, axis=1))
        src = jnp.stack(phases, axis=0)                  # [6, N, OH+1, OW, C]
        tap_map = tuple((2 * kw + (kh % 2), kh // 2, 0)
                        for kh in range(3) for kw in range(3))

    P, _, HS, WS, _ = src.shape
    out = pl.pallas_call(
        partial(_dw_se_kernel, tap_map=tap_map, oh=OH, ow=OW),
        out_shape=jax.ShapeDtypeStruct((N, OH, OW, C), ACT_DTYPE),
        grid=(N,),                                       # batch-parallel (megacore)
        in_specs=[
            pl.BlockSpec((P, 1, HS, WS, C), lambda n: (0, n, 0, 0, 0)),
            pl.BlockSpec((9, 1, C), lambda n: (0, 0, 0)),   # folded dw taps (f32)
            pl.BlockSpec((1, C), lambda n: (0, 0)),         # dw bias
            pl.BlockSpec((C, C), lambda n: (0, 0)),         # SE w1 (Cr padded)
            pl.BlockSpec((1, C), lambda n: (0, 0)),         # SE b1
            pl.BlockSpec((C, C), lambda n: (0, 0)),         # SE w2
            pl.BlockSpec((1, C), lambda n: (0, 0)),         # SE b2
        ],
        out_specs=pl.BlockSpec((1, OH, OW, C), lambda n: (n, 0, 0, 0)),
        compiler_params=pltpu.CompilerParams(
            dimension_semantics=("parallel",),
            vmem_limit_bytes=VMEM_LIMIT),
    )(src, dw_prm["w"], dw_prm["bias"],
      se_prm["w1"], se_prm["b1"], se_prm["w2"], se_prm["b2"])
    return out


# ------------------------------ JAX glue -----------------------------------

def _im2col_cols(x_nhwc, k, stride, pad):
    """im2col for the stem only (K = 9*3 = 27, negligible inflation)."""
    N, H, W, C = x_nhwc.shape
    xp = jnp.pad(x_nhwc, ((0, 0), (pad, pad), (pad, pad), (0, 0)))
    OH = (H + 2 * pad - k) // stride + 1
    OW = (W + 2 * pad - k) // stride + 1
    cols = []
    for kh in range(k):
        for kw in range(k):
            cols.append(
                xp[:, kh:kh + stride * OH:stride, kw:kw + stride * OW:stride, :]
                .reshape(N * OH * OW, C))
    return cols, OH, OW


def stem_conv_bn_relu(x_nhwc, prm):
    """3x3 s2 conv as im2col + fused Pallas matmul (BN folded, ReLU)."""
    N = x_nhwc.shape[0]
    cols, OH, OW = _im2col_cols(x_nhwc, 3, 2, 1)
    a = jnp.concatenate(cols, axis=1)                    # [M, 27], (kh,kw,cin) order
    a = _pad_axis(a, 1, prm["w"].shape[0]).astype(MXU_DTYPE)   # K 27 -> 32
    y = matmul_bias_act(a, prm["w"], prm["bias"], act="relu")
    return y.reshape(N, OH, OW, LANE)


def pointwise_bn_act(x_nhwc, prm, act):
    N, H, W, C = x_nhwc.shape
    y = matmul_bias_act(x_nhwc.reshape(N * H * W, C), prm["w"], prm["bias"], act)
    return y.reshape(N, H, W, LANE)


def ds_block(x, prm):
    # DepthwiseSeparable: dw3x3 s1 + BN + ReLU + SE (fused) -> pw1x1 + BN
    y = dw_se_block(x, prm["dw"], prm["se"], stride=1)
    y = pointwise_bn_act(y, prm["pw"], act="none")
    return y


def ir_block(x, prm, stride):
    # InvertedResidual: pw expand + BN + ReLU -> dw3x3 + BN + ReLU + SE (fused)
    #                   -> pw project + BN
    y = pointwise_bn_act(x, prm["exp"], act="relu")
    y = dw_se_block(y, prm["dw"], prm["se"], stride=stride)
    y = pointwise_bn_act(y, prm["proj"], act="none")
    return y


# --------------------------- parameter init --------------------------------

def init_params(key):
    counter = [0]

    def nxt():
        counter[0] += 1
        return jax.random.fold_in(key, counter[0])

    def nrm(shape, s=0.1):
        return s * jax.random.normal(nxt(), shape, jnp.float32)

    def bn(c):
        return dict(
            gamma=1.0 + 0.1 * jax.random.normal(nxt(), (c,), jnp.float32),
            beta=0.1 * jax.random.normal(nxt(), (c,), jnp.float32),
            mean=0.1 * jax.random.normal(nxt(), (c,), jnp.float32),
            var=jnp.abs(1.0 + 0.1 * jax.random.normal(nxt(), (c,), jnp.float32)),
        )

    def se(mid_c, in_c):
        r = max(1, in_c // 4)
        return dict(w1=nrm((mid_c, r)), b1=nrm((r,)), w2=nrm((r, mid_c)), b2=nrm((mid_c,)))

    params = {
        # stem: 3x3 s2 conv, in_chans -> 32, BN + ReLU
        "stem": dict(w=nrm((3, 3, IN_CHANS, STEM_SIZE)), bn=bn(STEM_SIZE)),
        # stage 1: ds block, 32 -> 16, s1
        "s1": dict(
            dw=dict(w=nrm((9, 32)), bn=bn(32)),
            se=se(32, 32),
            pw=dict(w=nrm((32, 16)), bn=bn(16)),
        ),
        # stage 2: ir block, 16 -> 24, expand x4, s2
        "s2": dict(
            exp=dict(w=nrm((16, 64)), bn=bn(64)),
            dw=dict(w=nrm((9, 64)), bn=bn(64)),
            se=se(64, 16),
            proj=dict(w=nrm((64, 24)), bn=bn(24)),
        ),
        # stage 3: ir block, 24 -> 40, expand x4, s2
        "s3": dict(
            exp=dict(w=nrm((24, 96)), bn=bn(96)),
            dw=dict(w=nrm((9, 96)), bn=bn(96)),
            se=se(96, 24),
            proj=dict(w=nrm((96, 40)), bn=bn(40)),
        ),
    }
    return params


def _fold_bn(bn):
    scale = bn["gamma"] / jnp.sqrt(bn["var"] + BN_EPS)
    bias = bn["beta"] - bn["mean"] * scale
    return scale, bias


def prepare_params(params):
    """Offline prep: fold BN into weights, pad channels to LANE, pre-cast dtypes."""
    def conv_stem(w, bn):                               # stem: [k,k,Cin,Cout]
        k, _, cin, cout = w.shape
        scale, bias = _fold_bn(bn)
        wf = (w * scale).reshape(k * k * cin, cout)
        wf = _pad_axis(wf, 0, _round_up(k * k * cin, 8))        # K 27 -> 32
        wf = _pad_axis(wf, 1, LANE)
        return dict(w=wf.astype(MXU_DTYPE),
                    bias=_pad_axis(bias, 0, LANE).reshape(1, LANE).astype(jnp.float32))

    def pw(w, bn):                                      # pointwise: [Cin, Cout]
        scale, bias = _fold_bn(bn)
        wf = _pad_axis(_pad_axis(w * scale, 0, LANE), 1, LANE)
        return dict(w=wf.astype(MXU_DTYPE),
                    bias=_pad_axis(bias, 0, LANE).reshape(1, LANE).astype(jnp.float32))

    def dw(w, bn):                                      # depthwise: [9, C]
        scale, bias = _fold_bn(bn)
        wf = _pad_axis(w * scale, 1, LANE)[:, None, :]          # [9, 1, LANE] f32
        return dict(w=wf.astype(jnp.float32),
                    bias=_pad_axis(bias, 0, LANE).reshape(1, LANE).astype(jnp.float32))

    def se(p):
        return dict(
            w1=_pad_axis(_pad_axis(p["w1"], 0, LANE), 1, LANE).astype(jnp.float32),
            b1=_pad_axis(p["b1"], 0, LANE).reshape(1, LANE).astype(jnp.float32),
            w2=_pad_axis(_pad_axis(p["w2"], 0, LANE), 1, LANE).astype(jnp.float32),
            b2=_pad_axis(p["b2"], 0, LANE).reshape(1, LANE).astype(jnp.float32),
        )

    return {
        "stem": conv_stem(params["stem"]["w"], params["stem"]["bn"]),
        "s1": dict(dw=dw(**params["s1"]["dw"]), se=se(params["s1"]["se"]),
                   pw=pw(**params["s1"]["pw"])),
        "s2": dict(exp=pw(**params["s2"]["exp"]), dw=dw(**params["s2"]["dw"]),
                   se=se(params["s2"]["se"]), proj=pw(**params["s2"]["proj"])),
        "s3": dict(exp=pw(**params["s3"]["exp"]), dw=dw(**params["s3"]["dw"]),
                   se=se(params["s3"]["se"]), proj=pw(**params["s3"]["proj"])),
    }


# ------------------------------ forward ------------------------------------

FEATURE_CHANNELS = (STEM_SIZE, 16, 24, 40)   # real (unpadded) channel counts


def efficientnet_features_forward(prepared, x_nchw):
    """Returns a list of feature maps (NCHW, f32), matching the PyTorch forward."""
    x = jnp.transpose(x_nchw, (0, 2, 3, 1)).astype(jnp.float32)  # NCHW -> NHWC

    # conv_stem + bn1 (+ ReLU); stage 0 feature
    x = stem_conv_bn_relu(x, prepared["stem"])
    features = [x]

    # blocks (stages 1..3), each a feature-producing stage
    x = ds_block(x, prepared["s1"])
    features.append(x)
    x = ir_block(x, prepared["s2"], stride=2)
    features.append(x)
    x = ir_block(x, prepared["s3"], stride=2)
    features.append(x)

    # strip channel padding, back to PyTorch NCHW / f32 convention
    return [jnp.transpose(f[..., :c], (0, 3, 1, 2)).astype(jnp.float32)
            for f, c in zip(features, FEATURE_CHANNELS)]


# -------------------------------- main --------------------------------------

if __name__ == "__main__":
    key = jax.random.PRNGKey(0)
    pkey, xkey = jax.random.split(key)
    params = init_params(pkey)
    prepared = prepare_params(params)   # offline: BN fold + channel padding + casts

    # small input consistent with the module: batch=2, in_chans=3, 16x16 spatial
    x = jax.random.normal(xkey, (2, IN_CHANS, 16, 16), jnp.float32)

    feats = jax.jit(efficientnet_features_forward)(prepared, x)
    feats = [jax.block_until_ready(f) for f in feats]

    expected = [(2, 32, 8, 8), (2, 16, 8, 8), (2, 24, 4, 4), (2, 40, 2, 2)]
    assert [tuple(f.shape) for f in feats] == expected, [f.shape for f in feats]
    assert all(bool(jnp.all(jnp.isfinite(f))) for f in feats)
    print("KERNEL_OK")
</pallas_src>

<mosaic_0001>
module attributes {stable_mosaic.version = 11 : i64} {
  func.func @_matmul_bias_act_kernel(%arg0: i32, %arg1: memref<64x32xbf16, #tpu.memory_space<vmem>>, %arg2: memref<32x128xbf16, #tpu.memory_space<vmem>>, %arg3: memref<1x128xf32, #tpu.memory_space<vmem>>, %arg4: memref<64x128xbf16, #tpu.memory_space<vmem>>) attributes {dimension_semantics = [#tpu.dimension_semantics<parallel>], iteration_bounds = array<i64: 2>, scalar_prefetch = 0 : i64, scratch_operands = 0 : i64, tpu.core_type = #tpu.core_type<tc>, window_params = [{transform_indices = @transform_0, window_bounds = array<i64: 64, 32>}, {pipeline_mode = #tpu.pipeline_mode<synchronous>, transform_indices = @transform_1, window_bounds = array<i64: 32, 128>}, {pipeline_mode = #tpu.pipeline_mode<synchronous>, transform_indices = @transform_2, window_bounds = array<i64: 1, 128>}, {transform_indices = @transform_3, window_bounds = array<i64: 64, 128>}]} {
    %c0 = arith.constant 0 : index
    %c0_0 = arith.constant 0 : index
    %0 = vector.load %arg1[%c0, %c0_0] : memref<64x32xbf16, #tpu.memory_space<vmem>>, vector<64x32xbf16>
    %c0_1 = arith.constant 0 : index
    %c0_2 = arith.constant 0 : index
    %1 = vector.load %arg2[%c0_1, %c0_2] : memref<32x128xbf16, #tpu.memory_space<vmem>>, vector<32x128xbf16>
    %cst = arith.constant dense<0.000000e+00> : vector<64x128xf32>
    %2 = tpu.matmul %0, %1, %cst {dimension_numbers = #tpu.dot_dimension_numbers<[1], [0], [0], [1], [0, 0, 1, 1], [], []>} : vector<64x32xbf16>, vector<32x128xbf16>, vector<64x128xf32> -> vector<64x128xf32>
    %c0_3 = arith.constant 0 : index
    %c0_4 = arith.constant 0 : index
    %3 = vector.load %arg3[%c0_3, %c0_4] : memref<1x128xf32, #tpu.memory_space<vmem>>, vector<1x128xf32>
    %4 = vector.broadcast %3 : vector<1x128xf32> to vector<64x128xf32>
    %5 = arith.addf %2, %4 : vector<64x128xf32>
    %cst_5 = arith.constant 0.000000e+00 : f32
    %6 = vector.broadcast %cst_5 : f32 to vector<64x128xf32>
    %7 = arith.maximumf %5, %6 : vector<64x128xf32>
    %8 = arith.truncf %7 : vector<64x128xf32> to vector<64x128xbf16>
    %c0_6 = arith.constant 0 : index
    %c0_7 = arith.constant 0 : index
    %9 = vector.load %arg4[%c0_6, %c0_7] : memref<64x128xbf16, #tpu.memory_space<vmem>>, vector<64x128xbf16>
    tpu.vector_store %arg4[%c0_6, %c0_7], %8 {strides = array<i32>} : memref<64x128xbf16, #tpu.memory_space<vmem>>, vector<64x128xbf16>,
    return
  }
  func.func @transform_0(%arg0: i32) -> (i32, i32) {
    %c0_i32 = arith.constant 0 : i32
    %c0_i32_0 = arith.constant 0 : i32
    return %arg0, %c0_i32 : i32, i32
  }
  func.func @transform_1(%arg0: i32) -> (i32, i32) {
    %c0_i32 = arith.constant 0 : i32
    %c0_i32_0 = arith.constant 0 : i32
    %c0_i32_1 = arith.constant 0 : i32
    return %c0_i32, %c0_i32_0 : i32, i32
  }
  func.func @transform_2(%arg0: i32) -> (i32, i32) {
    %c0_i32 = arith.constant 0 : i32
    %c0_i32_0 = arith.constant 0 : i32
    %c0_i32_1 = arith.constant 0 : i32
    return %c0_i32, %c0_i32_0 : i32, i32
  }
  func.func @transform_3(%arg0: i32) -> (i32, i32) {
    %c0_i32 = arith.constant 0 : i32
    %c0_i32_0 = arith.constant 0 : i32
    return %arg0, %c0_i32 : i32, i32
  }
}

module attributes {stable_mosaic.version = 11 : i64} {
  func.func @_matmul_bias_act_kernel(%arg0: i32, %arg1: memref<64x128xbf16, #tpu.memory_space<vmem>>, %arg2: memref<128x128xbf16, #tpu.memory_space<vmem>>, %arg3: memref<1x128xf32, #tpu.memory_space<vmem>>, %arg4: memref<64x128xbf16, #tpu.memory_space<vmem>>) attributes {dimension_semantics = [#tpu.dimension_semantics<parallel>], iteration_bounds = array<i64: 2>, scalar_prefetch = 0 : i64, scratch_operands = 0 : i64, tpu.core_type = #tpu.core_type<tc>, window_params = [{transform_indices = @transform_0, window_bounds = array<i64: 64, 128>}, {pipeline_mode = #tpu.pipeline_mode<synchronous>, transform_indices = @transform_1, window_bounds = array<i64: 128, 128>}, {pipeline_mode = #tpu.pipeline_mode<synchronous>, transform_indices = @transform_2, window_bounds = array<i64: 1, 128>}, {transform_indices = @transform_3, window_bounds = array<i64: 64, 128>}]} {
    %c0 = arith.constant 0 : index
    %c0_0 = arith.constant 0 : index
    %0 = vector.load %arg1[%c0, %c0_0] : memref<64x128xbf16, #tpu.memory_space<vmem>>, vector<64x128xbf16>
    %c0_1 = arith.constant 0 : index
    %c0_2 = arith.constant 0 : index
    %1 = vector.load %arg2[%c0_1, %c0_2] : memref<128x128xbf16, #tpu.memory_space<vmem>>, vector<128x128xbf16>
    %cst = arith.constant dense<0.000000e+00> : vector<64x128xf32>
    %2 = tpu.matmul %0, %1, %cst {dimension_numbers = #tpu.dot_dimension_numbers<[1], [0], [0], [1], [0, 0, 1, 1], [], []>} : vector<64x128xbf16>, vector<128x128xbf16>, vector<64x128xf32> -> vector<64x128xf32>
    %c0_3 = arith.constant 0 : index
    %c0_4 = arith.constant 0 : index
    %3 = vector.load %arg3[%c0_3, %c0_4] : memref<1x128xf32, #tpu.memory_space<vmem>>, vector<1x128xf32>
    %4 = vector.broadcast %3 : vector<1x128xf32> to vector<64x128xf32>
    %5 = arith.addf %2, %4 : vector<64x128xf32>
    %cst_5 = arith.constant 0.000000e+00 : f32
    %6 = vector.broadcast %cst_5 : f32 to vector<64x128xf32>
    %7 = arith.maximumf %5, %6 : vector<64x128xf32>
    %8 = arith.truncf %7 : vector<64x128xf32> to vector<64x128xbf16>
    %c0_6 = arith.constant 0 : index
    %c0_7 = arith.constant 0 : index
    %9 = vector.load %arg4[%c0_6, %c0_7] : memref<64x128xbf16, #tpu.memory_space<vmem>>, vector<64x128xbf16>
    tpu.vector_store %arg4[%c0_6, %c0_7], %8 {strides = array<i32>} : memref<64x128xbf16, #tpu.memory_space<vmem>>, vector<64x128xbf16>,
    return
  }
  func.func @transform_0(%arg0: i32) -> (i32, i32) {
    %c0_i32 = arith.constant 0 : i32
    %c0_i32_0 = arith.constant 0 : i32
    return %arg0, %c0_i32 : i32, i32
  }
  func.func @transform_1(%arg0: i32) -> (i32, i32) {
    %c0_i32 = arith.constant 0 : i32
    %c0_i32_0 = arith.constant 0 : i32
    %c0_i32_1 = arith.constant 0 : i32
    return %c0_i32, %c0_i32_0 : i32, i32
  }
  func.func @transform_2(%arg0: i32) -> (i32, i32) {
    %c0_i32 = arith.constant 0 : i32
    %c0_i32_0 = arith.constant 0 : i32
    %c0_i32_1 = arith.constant 0 : i32
    return %c0_i32, %c0_i32_0 : i32, i32
  }
  func.func @transform_3(%arg0: i32) -> (i32, i32) {
    %c0_i32 = arith.constant 0 : i32
    %c0_i32_0 = arith.constant 0 : i32
    return %arg0, %c0_i32 : i32, i32
  }
}

module attributes {stable_mosaic.version = 11 : i64} {
  func.func @_dw_se_kernel(%arg0: i32, %arg1: memref<1x1x10x10x128xbf16, #tpu.memory_space<vmem>>, %arg2: memref<9x1x128xf32, #tpu.memory_space<vmem>>, %arg3: memref<1x128xf32, #tpu.memory_space<vmem>>, %arg4: memref<128x128xf32, #tpu.memory_space<vmem>>, %arg5: memref<1x128xf32, #tpu.memory_space<vmem>>, %arg6: memref<128x128xf32, #tpu.memory_space<vmem>>, %arg7: memref<1x128xf32, #tpu.memory_space<vmem>>, %arg8: memref<1x8x8x128xbf16, #tpu.memory_space<vmem>>) attributes {dimension_semantics = [#tpu.dimension_semantics<parallel>], iteration_bounds = array<i64: 2>, scalar_prefetch = 0 : i64, scratch_operands = 0 : i64, tpu.core_type = #tpu.core_type<tc>, window_params = [{transform_indices = @transform_0, window_bounds = array<i64: 1, 1, 10, 10, 128>}, {pipeline_mode = #tpu.pipeline_mode<synchronous>, transform_indices = @transform_1, window_bounds = array<i64: 9, 1, 128>}, {pipeline_mode = #tpu.pipeline_mode<synchronous>, transform_indices = @transform_2, window_bounds = array<i64: 1, 128>}, {pipeline_mode = #tpu.pipeline_mode<synchronous>, transform_indices = @transform_3, window_bounds = array<i64: 128, 128>}, {pipeline_mode = #tpu.pipeline_mode<synchronous>, transform_indices = @transform_4, window_bounds = array<i64: 1, 128>}, {pipeline_mode = #tpu.pipeline_mode<synchronous>, transform_indices = @transform_5, window_bounds = array<i64: 128, 128>}, {pipeline_mode = #tpu.pipeline_mode<synchronous>, transform_indices = @transform_6, window_bounds = array<i64: 1, 128>}, {transform_indices = @transform_7, window_bounds = array<i64: 1, 8, 8, 128>}]} {
    %cst = arith.constant 0.000000e+00 : f32
    %0 = vector.broadcast %cst : f32 to vector<8x8x128xf32>
    %c0 = arith.constant 0 : index
    %c0_0 = arith.constant 0 : index
    %c0_1 = arith.constant 0 : index
    %c0_2 = arith.constant 0 : index
    %c0_3 = arith.constant 0 : index
    %1 = vector.load %arg1[%c0, %c0_0, %c0_1, %c0_2, %c0_3] : memref<1x1x10x10x128xbf16, #tpu.memory_space<vmem>>, vector<1x1x8x8x128xbf16>
    %2 = vector.shape_cast %1 : vector<1x1x8x8x128xbf16> to vector<8x8x128xbf16>
    %3 = arith.extf %2 : vector<8x8x128xbf16> to vector<8x8x128xf32>
    %c0_4 = arith.constant 0 : index
    %c0_5 = arith.constant 0 : index
    %c0_6 = arith.constant 0 : index
    %4 = vector.load %arg2[%c0_4, %c0_5, %c0_6] : memref<9x1x128xf32, #tpu.memory_space<vmem>>, vector<1x1x128xf32>
    %5 = vector.shape_cast %4 : vector<1x1x128xf32> to vector<1x128xf32>
    %6 = vector.shape_cast %5 : vector<1x128xf32> to vector<1x1x128xf32>
    %7 = vector.broadcast %6 : vector<1x1x128xf32> to vector<8x8x128xf32>
    %8 = arith.mulf %3, %7 : vector<8x8x128xf32>
    %9 = arith.addf %0, %8 : vector<8x8x128xf32>
    %c0_7 = arith.constant 0 : index
    %c0_8 = arith.constant 0 : index
    %c0_9 = arith.constant 0 : index
    %c1 = arith.constant 1 : index
    %c0_10 = arith.constant 0 : index
    %10 = vector.load %arg1[%c0_7, %c0_8, %c0_9, %c1, %c0_10] : memref<1x1x10x10x128xbf16, #tpu.memory_space<vmem>>, vector<1x1x8x8x128xbf16>
    %11 = vector.shape_cast %10 : vector<1x1x8x8x128xbf16> to vector<8x8x128xbf16>
    %12 = arith.extf %11 : vector<8x8x128xbf16> to vector<8x8x128xf32>
    %c1_11 = arith.constant 1 : index
    %c0_12 = arith.constant 0 : index
    %c0_13 = arith.constant 0 : index
    %13 = vector.load %arg2[%c1_11, %c0_12, %c0_13] : memref<9x1x128xf32, #tpu.memory_space<vmem>>, vector<1x1x128xf32>
    %14 = vector.shape_cast %13 : vector<1x1x128xf32> to vector<1x128xf32>
    %15 = vector.shape_cast %14 : vector<1x128xf32> to vector<1x1x128xf32>
    %16 = vector.broadcast %15 : vector<1x1x128xf32> to vector<8x8x128xf32>
    %17 = arith.mulf %12, %16 : vector<8x8x128xf32>
    %18 = arith.addf %9, %17 : vector<8x8x128xf32>
    %c0_14 = arith.constant 0 : index
    %c0_15 = arith.constant 0 : index
    %c0_16 = arith.constant 0 : index
    %c2 = arith.constant 2 : index
    %c0_17 = arith.constant 0 : index
    %19 = vector.load %arg1[%c0_14, %c0_15, %c0_16, %c2, %c0_17] : memref<1x1x10x10x128xbf16, #tpu.memory_space<vmem>>, vector<1x1x8x8x128xbf16>
    %20 = vector.shape_cast %19 : vector<1x1x8x8x128xbf16> to vector<8x8x128xbf16>
    %21 = arith.extf %20 : vector<8x8x128xbf16> to vector<8x8x128xf32>
    %c2_18 = arith.constant 2 : index
    %c0_19 = arith.constant 0 : index
    %c0_20 = arith.constant 0 : index
    %22 = vector.load %arg2[%c2_18, %c0_19, %c0_20] : memref<9x1x128xf32, #tpu.memory_space<vmem>>, vector<1x1x128xf32>
    %23 = vector.shape_cast %22 : vector<1x1x128xf32> to vector<1x128xf32>
    %24 = vector.shape_cast %23 : vector<1x128xf32> to vector<1x1x128xf32>
    %25 = vector.broadcast %24 : vector<1x1x128xf32> to vector<8x8x128xf32>
    %26 = arith.mulf %21, %25 : vector<8x8x128xf32>
    %27 = arith.addf %18, %26 : vector<8x8x128xf32>
    %c0_21 = arith.constant 0 : index
    %c0_22 = arith.constant 0 : index
    %c1_23 = arith.constant 1 : index
    %c0_24 = arith.constant 0 : index
    %c0_25 = arith.constant 0 : index
    %28 = vector.load %arg1[%c0_21, %c0_22, %c1_23, %c0_24, %c0_25] : memref<1x1x10x10x128xbf16, #tpu.memory_space<vmem>>, vector<1x1x8x8x128xbf16>
    %29 = vector.shape_cast %28 : vector<1x1x8x8x128xbf16> to vector<8x8x128xbf16>
    %30 = arith.extf %29 : vector<8x8x128xbf16> to vector<8x8x128xf32>
    %c3 = arith.constant 3 : index
    %c0_26 = arith.constant 0 : index
    %c0_27 = arith.constant 0 : index
    %31 = vector.load %arg2[%c3, %c0_26, %c0_27] : memref<9x1x128xf32, #tpu.memory_space<vmem>>, vector<1x1x128xf32>
    %32 = vector.shape_cast %31 : vector<1x1x128xf32> to vector<1x128xf32>
    %33 = vector.shape_cast %32 : vector<1x128xf32> to vector<1x1x128xf32>
    %34 = vector.broadcast %33 : vector<1x1x128xf32> to vector<8x8x128xf32>
    %35 = arith.mulf %30, %34 : vector<8x8x128xf32>
    %36 = arith.addf %27, %35 : vector<8x8x128xf32>
    %c0_28 = arith.constant 0 : index
    %c0_29 = arith.constant 0 : index
    %c1_30 = arith.constant 1 : index
    %c1_31 = arith.constant 1 : index
    %c0_32 = arith.constant 0 : index
    %37 = vector.load %arg1[%c0_28, %c0_29, %c1_30, %c1_31, %c0_32] : memref<1x1x10x10x128xbf16, #tpu.memory_space<vmem>>, vector<1x1x8x8x128xbf16>
    %38 = vector.shape_cast %37 : vector<1x1x8x8x128xbf16> to vector<8x8x128xbf16>
    %39 = arith.extf %38 : vector<8x8x128xbf16> to vector<8x8x128xf32>
    %c4 = arith.constant 4 : index
    %c0_33 = arith.constant 0 : index
    %c0_34 = arith.constant 0 : index
    %40 = vector.load %arg2[%c4, %c0_33, %c0_34] : memref<9x1x128xf32, #tpu.memory_space<vmem>>, vector<1x1x128xf32>
    %41 = vector.shape_cast %40 : vector<1x1x128xf32> to vector<1x128xf32>
    %42 = vector.shape_cast %41 : vector<1x128xf32> to vector<1x1x128xf32>
    %43 = vector.broadcast %42 : vector<1x1x128xf32> to vector<8x8x128xf32>
    %44 = arith.mulf %39, %43 : vector<8x8x128xf32>
    %45 = arith.addf %36, %44 : vector<8x8x128xf32>
    %c0_35 = arith.constant 0 : index
    %c0_36 = arith.constant 0 : index
    %c1_37 = arith.constant 1 : index
    %c2_38 = arith.constant 2 : index
    %c0_39 = arith.constant 0 : index
    %46 = vector.load %arg1[%c0_35, %c0_36, %c1_37, %c2_38, %c0_39] : memref<1x1x10x10x128xbf16, #tpu.memory_space<vmem>>, vector<1x1x8x8x128xbf16>
    %47 = vector.shape_cast %46 : vector<1x1x8x8x128xbf16> to vector<8x8x128xbf16>
    %48 = arith.extf %47 : vector<8x8x128xbf16> to vector<8x8x128xf32>
    %c5 = arith.constant 5 : index
    %c0_40 = arith.constant 0 : index
    %c0_41 = arith.constant 0 : index
    %49 = vector.load %arg2[%c5, %c0_40, %c0_41] : memref<9x1x128xf32, #tpu.memory_space<vmem>>, vector<1x1x128xf32>
    %50 = vector.shape_cast %49 : vector<1x1x128xf32> to vector<1x128xf32>
    %51 = vector.shape_cast %50 : vector<1x128xf32> to vector<1x1x128xf32>
    %52 = vector.broadcast %51 : vector<1x1x128xf32> to vector<8x8x128xf32>
    %53 = arith.mulf %48, %52 : vector<8x8x128xf32>
    %54 = arith.addf %45, %53 : vector<8x8x128xf32>
    %c0_42 = arith.constant 0 : index
    %c0_43 = arith.constant 0 : index
    %c2_44 = arith.constant 2 : index
    %c0_45 = arith.constant 0 : index
    %c0_46 = arith.constant 0 : index
    %55 = vector.load %arg1[%c0_42, %c0_43, %c2_44, %c0_45, %c0_46] : memref<1x1x10x10x128xbf16, #tpu.memory_space<vmem>>, vector<1x1x8x8x128xbf16>
    %56 = vector.shape_cast %55 : vector<1x1x8x8x128xbf16> to vector<8x8x128xbf16>
    %57 = arith.extf %56 : vector<8x8x128xbf16> to vector<8x8x128xf32>
    %c6 = arith.constant 6 : index
    %c0_47 = arith.constant 0 : index
    %c0_48 = arith.constant 0 : index
    %58 = vector.load %arg2[%c6, %c0_47, %c0_48] : memref<9x1x128xf32, #tpu.memory_space<vmem>>, vector<1x1x128xf32>
    %59 = vector.shape_cast %58 : vector<1x1x128xf32> to vector<1x128xf32>
    %60 = vector.shape_cast %59 : vector<1x128xf32> to vector<1x1x128xf32>
    %61 = vector.broadcast %60 : vector<1x1x128xf32> to vector<8x8x128xf32>
    %62 = arith.mulf %57, %61 : vector<8x8x128xf32>
    %63 = arith.addf %54, %62 : vector<8x8x128xf32>
    %c0_49 = arith.constant 0 : index
    %c0_50 = arith.constant 0 : index
    %c2_51 = arith.constant 2 : index
    %c1_52 = arith.constant 1 : index
    %c0_53 = arith.constant 0 : index
    %64 = vector.load %arg1[%c0_49, %c0_50, %c2_51, %c1_52, %c0_53] : memref<1x1x10x10x128xbf16, #tpu.memory_space<vmem>>, vector<1x1x8x8x128xbf16>
    %65 = vector.shape_cast %64 : vector<1x1x8x8x128xbf16> to vector<8x8x128xbf16>
    %66 = arith.extf %65 : vector<8x8x128xbf16> to vector<8x8x128xf32>
    %c7 = arith.constant 7 : index
    %c0_54 = arith.constant 0 : index
    %c0_55 = arith.constant 0 : index
    %67 = vector.load %arg2[%c7, %c0_54, %c0_55] : memref<9x1x128xf32, #tpu.memory_space<vmem>>, vector<1x1x128xf32>
    %68 = vector.shape_cast %67 : vector<1x1x128xf32> to vector<1x128xf32>
    %69 = vector.shape_cast %68 : vector<1x128xf32> to vector<1x1x128xf32>
    %70 = vector.broadcast %69 : vector<1x1x128xf32> to vector<8x8x128xf32>
    %71 = arith.mulf %66, %70 : vector<8x8x128xf32>
    %72 = arith.addf %63, %71 : vector<8x8x128xf32>
    %c0_56 = arith.constant 0 : index
    %c0_57 = arith.constant 0 : index
    %c2_58 = arith.constant 2 : index
    %c2_59 = arith.constant 2 : index
    %c0_60 = arith.constant 0 : index
    %73 = vector.load %arg1[%c0_56, %c0_57, %c2_58, %c2_59, %c0_60] : memref<1x1x10x10x128xbf16, #tpu.memory_space<vmem>>, vector<1x1x8x8x128xbf16>
    %74 = vector.shape_cast %73 : vector<1x1x8x8x128xbf16> to vector<8x8x128xbf16>
    %75 = arith.extf %74 : vector<8x8x128xbf16> to vector<8x8x128xf32>
    %c8 = arith.constant 8 : index
    %c0_61 = arith.constant 0 : index
    %c0_62 = arith.constant 0 : index
    %76 = vector.load %arg2[%c8, %c0_61, %c0_62] : memref<9x1x128xf32, #tpu.memory_space<vmem>>, vector<1x1x128xf32>
    %77 = vector.shape_cast %76 : vector<1x1x128xf32> to vector<1x128xf32>
    %78 = vector.shape_cast %77 : vector<1x128xf32> to vector<1x1x128xf32>
    %79 = vector.broadcast %78 : vector<1x1x128xf32> to vector<8x8x128xf32>
    %80 = arith.mulf %75, %79 : vector<8x8x128xf32>
    %81 = arith.addf %72, %80 : vector<8x8x128xf32>
    %c0_63 = arith.constant 0 : index
    %c0_64 = arith.constant 0 : index
    %82 = vector.load %arg3[%c0_63, %c0_64] : memref<1x128xf32, #tpu.memory_space<vmem>>, vector<1x128xf32>
    %83 = vector.shape_cast %82 : vector<1x128xf32> to vector<1x1x128xf32>
    %84 = vector.broadcast %83 : vector<1x1x128xf32> to vector<8x8x128xf32>
    %85 = arith.addf %81, %84 : vector<8x8x128xf32>
    %cst_65 = arith.constant 0.000000e+00 : f32
    %86 = vector.broadcast %cst_65 : f32 to vector<8x8x128xf32>
    %87 = arith.maximumf %85, %86 : vector<8x8x128xf32>
    %cst_66 = arith.constant dense<0.000000e+00> : vector<8x128xf32>
    %88 = vector.multi_reduction <add>, %87, %cst_66 [0] : vector<8x8x128xf32> to vector<8x128xf32>
    %cst_67 = arith.constant 8.000000e+00 : f32
    %89 = vector.broadcast %cst_67 : f32 to vector<8x128xf32>
    %90 = arith.divf %88, %89 : vector<8x128xf32>
    %cst_68 = arith.constant dense<0.000000e+00> : vector<128xf32>
    %91 = vector.multi_reduction <add>, %90, %cst_68 [0] : vector<8x128xf32> to vector<128xf32>
    %92 = vector.shape_cast %91 : vector<128xf32> to vector<1x128xf32>
    %cst_69 = arith.constant 8.000000e+00 : f32
    %93 = vector.broadcast %cst_69 : f32 to vector<1x128xf32>
    %94 = arith.divf %92, %93 : vector<1x128xf32>
    %c0_70 = arith.constant 0 : index
    %c0_71 = arith.constant 0 : index
    %95 = vector.load %arg4[%c0_70, %c0_71] : memref<128x128xf32, #tpu.memory_space<vmem>>, vector<128x128xf32>
    %cst_72 = arith.constant dense<0.000000e+00> : vector<1x128xf32>
    %96 = tpu.matmul %94, %95, %cst_72 {dimension_numbers = #tpu.dot_dimension_numbers<[1], [0], [0], [1], [0, 0, 1, 1], [], []>} : vector<1x128xf32>, vector<128x128xf32>, vector<1x128xf32> -> vector<1x128xf32>
    %c0_73 = arith.constant 0 : index
    %c0_74 = arith.constant 0 : index
    %97 = vector.load %arg5[%c0_73, %c0_74] : memref<1x128xf32, #tpu.memory_space<vmem>>, vector<1x128xf32>
    %98 = arith.addf %96, %97 : vector<1x128xf32>
    %cst_75 = arith.constant 0.000000e+00 : f32
    %99 = vector.broadcast %cst_75 : f32 to vector<1x128xf32>
    %100 = arith.maximumf %98, %99 : vector<1x128xf32>
    %c0_76 = arith.constant 0 : index
    %c0_77 = arith.constant 0 : index
    %101 = vector.load %arg6[%c0_76, %c0_77] : memref<128x128xf32, #tpu.memory_space<vmem>>, vector<128x128xf32>
    %cst_78 = arith.constant dense<0.000000e+00> : vector<1x128xf32>
    %102 = tpu.matmul %100, %101, %cst_78 {dimension_numbers = #tpu.dot_dimension_numbers<[1], [0], [0], [1], [0, 0, 1, 1], [], []>} : vector<1x128xf32>, vector<128x128xf32>, vector<1x128xf32> -> vector<1x128xf32>
    %c0_79 = arith.constant 0 : index
    %c0_80 = arith.constant 0 : index
    %103 = vector.load %arg7[%c0_79, %c0_80] : memref<1x128xf32, #tpu.memory_space<vmem>>, vector<1x128xf32>
    %104 = arith.addf %102, %103 : vector<1x128xf32>
    %cst_81 = arith.constant 0.000000e+00 : f32
    %105 = vector.broadcast %cst_81 : f32 to vector<1x128xf32>
    %106 = arith.subf %105, %104 : vector<1x128xf32>
    %107 = math.exp %106 : vector<1x128xf32>
    %cst_82 = arith.constant 1.000000e+00 : f32
    %108 = vector.broadcast %cst_82 : f32 to vector<1x128xf32>
    %109 = arith.addf %108, %107 : vector<1x128xf32>
    %cst_83 = arith.constant 1.000000e+00 : f32
    %110 = vector.broadcast %cst_83 : f32 to vector<1x128xf32>
    %111 = arith.divf %110, %109 : vector<1x128xf32>
    %112 = vector.shape_cast %111 : vector<1x128xf32> to vector<1x1x128xf32>
    %113 = vector.broadcast %112 : vector<1x1x128xf32> to vector<8x8x128xf32>
    %114 = arith.mulf %87, %113 : vector<8x8x128xf32>
    %115 = arith.truncf %114 : vector<8x8x128xf32> to vector<8x8x128xbf16>
    %c0_84 = arith.constant 0 : index
    %c0_85 = arith.constant 0 : index
    %c0_86 = arith.constant 0 : index
    %c0_87 = arith.constant 0 : index
    %116 = vector.load %arg8[%c0_84, %c0_85, %c0_86, %c0_87] : memref<1x8x8x128xbf16, #tpu.memory_space<vmem>>, vector<1x8x8x128xbf16>
    %117 = vector.shape_cast %116 : vector<1x8x8x128xbf16> to vector<8x8x128xbf16>
    %118 = vector.shape_cast %115 : vector<8x8x128xbf16> to vector<1x8x8x128xbf16>
    tpu.vector_store %arg8[%c0_84, %c0_85, %c0_86, %c0_87], %118 {strides = array<i32>} : memref<1x8x8x128xbf16, #tpu.memory_space<vmem>>, vector<1x8x8x128xbf16>,
    return
  }
  func.func @transform_0(%arg0: i32) -> (i32, i32, i32, i32, i32) {
    %c0_i32 = arith.constant 0 : i32
    %c0_i32_0 = arith.constant 0 : i32
    %c0_i32_1 = arith.constant 0 : i32
    %c0_i32_2 = arith.constant 0 : i32
    %c0_i32_3 = arith.constant 0 : i32
    return %c0_i32, %arg0, %c0_i32_0, %c0_i32_1, %c0_i32_2 : i32, i32, i32, i32, i32
  }
  func.func @transform_1(%arg0: i32) -> (i32, i32, i32) {
    %c0_i32 = arith.constant 0 : i32
    %c0_i32_0 = arith.constant 0 : i32
    %c0_i32_1 = arith.constant 0 : i32
    %c0_i32_2 = arith.constant 0 : i32
    return %c0_i32, %c0_i32_0, %c0_i32_1 : i32, i32, i32
  }
  func.func @transform_2(%arg0: i32) -> (i32, i32) {
    %c0_i32 = arith.constant 0 : i32
    %c0_i32_0 = arith.constant 0 : i32
    %c0_i32_1 = arith.constant 0 : i32
    return %c0_i32, %c0_i32_0 : i32, i32
  }
  func.func @transform_3(%arg0: i32) -> (i32, i32) {
    %c0_i32 = arith.constant 0 : i32
    %c0_i32_0 = arith.constant 0 : i32
    %c0_i32_1 = arith.constant 0 : i32
    return %c0_i32, %c0_i32_0 : i32, i32
  }
  func.func @transform_4(%arg0: i32) -> (i32, i32) {
    %c0_i32 = arith.constant 0 : i32
    %c0_i32_0 = arith.constant 0 : i32
    %c0_i32_1 = arith.constant 0 : i32
    return %c0_i32, %c0_i32_0 : i32, i32
  }
  func.func @transform_5(%arg0: i32) -> (i32, i32) {
    %c0_i32 = arith.constant 0 : i32
    %c0_i32_0 = arith.constant 0 : i32
    %c0_i32_1 = arith.constant 0 : i32
    return %c0_i32, %c0_i32_0 : i32, i32
  }
  func.func @transform_6(%arg0: i32) -> (i32, i32) {
    %c0_i32 = arith.constant 0 : i32
    %c0_i32_0 = arith.constant 0 : i32
    %c0_i32_1 = arith.constant 0 : i32
    return %c0_i32, %c0_i32_0 : i32, i32
  }
  func.func @transform_7(%arg0: i32) -> (i32, i32, i32, i32) {
    %c0_i32 = arith.constant 0 : i32
    %c0_i32_0 = arith.constant 0 : i32
    %c0_i32_1 = arith.constant 0 : i32
    %c0_i32_2 = arith.constant 0 : i32
    return %arg0, %c0_i32, %c0_i32_0, %c0_i32_1 : i32, i32, i32, i32
  }
}

module attributes {stable_mosaic.version = 11 : i64} {
  func.func @_matmul_bias_act_kernel(%arg0: i32, %arg1: memref<64x128xbf16, #tpu.memory_space<vmem>>, %arg2: memref<128x128xbf16, #tpu.memory_space<vmem>>, %arg3: memref<1x128xf32, #tpu.memory_space<vmem>>, %arg4: memref<64x128xbf16, #tpu.memory_space<vmem>>) attributes {dimension_semantics = [#tpu.dimension_semantics<parallel>], iteration_bounds = array<i64: 2>, scalar_prefetch = 0 : i64, scratch_operands = 0 : i64, tpu.core_type = #tpu.core_type<tc>, window_params = [{transform_indices = @transform_0, window_bounds = array<i64: 64, 128>}, {pipeline_mode = #tpu.pipeline_mode<synchronous>, transform_indices = @transform_1, window_bounds = array<i64: 128, 128>}, {pipeline_mode = #tpu.pipeline_mode<synchronous>, transform_indices = @transform_2, window_bounds = array<i64: 1, 128>}, {transform_indices = @transform_3, window_bounds = array<i64: 64, 128>}]} {
    %c0 = arith.constant 0 : index
    %c0_0 = arith.constant 0 : index
    %0 = vector.load %arg1[%c0, %c0_0] : memref<64x128xbf16, #tpu.memory_space<vmem>>, vector<64x128xbf16>
    %c0_1 = arith.constant 0 : index
    %c0_2 = arith.constant 0 : index
    %1 = vector.load %arg2[%c0_1, %c0_2] : memref<128x128xbf16, #tpu.memory_space<vmem>>, vector<128x128xbf16>
    %cst = arith.constant dense<0.000000e+00> : vector<64x128xf32>
    %2 = tpu.matmul %0, %1, %cst {dimension_numbers = #tpu.dot_dimension_numbers<[1], [0], [0], [1], [0, 0, 1, 1], [], []>} : vector<64x128xbf16>, vector<128x128xbf16>, vector<64x128xf32> -> vector<64x128xf32>
    %c0_3 = arith.constant 0 : index
    %c0_4 = arith.constant 0 : index
    %3 = vector.load %arg3[%c0_3, %c0_4] : memref<1x128xf32, #tpu.memory_space<vmem>>, vector<1x128xf32>
    %4 = vector.broadcast %3 : vector<1x128xf32> to vector<64x128xf32>
    %5 = arith.addf %2, %4 : vector<64x128xf32>
    %6 = arith.truncf %5 : vector<64x128xf32> to vector<64x128xbf16>
    %c0_5 = arith.constant 0 : index
    %c0_6 = arith.constant 0 : index
    %7 = vector.load %arg4[%c0_5, %c0_6] : memref<64x128xbf16, #tpu.memory_space<vmem>>, vector<64x128xbf16>
    tpu.vector_store %arg4[%c0_5, %c0_6], %6 {strides = array<i32>} : memref<64x128xbf16, #tpu.memory_space<vmem>>, vector<64x128xbf16>,
    return
  }
  func.func @transform_0(%arg0: i32) -> (i32, i32) {
    %c0_i32 = arith.constant 0 : i32
    %c0_i32_0 = arith.constant 0 : i32
    return %arg0, %c0_i32 : i32, i32
  }
  func.func @transform_1(%arg0: i32) -> (i32, i32) {
    %c0_i32 = arith.constant 0 : i32
    %c0_i32_0 = arith.constant 0 : i32
    %c0_i32_1 = arith.constant 0 : i32
    return %c0_i32, %c0_i32_0 : i32, i32
  }
  func.func @transform_2(%arg0: i32) -> (i32, i32) {
    %c0_i32 = arith.constant 0 : i32
    %c0_i32_0 = arith.constant 0 : i32
    %c0_i32_1 = arith.constant 0 : i32
    return %c0_i32, %c0_i32_0 : i32, i32
  }
  func.func @transform_3(%arg0: i32) -> (i32, i32) {
    %c0_i32 = arith.constant 0 : i32
    %c0_i32_0 = arith.constant 0 : i32
    return %arg0, %c0_i32 : i32, i32
  }
}

module attributes {stable_mosaic.version = 11 : i64} {
  func.func @_matmul_bias_act_kernel(%arg0: i32, %arg1: memref<16x128xbf16, #tpu.memory_space<vmem>>, %arg2: memref<128x128xbf16, #tpu.memory_space<vmem>>, %arg3: memref<1x128xf32, #tpu.memory_space<vmem>>, %arg4: memref<16x128xbf16, #tpu.memory_space<vmem>>) attributes {dimension_semantics = [#tpu.dimension_semantics<parallel>], iteration_bounds = array<i64: 2>, scalar_prefetch = 0 : i64, scratch_operands = 0 : i64, tpu.core_type = #tpu.core_type<tc>, window_params = [{transform_indices = @transform_0, window_bounds = array<i64: 16, 128>}, {pipeline_mode = #tpu.pipeline_mode<synchronous>, transform_indices = @transform_1, window_bounds = array<i64: 128, 128>}, {pipeline_mode = #tpu.pipeline_mode<synchronous>, transform_indices = @transform_2, window_bounds = array<i64: 1, 128>}, {transform_indices = @transform_3, window_bounds = array<i64: 16, 128>}]} {
    %c0 = arith.constant 0 : index
    %c0_0 = arith.constant 0 : index
    %0 = vector.load %arg1[%c0, %c0_0] : memref<16x128xbf16, #tpu.memory_space<vmem>>, vector<16x128xbf16>
    %c0_1 = arith.constant 0 : index
    %c0_2 = arith.constant 0 : index
    %1 = vector.load %arg2[%c0_1, %c0_2] : memref<128x128xbf16, #tpu.memory_space<vmem>>, vector<128x128xbf16>
    %cst = arith.constant dense<0.000000e+00> : vector<16x128xf32>
    %2 = tpu.matmul %0, %1, %cst {dimension_numbers = #tpu.dot_dimension_numbers<[1], [0], [0], [1], [0, 0, 1, 1], [], []>} : vector<16x128xbf16>, vector<128x128xbf16>, vector<16x128xf32> -> vector<16x128xf32>
    %c0_3 = arith.constant 0 : index
    %c0_4 = arith.constant 0 : index
    %3 = vector.load %arg3[%c0_3, %c0_4] : memref<1x128xf32, #tpu.memory_space<vmem>>, vector<1x128xf32>
    %4 = vector.broadcast %3 : vector<1x128xf32> to vector<16x128xf32>
    %5 = arith.addf %2, %4 : vector<16x128xf32>
    %6 = arith.truncf %5 : vector<16x128xf32> to vector<16x128xbf16>
    %c0_5 = arith.constant 0 : index
    %c0_6 = arith.constant 0 : index
    %7 = vector.load %arg4[%c0_5, %c0_6] : memref<16x128xbf16, #tpu.memory_space<vmem>>, vector<16x128xbf16>
    tpu.vector_store %arg4[%c0_5, %c0_6], %6 {strides = array<i32>} : memref<16x128xbf16, #tpu.memory_space<vmem>>, vector<16x128xbf16>,
    return
  }
  func.func @transform_0(%arg0: i32) -> (i32, i32) {
    %c0_i32 = arith.constant 0 : i32
    %c0_i32_0 = arith.constant 0 : i32
    return %arg0, %c0_i32 : i32, i32
  }
  func.func @transform_1(%arg0: i32) -> (i32, i32) {
    %c0_i32 = arith.constant 0 : i32
    %c0_i32_0 = arith.constant 0 : i32
    %c0_i32_1 = arith.constant 0 : i32
    return %c0_i32, %c0_i32_0 : i32, i32
  }
  func.func @transform_2(%arg0: i32) -> (i32, i32) {
    %c0_i32 = arith.constant 0 : i32
    %c0_i32_0 = arith.constant 0 : i32
    %c0_i32_1 = arith.constant 0 : i32
    return %c0_i32, %c0_i32_0 : i32, i32
  }
  func.func @transform_3(%arg0: i32) -> (i32, i32) {
    %c0_i32 = arith.constant 0 : i32
    %c0_i32_0 = arith.constant 0 : i32
    return %arg0, %c0_i32 : i32, i32
  }
}

module attributes {stable_mosaic.version = 11 : i64} {
  func.func @_dw_se_kernel(%arg0: i32, %arg1: memref<6x1x5x4x128xbf16, #tpu.memory_space<vmem>>, %arg2: memref<9x1x128xf32, #tpu.memory_space<vmem>>, %arg3: memref<1x128xf32, #tpu.memory_space<vmem>>, %arg4: memref<128x128xf32, #tpu.memory_space<vmem>>, %arg5: memref<1x128xf32, #tpu.memory_space<vmem>>, %arg6: memref<128x128xf32, #tpu.memory_space<vmem>>, %arg7: memref<1x128xf32, #tpu.memory_space<vmem>>, %arg8: memref<1x4x4x128xbf16, #tpu.memory_space<vmem>>) attributes {dimension_semantics = [#tpu.dimension_semantics<parallel>], iteration_bounds = array<i64: 2>, scalar_prefetch = 0 : i64, scratch_operands = 0 : i64, tpu.core_type = #tpu.core_type<tc>, window_params = [{transform_indices = @transform_0, window_bounds = array<i64: 6, 1, 5, 4, 128>}, {pipeline_mode = #tpu.pipeline_mode<synchronous>, transform_indices = @transform_1, window_bounds = array<i64: 9, 1, 128>}, {pipeline_mode = #tpu.pipeline_mode<synchronous>, transform_indices = @transform_2, window_bounds = array<i64: 1, 128>}, {pipeline_mode = #tpu.pipeline_mode<synchronous>, transform_indices = @transform_3, window_bounds = array<i64: 128, 128>}, {pipeline_mode = #tpu.pipeline_mode<synchronous>, transform_indices = @transform_4, window_bounds = array<i64: 1, 128>}, {pipeline_mode = #tpu.pipeline_mode<synchronous>, transform_indices = @transform_5, window_bounds = array<i64: 128, 128>}, {pipeline_mode = #tpu.pipeline_mode<synchronous>, transform_indices = @transform_6, window_bounds = array<i64: 1, 128>}, {transform_indices = @transform_7, window_bounds = array<i64: 1, 4, 4, 128>}]} {
    %cst = arith.constant 0.000000e+00 : f32
    %0 = vector.broadcast %cst : f32 to vector<4x4x128xf32>
    %c0 = arith.constant 0 : index
    %c0_0 = arith.constant 0 : index
    %c0_1 = arith.constant 0 : index
    %c0_2 = arith.constant 0 : index
    %c0_3 = arith.constant 0 : index
    %1 = vector.load %arg1[%c0, %c0_0, %c0_1, %c0_2, %c0_3] : memref<6x1x5x4x128xbf16, #tpu.memory_space<vmem>>, vector<1x1x4x4x128xbf16>
    %2 = vector.shape_cast %1 : vector<1x1x4x4x128xbf16> to vector<4x4x128xbf16>
    %3 = arith.extf %2 : vector<4x4x128xbf16> to vector<4x4x128xf32>
    %c0_4 = arith.constant 0 : index
    %c0_5 = arith.constant 0 : index
    %c0_6 = arith.constant 0 : index
    %4 = vector.load %arg2[%c0_4, %c0_5, %c0_6] : memref<9x1x128xf32, #tpu.memory_space<vmem>>, vector<1x1x128xf32>
    %5 = vector.shape_cast %4 : vector<1x1x128xf32> to vector<1x128xf32>
    %6 = vector.shape_cast %5 : vector<1x128xf32> to vector<1x1x128xf32>
    %7 = vector.broadcast %6 : vector<1x1x128xf32> to vector<4x4x128xf32>
    %8 = arith.mulf %3, %7 : vector<4x4x128xf32>
    %9 = arith.addf %0, %8 : vector<4x4x128xf32>
    %c2 = arith.constant 2 : index
    %c0_7 = arith.constant 0 : index
    %c0_8 = arith.constant 0 : index
    %c0_9 = arith.constant 0 : index
    %c0_10 = arith.constant 0 : index
    %10 = vector.load %arg1[%c2, %c0_7, %c0_8, %c0_9, %c0_10] : memref<6x1x5x4x128xbf16, #tpu.memory_space<vmem>>, vector<1x1x4x4x128xbf16>
    %11 = vector.shape_cast %10 : vector<1x1x4x4x128xbf16> to vector<4x4x128xbf16>
    %12 = arith.extf %11 : vector<4x4x128xbf16> to vector<4x4x128xf32>
    %c1 = arith.constant 1 : index
    %c0_11 = arith.constant 0 : index
    %c0_12 = arith.constant 0 : index
    %13 = vector.load %arg2[%c1, %c0_11, %c0_12] : memref<9x1x128xf32, #tpu.memory_space<vmem>>, vector<1x1x128xf32>
    %14 = vector.shape_cast %13 : vector<1x1x128xf32> to vector<1x128xf32>
    %15 = vector.shape_cast %14 : vector<1x128xf32> to vector<1x1x128xf32>
    %16 = vector.broadcast %15 : vector<1x1x128xf32> to vector<4x4x128xf32>
    %17 = arith.mulf %12, %16 : vector<4x4x128xf32>
    %18 = arith.addf %9, %17 : vector<4x4x128xf32>
    %c4 = arith.constant 4 : index
    %c0_13 = arith.constant 0 : index
    %c0_14 = arith.constant 0 : index
    %c0_15 = arith.constant 0 : index
    %c0_16 = arith.constant 0 : index
    %19 = vector.load %arg1[%c4, %c0_13, %c0_14, %c0_15, %c0_16] : memref<6x1x5x4x128xbf16, #tpu.memory_space<vmem>>, vector<1x1x4x4x128xbf16>
    %20 = vector.shape_cast %19 : vector<1x1x4x4x128xbf16> to vector<4x4x128xbf16>
    %21 = arith.extf %20 : vector<4x4x128xbf16> to vector<4x4x128xf32>
    %c2_17 = arith.constant 2 : index
    %c0_18 = arith.constant 0 : index
    %c0_19 = arith.constant 0 : index
    %22 = vector.load %arg2[%c2_17, %c0_18, %c0_19] : memref<9x1x128xf32, #tpu.memory_space<vmem>>, vector<1x1x128xf32>
    %23 = vector.shape_cast %22 : vector<1x1x128xf32> to vector<1x128xf32>
    %24 = vector.shape_cast %23 : vector<1x128xf32> to vector<1x1x128xf32>
    %25 = vector.broadcast %24 : vector<1x1x128xf32> to vector<4x4x128xf32>
    %26 = arith.mulf %21, %25 : vector<4x4x128xf32>
    %27 = arith.addf %18, %26 : vector<4x4x128xf32>
    %c1_20 = arith.constant 1 : index
    %c0_21 = arith.constant 0 : index
    %c0_22 = arith.constant 0 : index
    %c0_23 = arith.constant 0 : index
    %c0_24 = arith.constant 0 : index
    %28 = vector.load %arg1[%c1_20, %c0_21, %c0_22, %c0_23, %c0_24] : memref<6x1x5x4x128xbf16, #tpu.memory_space<vmem>>, vector<1x1x4x4x128xbf16>
    %29 = vector.shape_cast %28 : vector<1x1x4x4x128xbf16> to vector<4x4x128xbf16>
    %30 = arith.extf %29 : vector<4x4x128xbf16> to vector<4x4x128xf32>
    %c3 = arith.constant 3 : index
    %c0_25 = arith.constant 0 : index
    %c0_26 = arith.constant 0 : index
    %31 = vector.load %arg2[%c3, %c0_25, %c0_26] : memref<9x1x128xf32, #tpu.memory_space<vmem>>, vector<1x1x128xf32>
    %32 = vector.shape_cast %31 : vector<1x1x128xf32> to vector<1x128xf32>
    %33 = vector.shape_cast %32 : vector<1x128xf32> to vector<1x1x128xf32>
    %34 = vector.broadcast %33 : vector<1x1x128xf32> to vector<4x4x128xf32>
    %35 = arith.mulf %30, %34 : vector<4x4x128xf32>
    %36 = arith.addf %27, %35 : vector<4x4x128xf32>
    %c3_27 = arith.constant 3 : index
    %c0_28 = arith.constant 0 : index
    %c0_29 = arith.constant 0 : index
    %c0_30 = arith.constant 0 : index
    %c0_31 = arith.constant 0 : index
    %37 = vector.load %arg1[%c3_27, %c0_28, %c0_29, %c0_30, %c0_31] : memref<6x1x5x4x128xbf16, #tpu.memory_space<vmem>>, vector<1x1x4x4x128xbf16>
    %38 = vector.shape_cast %37 : vector<1x1x4x4x128xbf16> to vector<4x4x128xbf16>
    %39 = arith.extf %38 : vector<4x4x128xbf16> to vector<4x4x128xf32>
    %c4_32 = arith.constant 4 : index
    %c0_33 = arith.constant 0 : index
    %c0_34 = arith.constant 0 : index
    %40 = vector.load %arg2[%c4_32, %c0_33, %c0_34] : memref<9x1x128xf32, #tpu.memory_space<vmem>>, vector<1x1x128xf32>
    %41 = vector.shape_cast %40 : vector<1x1x128xf32> to vector<1x128xf32>
    %42 = vector.shape_cast %41 : vector<1x128xf32> to vector<1x1x128xf32>
    %43 = vector.broadcast %42 : vector<1x1x128xf32> to vector<4x4x128xf32>
    %44 = arith.mulf %39, %43 : vector<4x4x128xf32>
    %45 = arith.addf %36, %44 : vector<4x4x128xf32>
    %c5 = arith.constant 5 : index
    %c0_35 = arith.constant 0 : index
    %c0_36 = arith.constant 0 : index
    %c0_37 = arith.constant 0 : index
    %c0_38 = arith.constant 0 : index
    %46 = vector.load %arg1[%c5, %c0_35, %c0_36, %c0_37, %c0_38] : memref<6x1x5x4x128xbf16, #tpu.memory_space<vmem>>, vector<1x1x4x4x128xbf16>
    %47 = vector.shape_cast %46 : vector<1x1x4x4x128xbf16> to vector<4x4x128xbf16>
    %48 = arith.extf %47 : vector<4x4x128xbf16> to vector<4x4x128xf32>
    %c5_39 = arith.constant 5 : index
    %c0_40 = arith.constant 0 : index
    %c0_41 = arith.constant 0 : index
    %49 = vector.load %arg2[%c5_39, %c0_40, %c0_41] : memref<9x1x128xf32, #tpu.memory_space<vmem>>, vector<1x1x128xf32>
    %50 = vector.shape_cast %49 : vector<1x1x128xf32> to vector<1x128xf32>
    %51 = vector.shape_cast %50 : vector<1x128xf32> to vector<1x1x128xf32>
    %52 = vector.broadcast %51 : vector<1x1x128xf32> to vector<4x4x128xf32>
    %53 = arith.mulf %48, %52 : vector<4x4x128xf32>
    %54 = arith.addf %45, %53 : vector<4x4x128xf32>
    %c0_42 = arith.constant 0 : index
    %c0_43 = arith.constant 0 : index
    %c1_44 = arith.constant 1 : index
    %c0_45 = arith.constant 0 : index
    %c0_46 = arith.constant 0 : index
    %55 = vector.load %arg1[%c0_42, %c0_43, %c1_44, %c0_45, %c0_46] : memref<6x1x5x4x128xbf16, #tpu.memory_space<vmem>>, vector<1x1x4x4x128xbf16>
    %56 = vector.shape_cast %55 : vector<1x1x4x4x128xbf16> to vector<4x4x128xbf16>
    %57 = arith.extf %56 : vector<4x4x128xbf16> to vector<4x4x128xf32>
    %c6 = arith.constant 6 : index
    %c0_47 = arith.constant 0 : index
    %c0_48 = arith.constant 0 : index
    %58 = vector.load %arg2[%c6, %c0_47, %c0_48] : memref<9x1x128xf32, #tpu.memory_space<vmem>>, vector<1x1x128xf32>
    %59 = vector.shape_cast %58 : vector<1x1x128xf32> to vector<1x128xf32>
    %60 = vector.shape_cast %59 : vector<1x128xf32> to vector<1x1x128xf32>
    %61 = vector.broadcast %60 : vector<1x1x128xf32> to vector<4x4x128xf32>
    %62 = arith.mulf %57, %61 : vector<4x4x128xf32>
    %63 = arith.addf %54, %62 : vector<4x4x128xf32>
    %c2_49 = arith.constant 2 : index
    %c0_50 = arith.constant 0 : index
    %c1_51 = arith.constant 1 : index
    %c0_52 = arith.constant 0 : index
    %c0_53 = arith.constant 0 : index
    %64 = vector.load %arg1[%c2_49, %c0_50, %c1_51, %c0_52, %c0_53] : memref<6x1x5x4x128xbf16, #tpu.memory_space<vmem>>, vector<1x1x4x4x128xbf16>
    %65 = vector.shape_cast %64 : vector<1x1x4x4x128xbf16> to vector<4x4x128xbf16>
    %66 = arith.extf %65 : vector<4x4x128xbf16> to vector<4x4x128xf32>
    %c7 = arith.constant 7 : index
    %c0_54 = arith.constant 0 : index
    %c0_55 = arith.constant 0 : index
    %67 = vector.load %arg2[%c7, %c0_54, %c0_55] : memref<9x1x128xf32, #tpu.memory_space<vmem>>, vector<1x1x128xf32>
    %68 = vector.shape_cast %67 : vector<1x1x128xf32> to vector<1x128xf32>
    %69 = vector.shape_cast %68 : vector<1x128xf32> to vector<1x1x128xf32>
    %70 = vector.broadcast %69 : vector<1x1x128xf32> to vector<4x4x128xf32>
    %71 = arith.mulf %66, %70 : vector<4x4x128xf32>
    %72 = arith.addf %63, %71 : vector<4x4x128xf32>
    %c4_56 = arith.constant 4 : index
    %c0_57 = arith.constant 0 : index
    %c1_58 = arith.constant 1 : index
    %c0_59 = arith.constant 0 : index
    %c0_60 = arith.constant 0 : index
    %73 = vector.load %arg1[%c4_56, %c0_57, %c1_58, %c0_59, %c0_60] : memref<6x1x5x4x128xbf16, #tpu.memory_space<vmem>>, vector<1x1x4x4x128xbf16>
    %74 = vector.shape_cast %73 : vector<1x1x4x4x128xbf16> to vector<4x4x128xbf16>
    %75 = arith.extf %74 : vector<4x4x128xbf16> to vector<4x4x128xf32>
    %c8 = arith.constant 8 : index
    %c0_61 = arith.constant 0 : index
    %c0_62 = arith.constant 0 : index
    %76 = vector.load %arg2[%c8, %c0_61, %c0_62] : memref<9x1x128xf32, #tpu.memory_space<vmem>>, vector<1x1x128xf32>
    %77 = vector.shape_cast %76 : vector<1x1x128xf32> to vector<1x128xf32>
    %78 = vector.shape_cast %77 : vector<1x128xf32> to vector<1x1x128xf32>
    %79 = vector.broadcast %78 : vector<1x1x128xf32> to vector<4x4x128xf32>
    %80 = arith.mulf %75, %79 : vector<4x4x128xf32>
    %81 = arith.addf %72, %80 : vector<4x4x128xf32>
    %c0_63 = arith.constant 0 : index
    %c0_64 = arith.constant 0 : index
    %82 = vector.load %arg3[%c0_63, %c0_64] : memref<1x128xf32, #tpu.memory_space<vmem>>, vector<1x128xf32>
    %83 = vector.shape_cast %82 : vector<1x128xf32> to vector<1x1x128xf32>
    %84 = vector.broadcast %83 : vector<1x1x128xf32> to vector<4x4x128xf32>
    %85 = arith.addf %81, %84 : vector<4x4x128xf32>
    %cst_65 = arith.constant 0.000000e+00 : f32
    %86 = vector.broadcast %cst_65 : f32 to vector<4x4x128xf32>
    %87 = arith.maximumf %85, %86 : vector<4x4x128xf32>
    %cst_66 = arith.constant dense<0.000000e+00> : vector<4x128xf32>
    %88 = vector.multi_reduction <add>, %87, %cst_66 [0] : vector<4x4x128xf32> to vector<4x128xf32>
    %cst_67 = arith.constant 4.000000e+00 : f32
    %89 = vector.broadcast %cst_67 : f32 to vector<4x128xf32>
    %90 = arith.divf %88, %89 : vector<4x128xf32>
    %cst_68 = arith.constant dense<0.000000e+00> : vector<128xf32>
    %91 = vector.multi_reduction <add>, %90, %cst_68 [0] : vector<4x128xf32> to vector<128xf32>
    %92 = vector.shape_cast %91 : vector<128xf32> to vector<1x128xf32>
    %cst_69 = arith.constant 4.000000e+00 : f32
    %93 = vector.broadcast %cst_69 : f32 to vector<1x128xf32>
    %94 = arith.divf %92, %93 : vector<1x128xf32>
    %c0_70 = arith.constant 0 : index
    %c0_71 = arith.constant 0 : index
    %95 = vector.load %arg4[%c0_70, %c0_71] : memref<128x128xf32, #tpu.memory_space<vmem>>, vector<128x128xf32>
    %cst_72 = arith.constant dense<0.000000e+00> : vector<1x128xf32>
    %96 = tpu.matmul %94, %95, %cst_72 {dimension_numbers = #tpu.dot_dimension_numbers<[1], [0], [0], [1], [0, 0, 1, 1], [], []>} : vector<1x128xf32>, vector<128x128xf32>, vector<1x128xf32> -> vector<1x128xf32>
    %c0_73 = arith.constant 0 : index
    %c0_74 = arith.constant 0 : index
    %97 = vector.load %arg5[%c0_73, %c0_74] : memref<1x128xf32, #tpu.memory_space<vmem>>, vector<1x128xf32>
    %98 = arith.addf %96, %97 : vector<1x128xf32>
    %cst_75 = arith.constant 0.000000e+00 : f32
    %99 = vector.broadcast %cst_75 : f32 to vector<1x128xf32>
    %100 = arith.maximumf %98, %99 : vector<1x128xf32>
    %c0_76 = arith.constant 0 : index
    %c0_77 = arith.constant 0 : index
    %101 = vector.load %arg6[%c0_76, %c0_77] : memref<128x128xf32, #tpu.memory_space<vmem>>, vector<128x128xf32>
    %cst_78 = arith.constant dense<0.000000e+00> : vector<1x128xf32>
    %102 = tpu.matmul %100, %101, %cst_78 {dimension_numbers = #tpu.dot_dimension_numbers<[1], [0], [0], [1], [0, 0, 1, 1], [], []>} : vector<1x128xf32>, vector<128x128xf32>, vector<1x128xf32> -> vector<1x128xf32>
    %c0_79 = arith.constant 0 : index
    %c0_80 = arith.constant 0 : index
    %103 = vector.load %arg7[%c0_79, %c0_80] : memref<1x128xf32, #tpu.memory_space<vmem>>, vector<1x128xf32>
    %104 = arith.addf %102, %103 : vector<1x128xf32>
    %cst_81 = arith.constant 0.000000e+00 : f32
    %105 = vector.broadcast %cst_81 : f32 to vector<1x128xf32>
    %106 = arith.subf %105, %104 : vector<1x128xf32>
    %107 = math.exp %106 : vector<1x128xf32>
    %cst_82 = arith.constant 1.000000e+00 : f32
    %108 = vector.broadcast %cst_82 : f32 to vector<1x128xf32>
    %109 = arith.addf %108, %107 : vector<1x128xf32>
    %cst_83 = arith.constant 1.000000e+00 : f32
    %110 = vector.broadcast %cst_83 : f32 to vector<1x128xf32>
    %111 = arith.divf %110, %109 : vector<1x128xf32>
    %112 = vector.shape_cast %111 : vector<1x128xf32> to vector<1x1x128xf32>
    %113 = vector.broadcast %112 : vector<1x1x128xf32> to vector<4x4x128xf32>
    %114 = arith.mulf %87, %113 : vector<4x4x128xf32>
    %115 = arith.truncf %114 : vector<4x4x128xf32> to vector<4x4x128xbf16>
    %c0_84 = arith.constant 0 : index
    %c0_85 = arith.constant 0 : index
    %c0_86 = arith.constant 0 : index
    %c0_87 = arith.constant 0 : index
    %116 = vector.load %arg8[%c0_84, %c0_85, %c0_86, %c0_87] : memref<1x4x4x128xbf16, #tpu.memory_space<vmem>>, vector<1x4x4x128xbf16>
    %117 = vector.shape_cast %116 : vector<1x4x4x128xbf16> to vector<4x4x128xbf16>
    %118 = vector.shape_cast %115 : vector<4x4x128xbf16> to vector<1x4x4x128xbf16>
    tpu.vector_store %arg8[%c0_84, %c0_85, %c0_86, %c0_87], %118 {strides = array<i32>} : memref<1x4x4x128xbf16, #tpu.memory_space<vmem>>, vector<1x4x4x128xbf16>,
    return
  }
  func.func @transform_0(%arg0: i32) -> (i32, i32, i32, i32, i32) {
    %c0_i32 = arith.constant 0 : i32
    %c0_i32_0 = arith.constant 0 : i32
    %c0_i32_1 = arith.constant 0 : i32
    %c0_i32_2 = arith.constant 0 : i32
    %c0_i32_3 = arith.constant 0 : i32
    return %c0_i32, %arg0, %c0_i32_0, %c0_i32_1, %c0_i32_2 : i32, i32, i32, i32, i32
  }
  func.func @transform_1(%arg0: i32) -> (i32, i32, i32) {
    %c0_i32 = arith.constant 0 : i32
    %c0_i32_0 = arith.constant 0 : i32
    %c0_i32_1 = arith.constant 0 : i32
    %c0_i32_2 = arith.constant 0 : i32
    return %c0_i32, %c0_i32_0, %c0_i32_1 : i32, i32, i32
  }
  func.func @transform_2(%arg0: i32) -> (i32, i32) {
    %c0_i32 = arith.constant 0 : i32
    %c0_i32_0 = arith.constant 0 : i32
    %c0_i32_1 = arith.constant 0 : i32
    return %c0_i32, %c0_i32_0 : i32, i32
  }
  func.func @transform_3(%arg0: i32) -> (i32, i32) {
    %c0_i32 = arith.constant 0 : i32
    %c0_i32_0 = arith.constant 0 : i32
    %c0_i32_1 = arith.constant 0 : i32
    return %c0_i32, %c0_i32_0 : i32, i32
  }
  func.func @transform_4(%arg0: i32) -> (i32, i32) {
    %c0_i32 = arith.constant 0 : i32
    %c0_i32_0 = arith.constant 0 : i32
    %c0_i32_1 = arith.constant 0 : i32
    return %c0_i32, %c0_i32_0 : i32, i32
  }
  func.func @transform_5(%arg0: i32) -> (i32, i32) {
    %c0_i32 = arith.constant 0 : i32
    %c0_i32_0 = arith.constant 0 : i32
    %c0_i32_1 = arith.constant 0 : i32
    return %c0_i32, %c0_i32_0 : i32, i32
  }
  func.func @transform_6(%arg0: i32) -> (i32, i32) {
    %c0_i32 = arith.constant 0 : i32
    %c0_i32_0 = arith.constant 0 : i32
    %c0_i32_1 = arith.constant 0 : i32
    return %c0_i32, %c0_i32_0 : i32, i32
  }
  func.func @transform_7(%arg0: i32) -> (i32, i32, i32, i32) {
    %c0_i32 = arith.constant 0 : i32
    %c0_i32_0 = arith.constant 0 : i32
    %c0_i32_1 = arith.constant 0 : i32
    %c0_i32_2 = arith.constant 0 : i32
    return %arg0, %c0_i32, %c0_i32_0, %c0_i32_1 : i32, i32, i32, i32
  }
}

module attributes {stable_mosaic.version = 11 : i64} {
  func.func @_matmul_bias_act_kernel(%arg0: i32, %arg1: memref<16x128xbf16, #tpu.memory_space<vmem>>, %arg2: memref<128x128xbf16, #tpu.memory_space<vmem>>, %arg3: memref<1x128xf32, #tpu.memory_space<vmem>>, %arg4: memref<16x128xbf16, #tpu.memory_space<vmem>>) attributes {dimension_semantics = [#tpu.dimension_semantics<parallel>], iteration_bounds = array<i64: 2>, scalar_prefetch = 0 : i64, scratch_operands = 0 : i64, tpu.core_type = #tpu.core_type<tc>, window_params = [{transform_indices = @transform_0, window_bounds = array<i64: 16, 128>}, {pipeline_mode = #tpu.pipeline_mode<synchronous>, transform_indices = @transform_1, window_bounds = array<i64: 128, 128>}, {pipeline_mode = #tpu.pipeline_mode<synchronous>, transform_indices = @transform_2, window_bounds = array<i64: 1, 128>}, {transform_indices = @transform_3, window_bounds = array<i64: 16, 128>}]} {
    %c0 = arith.constant 0 : index
    %c0_0 = arith.constant 0 : index
    %0 = vector.load %arg1[%c0, %c0_0] : memref<16x128xbf16, #tpu.memory_space<vmem>>, vector<16x128xbf16>
    %c0_1 = arith.constant 0 : index
    %c0_2 = arith.constant 0 : index
    %1 = vector.load %arg2[%c0_1, %c0_2] : memref<128x128xbf16, #tpu.memory_space<vmem>>, vector<128x128xbf16>
    %cst = arith.constant dense<0.000000e+00> : vector<16x128xf32>
    %2 = tpu.matmul %0, %1, %cst {dimension_numbers = #tpu.dot_dimension_numbers<[1], [0], [0], [1], [0, 0, 1, 1], [], []>} : vector<16x128xbf16>, vector<128x128xbf16>, vector<16x128xf32> -> vector<16x128xf32>
    %c0_3 = arith.constant 0 : index
    %c0_4 = arith.constant 0 : index
    %3 = vector.load %arg3[%c0_3, %c0_4] : memref<1x128xf32, #tpu.memory_space<vmem>>, vector<1x128xf32>
    %4 = vector.broadcast %3 : vector<1x128xf32> to vector<16x128xf32>
    %5 = arith.addf %2, %4 : vector<16x128xf32>
    %cst_5 = arith.constant 0.000000e+00 : f32
    %6 = vector.broadcast %cst_5 : f32 to vector<16x128xf32>
    %7 = arith.maximumf %5, %6 : vector<16x128xf32>
    %8 = arith.truncf %7 : vector<16x128xf32> to vector<16x128xbf16>
    %c0_6 = arith.constant 0 : index
    %c0_7 = arith.constant 0 : index
    %9 = vector.load %arg4[%c0_6, %c0_7] : memref<16x128xbf16, #tpu.memory_space<vmem>>, vector<16x128xbf16>
    tpu.vector_store %arg4[%c0_6, %c0_7], %8 {strides = array<i32>} : memref<16x128xbf16, #tpu.memory_space<vmem>>, vector<16x128xbf16>,
    return
  }
  func.func @transform_0(%arg0: i32) -> (i32, i32) {
    %c0_i32 = arith.constant 0 : i32
    %c0_i32_0 = arith.constant 0 : i32
    return %arg0, %c0_i32 : i32, i32
  }
  func.func @transform_1(%arg0: i32) -> (i32, i32) {
    %c0_i32 = arith.constant 0 : i32
    %c0_i32_0 = arith.constant 0 : i32
    %c0_i32_1 = arith.constant 0 : i32
    return %c0_i32, %c0_i32_0 : i32, i32
  }
  func.func @transform_2(%arg0: i32) -> (i32, i32) {
    %c0_i32 = arith.constant 0 : i32
    %c0_i32_0 = arith.constant 0 : i32
    %c0_i32_1 = arith.constant 0 : i32
    return %c0_i32, %c0_i32_0 : i32, i32
  }
  func.func @transform_3(%arg0: i32) -> (i32, i32) {
    %c0_i32 = arith.constant 0 : i32
    %c0_i32_0 = arith.constant 0 : i32
    return %arg0, %c0_i32 : i32, i32
  }
}

module attributes {stable_mosaic.version = 11 : i64} {
  func.func @_matmul_bias_act_kernel(%arg0: i32, %arg1: memref<8x128xbf16, #tpu.memory_space<vmem>>, %arg2: memref<128x128xbf16, #tpu.memory_space<vmem>>, %arg3: memref<1x128xf32, #tpu.memory_space<vmem>>, %arg4: memref<8x128xbf16, #tpu.memory_space<vmem>>) attributes {dimension_semantics = [#tpu.dimension_semantics<parallel>], iteration_bounds = array<i64: 1>, scalar_prefetch = 0 : i64, scratch_operands = 0 : i64, tpu.core_type = #tpu.core_type<tc>, window_params = [{transform_indices = @transform_0, window_bounds = array<i64: 8, 128>}, {pipeline_mode = #tpu.pipeline_mode<synchronous>, transform_indices = @transform_1, window_bounds = array<i64: 128, 128>}, {pipeline_mode = #tpu.pipeline_mode<synchronous>, transform_indices = @transform_2, window_bounds = array<i64: 1, 128>}, {transform_indices = @transform_3, window_bounds = array<i64: 8, 128>}]} {
    %c0 = arith.constant 0 : index
    %c0_0 = arith.constant 0 : index
    %0 = vector.load %arg1[%c0, %c0_0] : memref<8x128xbf16, #tpu.memory_space<vmem>>, vector<8x128xbf16>
    %c0_1 = arith.constant 0 : index
    %c0_2 = arith.constant 0 : index
    %1 = vector.load %arg2[%c0_1, %c0_2] : memref<128x128xbf16, #tpu.memory_space<vmem>>, vector<128x128xbf16>
    %cst = arith.constant dense<0.000000e+00> : vector<8x128xf32>
    %2 = tpu.matmul %0, %1, %cst {dimension_numbers = #tpu.dot_dimension_numbers<[1], [0], [0], [1], [0, 0, 1, 1], [], []>} : vector<8x128xbf16>, vector<128x128xbf16>, vector<8x128xf32> -> vector<8x128xf32>
    %c0_3 = arith.constant 0 : index
    %c0_4 = arith.constant 0 : index
    %3 = vector.load %arg3[%c0_3, %c0_4] : memref<1x128xf32, #tpu.memory_space<vmem>>, vector<1x128xf32>
    %4 = vector.broadcast %3 : vector<1x128xf32> to vector<8x128xf32>
    %5 = arith.addf %2, %4 : vector<8x128xf32>
    %6 = arith.truncf %5 : vector<8x128xf32> to vector<8x128xbf16>
    %c0_5 = arith.constant 0 : index
    %c0_6 = arith.constant 0 : index
    %7 = vector.load %arg4[%c0_5, %c0_6] : memref<8x128xbf16, #tpu.memory_space<vmem>>, vector<8x128xbf16>
    tpu.vector_store %arg4[%c0_5, %c0_6], %6 {strides = array<i32>} : memref<8x128xbf16, #tpu.memory_space<vmem>>, vector<8x128xbf16>,
    return
  }
  func.func @transform_0(%arg0: i32) -> (i32, i32) {
    %c0_i32 = arith.constant 0 : i32
    %c0_i32_0 = arith.constant 0 : i32
    return %arg0, %c0_i32 : i32, i32
  }
  func.func @transform_1(%arg0: i32) -> (i32, i32) {
    %c0_i32 = arith.constant 0 : i32
    %c0_i32_0 = arith.constant 0 : i32
    %c0_i32_1 = arith.constant 0 : i32
    return %c0_i32, %c0_i32_0 : i32, i32
  }
  func.func @transform_2(%arg0: i32) -> (i32, i32) {
    %c0_i32 = arith.constant 0 : i32
    %c0_i32_0 = arith.constant 0 : i32
    %c0_i32_1 = arith.constant 0 : i32
    return %c0_i32, %c0_i32_0 : i32, i32
  }
  func.func @transform_3(%arg0: i32) -> (i32, i32) {
    %c0_i32 = arith.constant 0 : i32
    %c0_i32_0 = arith.constant 0 : i32
    return %arg0, %c0_i32 : i32, i32
  }
}

module attributes {stable_mosaic.version = 11 : i64} {
  func.func @_dw_se_kernel(%arg0: i32, %arg1: memref<6x1x3x2x128xbf16, #tpu.memory_space<vmem>>, %arg2: memref<9x1x128xf32, #tpu.memory_space<vmem>>, %arg3: memref<1x128xf32, #tpu.memory_space<vmem>>, %arg4: memref<128x128xf32, #tpu.memory_space<vmem>>, %arg5: memref<1x128xf32, #tpu.memory_space<vmem>>, %arg6: memref<128x128xf32, #tpu.memory_space<vmem>>, %arg7: memref<1x128xf32, #tpu.memory_space<vmem>>, %arg8: memref<1x2x2x128xbf16, #tpu.memory_space<vmem>>) attributes {dimension_semantics = [#tpu.dimension_semantics<parallel>], iteration_bounds = array<i64: 2>, scalar_prefetch = 0 : i64, scratch_operands = 0 : i64, tpu.core_type = #tpu.core_type<tc>, window_params = [{transform_indices = @transform_0, window_bounds = array<i64: 6, 1, 3, 2, 128>}, {pipeline_mode = #tpu.pipeline_mode<synchronous>, transform_indices = @transform_1, window_bounds = array<i64: 9, 1, 128>}, {pipeline_mode = #tpu.pipeline_mode<synchronous>, transform_indices = @transform_2, window_bounds = array<i64: 1, 128>}, {pipeline_mode = #tpu.pipeline_mode<synchronous>, transform_indices = @transform_3, window_bounds = array<i64: 128, 128>}, {pipeline_mode = #tpu.pipeline_mode<synchronous>, transform_indices = @transform_4, window_bounds = array<i64: 1, 128>}, {pipeline_mode = #tpu.pipeline_mode<synchronous>, transform_indices = @transform_5, window_bounds = array<i64: 128, 128>}, {pipeline_mode = #tpu.pipeline_mode<synchronous>, transform_indices = @transform_6, window_bounds = array<i64: 1, 128>}, {transform_indices = @transform_7, window_bounds = array<i64: 1, 2, 2, 128>}]} {
    %cst = arith.constant 0.000000e+00 : f32
    %0 = vector.broadcast %cst : f32 to vector<2x2x128xf32>
    %c0 = arith.constant 0 : index
    %c0_0 = arith.constant 0 : index
    %c0_1 = arith.constant 0 : index
    %c0_2 = arith.constant 0 : index
    %c0_3 = arith.constant 0 : index
    %1 = vector.load %arg1[%c0, %c0_0, %c0_1, %c0_2, %c0_3] : memref<6x1x3x2x128xbf16, #tpu.memory_space<vmem>>, vector<1x1x2x2x128xbf16>
    %2 = vector.shape_cast %1 : vector<1x1x2x2x128xbf16> to vector<2x2x128xbf16>
    %3 = arith.extf %2 : vector<2x2x128xbf16> to vector<2x2x128xf32>
    %c0_4 = arith.constant 0 : index
    %c0_5 = arith.constant 0 : index
    %c0_6 = arith.constant 0 : index
    %4 = vector.load %arg2[%c0_4, %c0_5, %c0_6] : memref<9x1x128xf32, #tpu.memory_space<vmem>>, vector<1x1x128xf32>
    %5 = vector.shape_cast %4 : vector<1x1x128xf32> to vector<1x128xf32>
    %6 = vector.shape_cast %5 : vector<1x128xf32> to vector<1x1x128xf32>
    %7 = vector.broadcast %6 : vector<1x1x128xf32> to vector<2x2x128xf32>
    %8 = arith.mulf %3, %7 : vector<2x2x128xf32>
    %9 = arith.addf %0, %8 : vector<2x2x128xf32>
    %c2 = arith.constant 2 : index
    %c0_7 = arith.constant 0 : index
    %c0_8 = arith.constant 0 : index
    %c0_9 = arith.constant 0 : index
    %c0_10 = arith.constant 0 : index
    %10 = vector.load %arg1[%c2, %c0_7, %c0_8, %c0_9, %c0_10] : memref<6x1x3x2x128xbf16, #tpu.memory_space<vmem>>, vector<1x1x2x2x128xbf16>
    %11 = vector.shape_cast %10 : vector<1x1x2x2x128xbf16> to vector<2x2x128xbf16>
    %12 = arith.extf %11 : vector<2x2x128xbf16> to vector<2x2x128xf32>
    %c1 = arith.constant 1 : index
    %c0_11 = arith.constant 0 : index
    %c0_12 = arith.constant 0 : index
    %13 = vector.load %arg2[%c1, %c0_11, %c0_12] : memref<9x1x128xf32, #tpu.memory_space<vmem>>, vector<1x1x128xf32>
    %14 = vector.shape_cast %13 : vector<1x1x128xf32> to vector<1x128xf32>
    %15 = vector.shape_cast %14 : vector<1x128xf32> to vector<1x1x128xf32>
    %16 = vector.broadcast %15 : vector<1x1x128xf32> to vector<2x2x128xf32>
    %17 = arith.mulf %12, %16 : vector<2x2x128xf32>
    %18 = arith.addf %9, %17 : vector<2x2x128xf32>
    %c4 = arith.constant 4 : index
    %c0_13 = arith.constant 0 : index
    %c0_14 = arith.constant 0 : index
    %c0_15 = arith.constant 0 : index
    %c0_16 = arith.constant 0 : index
    %19 = vector.load %arg1[%c4, %c0_13, %c0_14, %c0_15, %c0_16] : memref<6x1x3x2x128xbf16, #tpu.memory_space<vmem>>, vector<1x1x2x2x128xbf16>
    %20 = vector.shape_cast %19 : vector<1x1x2x2x128xbf16> to vector<2x2x128xbf16>
    %21 = arith.extf %20 : vector<2x2x128xbf16> to vector<2x2x128xf32>
    %c2_17 = arith.constant 2 : index
    %c0_18 = arith.constant 0 : index
    %c0_19 = arith.constant 0 : index
    %22 = vector.load %arg2[%c2_17, %c0_18, %c0_19] : memref<9x1x128xf32, #tpu.memory_space<vmem>>, vector<1x1x128xf32>
    %23 = vector.shape_cast %22 : vector<1x1x128xf32> to vector<1x128xf32>
    %24 = vector.shape_cast %23 : vector<1x128xf32> to vector<1x1x128xf32>
    %25 = vector.broadcast %24 : vector<1x1x128xf32> to vector<2x2x128xf32>
    %26 = arith.mulf %21, %25 : vector<2x2x128xf32>
    %27 = arith.addf %18, %26 : vector<2x2x128xf32>
    %c1_20 = arith.constant 1 : index
    %c0_21 = arith.constant 0 : index
    %c0_22 = arith.constant 0 : index
    %c0_23 = arith.constant 0 : index
    %c0_24 = arith.constant 0 : index
    %28 = vector.load %arg1[%c1_20, %c0_21, %c0_22, %c0_23, %c0_24] : memref<6x1x3x2x128xbf16, #tpu.memory_space<vmem>>, vector<1x1x2x2x128xbf16>
    %29 = vector.shape_cast %28 : vector<1x1x2x2x128xbf16> to vector<2x2x128xbf16>
    %30 = arith.extf %29 : vector<2x2x128xbf16> to vector<2x2x128xf32>
    %c3 = arith.constant 3 : index
    %c0_25 = arith.constant 0 : index
    %c0_26 = arith.constant 0 : index
    %31 = vector.load %arg2[%c3, %c0_25, %c0_26] : memref<9x1x128xf32, #tpu.memory_space<vmem>>, vector<1x1x128xf32>
    %32 = vector.shape_cast %31 : vector<1x1x128xf32> to vector<1x128xf32>
    %33 = vector.shape_cast %32 : vector<1x128xf32> to vector<1x1x128xf32>
    %34 = vector.broadcast %33 : vector<1x1x128xf32> to vector<2x2x128xf32>
    %35 = arith.mulf %30, %34 : vector<2x2x128xf32>
    %36 = arith.addf %27, %35 : vector<2x2x128xf32>
    %c3_27 = arith.constant 3 : index
    %c0_28 = arith.constant 0 : index
    %c0_29 = arith.constant 0 : index
    %c0_30 = arith.constant 0 : index
    %c0_31 = arith.constant 0 : index
    %37 = vector.load %arg1[%c3_27, %c0_28, %c0_29, %c0_30, %c0_31] : memref<6x1x3x2x128xbf16, #tpu.memory_space<vmem>>, vector<1x1x2x2x128xbf16>
    %38 = vector.shape_cast %37 : vector<1x1x2x2x128xbf16> to vector<2x2x128xbf16>
    %39 = arith.extf %38 : vector<2x2x128xbf16> to vector<2x2x128xf32>
    %c4_32 = arith.constant 4 : index
    %c0_33 = arith.constant 0 : index
    %c0_34 = arith.constant 0 : index
    %40 = vector.load %arg2[%c4_32, %c0_33, %c0_34] : memref<9x1x128xf32, #tpu.memory_space<vmem>>, vector<1x1x128xf32>
    %41 = vector.shape_cast %40 : vector<1x1x128xf32> to vector<1x128xf32>
    %42 = vector.shape_cast %41 : vector<1x128xf32> to vector<1x1x128xf32>
    %43 = vector.broadcast %42 : vector<1x1x128xf32> to vector<2x2x128xf32>
    %44 = arith.mulf %39, %43 : vector<2x2x128xf32>
    %45 = arith.addf %36, %44 : vector<2x2x128xf32>
    %c5 = arith.constant 5 : index
    %c0_35 = arith.constant 0 : index
    %c0_36 = arith.constant 0 : index
    %c0_37 = arith.constant 0 : index
    %c0_38 = arith.constant 0 : index
    %46 = vector.load %arg1[%c5, %c0_35, %c0_36, %c0_37, %c0_38] : memref<6x1x3x2x128xbf16, #tpu.memory_space<vmem>>, vector<1x1x2x2x128xbf16>
    %47 = vector.shape_cast %46 : vector<1x1x2x2x128xbf16> to vector<2x2x128xbf16>
    %48 = arith.extf %47 : vector<2x2x128xbf16> to vector<2x2x128xf32>
    %c5_39 = arith.constant 5 : index
    %c0_40 = arith.constant 0 : index
    %c0_41 = arith.constant 0 : index
    %49 = vector.load %arg2[%c5_39, %c0_40, %c0_41] : memref<9x1x128xf32, #tpu.memory_space<vmem>>, vector<1x1x128xf32>
    %50 = vector.shape_cast %49 : vector<1x1x128xf32> to vector<1x128xf32>
    %51 = vector.shape_cast %50 : vector<1x128xf32> to vector<1x1x128xf32>
    %52 = vector.broadcast %51 : vector<1x1x128xf32> to vector<2x2x128xf32>
    %53 = arith.mulf %48, %52 : vector<2x2x128xf32>
    %54 = arith.addf %45, %53 : vector<2x2x128xf32>
    %c0_42 = arith.constant 0 : index
    %c0_43 = arith.constant 0 : index
    %c1_44 = arith.constant 1 : index
    %c0_45 = arith.constant 0 : index
    %c0_46 = arith.constant 0 : index
    %55 = vector.load %arg1[%c0_42, %c0_43, %c1_44, %c0_45, %c0_46] : memref<6x1x3x2x128xbf16, #tpu.memory_space<vmem>>, vector<1x1x2x2x128xbf16>
    %56 = vector.shape_cast %55 : vector<1x1x2x2x128xbf16> to vector<2x2x128xbf16>
    %57 = arith.extf %56 : vector<2x2x128xbf16> to vector<2x2x128xf32>
    %c6 = arith.constant 6 : index
    %c0_47 = arith.constant 0 : index
    %c0_48 = arith.constant 0 : index
    %58 = vector.load %arg2[%c6, %c0_47, %c0_48] : memref<9x1x128xf32, #tpu.memory_space<vmem>>, vector<1x1x128xf32>
    %59 = vector.shape_cast %58 : vector<1x1x128xf32> to vector<1x128xf32>
    %60 = vector.shape_cast %59 : vector<1x128xf32> to vector<1x1x128xf32>
    %61 = vector.broadcast %60 : vector<1x1x128xf32> to vector<2x2x128xf32>
    %62 = arith.mulf %57, %61 : vector<2x2x128xf32>
    %63 = arith.addf %54, %62 : vector<2x2x128xf32>
    %c2_49 = arith.constant 2 : index
    %c0_50 = arith.constant 0 : index
    %c1_51 = arith.constant 1 : index
    %c0_52 = arith.constant 0 : index
    %c0_53 = arith.constant 0 : index
    %64 = vector.load %arg1[%c2_49, %c0_50, %c1_51, %c0_52, %c0_53] : memref<6x1x3x2x128xbf16, #tpu.memory_space<vmem>>, vector<1x1x2x2x128xbf16>
    %65 = vector.shape_cast %64 : vector<1x1x2x2x128xbf16> to vector<2x2x128xbf16>
    %66 = arith.extf %65 : vector<2x2x128xbf16> to vector<2x2x128xf32>
    %c7 = arith.constant 7 : index
    %c0_54 = arith.constant 0 : index
    %c0_55 = arith.constant 0 : index
    %67 = vector.load %arg2[%c7, %c0_54, %c0_55] : memref<9x1x128xf32, #tpu.memory_space<vmem>>, vector<1x1x128xf32>
    %68 = vector.shape_cast %67 : vector<1x1x128xf32> to vector<1x128xf32>
    %69 = vector.shape_cast %68 : vector<1x128xf32> to vector<1x1x128xf32>
    %70 = vector.broadcast %69 : vector<1x1x128xf32> to vector<2x2x128xf32>
    %71 = arith.mulf %66, %70 : vector<2x2x128xf32>
    %72 = arith.addf %63, %71 : vector<2x2x128xf32>
    %c4_56 = arith.constant 4 : index
    %c0_57 = arith.constant 0 : index
    %c1_58 = arith.constant 1 : index
    %c0_59 = arith.constant 0 : index
    %c0_60 = arith.constant 0 : index
    %73 = vector.load %arg1[%c4_56, %c0_57, %c1_58, %c0_59, %c0_60] : memref<6x1x3x2x128xbf16, #tpu.memory_space<vmem>>, vector<1x1x2x2x128xbf16>
    %74 = vector.shape_cast %73 : vector<1x1x2x2x128xbf16> to vector<2x2x128xbf16>
    %75 = arith.extf %74 : vector<2x2x128xbf16> to vector<2x2x128xf32>
    %c8 = arith.constant 8 : index
    %c0_61 = arith.constant 0 : index
    %c0_62 = arith.constant 0 : index
    %76 = vector.load %arg2[%c8, %c0_61, %c0_62] : memref<9x1x128xf32, #tpu.memory_space<vmem>>, vector<1x1x128xf32>
    %77 = vector.shape_cast %76 : vector<1x1x128xf32> to vector<1x128xf32>
    %78 = vector.shape_cast %77 : vector<1x128xf32> to vector<1x1x128xf32>
    %79 = vector.broadcast %78 : vector<1x1x128xf32> to vector<2x2x128xf32>
    %80 = arith.mulf %75, %79 : vector<2x2x128xf32>
    %81 = arith.addf %72, %80 : vector<2x2x128xf32>
    %c0_63 = arith.constant 0 : index
    %c0_64 = arith.constant 0 : index
    %82 = vector.load %arg3[%c0_63, %c0_64] : memref<1x128xf32, #tpu.memory_space<vmem>>, vector<1x128xf32>
    %83 = vector.shape_cast %82 : vector<1x128xf32> to vector<1x1x128xf32>
    %84 = vector.broadcast %83 : vector<1x1x128xf32> to vector<2x2x128xf32>
    %85 = arith.addf %81, %84 : vector<2x2x128xf32>
    %cst_65 = arith.constant 0.000000e+00 : f32
    %86 = vector.broadcast %cst_65 : f32 to vector<2x2x128xf32>
    %87 = arith.maximumf %85, %86 : vector<2x2x128xf32>
    %cst_66 = arith.constant dense<0.000000e+00> : vector<2x128xf32>
    %88 = vector.multi_reduction <add>, %87, %cst_66 [0] : vector<2x2x128xf32> to vector<2x128xf32>
    %cst_67 = arith.constant 2.000000e+00 : f32
    %89 = vector.broadcast %cst_67 : f32 to vector<2x128xf32>
    %90 = arith.divf %88, %89 : vector<2x128xf32>
    %cst_68 = arith.constant dense<0.000000e+00> : vector<128xf32>
    %91 = vector.multi_reduction <add>, %90, %cst_68 [0] : vector<2x128xf32> to vector<128xf32>
    %92 = vector.shape_cast %91 : vector<128xf32> to vector<1x128xf32>
    %cst_69 = arith.constant 2.000000e+00 : f32
    %93 = vector.broadcast %cst_69 : f32 to vector<1x128xf32>
    %94 = arith.divf %92, %93 : vector<1x128xf32>
    %c0_70 = arith.constant 0 : index
    %c0_71 = arith.constant 0 : index
    %95 = vector.load %arg4[%c0_70, %c0_71] : memref<128x128xf32, #tpu.memory_space<vmem>>, vector<128x128xf32>
    %cst_72 = arith.constant dense<0.000000e+00> : vector<1x128xf32>
    %96 = tpu.matmul %94, %95, %cst_72 {dimension_numbers = #tpu.dot_dimension_numbers<[1], [0], [0], [1], [0, 0, 1, 1], [], []>} : vector<1x128xf32>, vector<128x128xf32>, vector<1x128xf32> -> vector<1x128xf32>
    %c0_73 = arith.constant 0 : index
    %c0_74 = arith.constant 0 : index
    %97 = vector.load %arg5[%c0_73, %c0_74] : memref<1x128xf32, #tpu.memory_space<vmem>>, vector<1x128xf32>
    %98 = arith.addf %96, %97 : vector<1x128xf32>
    %cst_75 = arith.constant 0.000000e+00 : f32
    %99 = vector.broadcast %cst_75 : f32 to vector<1x128xf32>
    %100 = arith.maximumf %98, %99 : vector<1x128xf32>
    %c0_76 = arith.constant 0 : index
    %c0_77 = arith.constant 0 : index
    %101 = vector.load %arg6[%c0_76, %c0_77] : memref<128x128xf32, #tpu.memory_space<vmem>>, vector<128x128xf32>
    %cst_78 = arith.constant dense<0.000000e+00> : vector<1x128xf32>
    %102 = tpu.matmul %100, %101, %cst_78 {dimension_numbers = #tpu.dot_dimension_numbers<[1], [0], [0], [1], [0, 0, 1, 1], [], []>} : vector<1x128xf32>, vector<128x128xf32>, vector<1x128xf32> -> vector<1x128xf32>
    %c0_79 = arith.constant 0 : index
    %c0_80 = arith.constant 0 : index
    %103 = vector.load %arg7[%c0_79, %c0_80] : memref<1x128xf32, #tpu.memory_space<vmem>>, vector<1x128xf32>
    %104 = arith.addf %102, %103 : vector<1x128xf32>
    %cst_81 = arith.constant 0.000000e+00 : f32
    %105 = vector.broadcast %cst_81 : f32 to vector<1x128xf32>
    %106 = arith.subf %105, %104 : vector<1x128xf32>
    %107 = math.exp %106 : vector<1x128xf32>
    %cst_82 = arith.constant 1.000000e+00 : f32
    %108 = vector.broadcast %cst_82 : f32 to vector<1x128xf32>
    %109 = arith.addf %108, %107 : vector<1x128xf32>
    %cst_83 = arith.constant 1.000000e+00 : f32
    %110 = vector.broadcast %cst_83 : f32 to vector<1x128xf32>
    %111 = arith.divf %110, %109 : vector<1x128xf32>
    %112 = vector.shape_cast %111 : vector<1x128xf32> to vector<1x1x128xf32>
    %113 = vector.broadcast %112 : vector<1x1x128xf32> to vector<2x2x128xf32>
    %114 = arith.mulf %87, %113 : vector<2x2x128xf32>
    %115 = arith.truncf %114 : vector<2x2x128xf32> to vector<2x2x128xbf16>
    %c0_84 = arith.constant 0 : index
    %c0_85 = arith.constant 0 : index
    %c0_86 = arith.constant 0 : index
    %c0_87 = arith.constant 0 : index
    %116 = vector.load %arg8[%c0_84, %c0_85, %c0_86, %c0_87] : memref<1x2x2x128xbf16, #tpu.memory_space<vmem>>, vector<1x2x2x128xbf16>
    %117 = vector.shape_cast %116 : vector<1x2x2x128xbf16> to vector<2x2x128xbf16>
    %118 = vector.shape_cast %115 : vector<2x2x128xbf16> to vector<1x2x2x128xbf16>
    tpu.vector_store %arg8[%c0_84, %c0_85, %c0_86, %c0_87], %118 {strides = array<i32>} : memref<1x2x2x128xbf16, #tpu.memory_space<vmem>>, vector<1x2x2x128xbf16>,
    return
  }
  func.func @transform_0(%arg0: i32) -> (i32, i32, i32, i32, i32) {
    %c0_i32 = arith.constant 0 : i32
    %c0_i32_0 = arith.constant 0 : i32
    %c0_i32_1 = arith.constant 0 : i32
    %c0_i32_2 = arith.constant 0 : i32
    %c0_i32_3 = arith.constant 0 : i32
    return %c0_i32, %arg0, %c0_i32_0, %c0_i32_1, %c0_i32_2 : i32, i32, i32, i32, i32
  }
  func.func @transform_1(%arg0: i32) -> (i32, i32, i32) {
    %c0_i32 = arith.constant 0 : i32
    %c0_i32_0 = arith.constant 0 : i32
    %c0_i32_1 = arith.constant 0 : i32
    %c0_i32_2 = arith.constant 0 : i32
    return %c0_i32, %c0_i32_0, %c0_i32_1 : i32, i32, i32
  }
  func.func @transform_2(%arg0: i32) -> (i32, i32) {
    %c0_i32 = arith.constant 0 : i32
    %c0_i32_0 = arith.constant 0 : i32
    %c0_i32_1 = arith.constant 0 : i32
    return %c0_i32, %c0_i32_0 : i32, i32
  }
  func.func @transform_3(%arg0: i32) -> (i32, i32) {
    %c0_i32 = arith.constant 0 : i32
    %c0_i32_0 = arith.constant 0 : i32
    %c0_i32_1 = arith.constant 0 : i32
    return %c0_i32, %c0_i32_0 : i32, i32
  }
  func.func @transform_4(%arg0: i32) -> (i32, i32) {
    %c0_i32 = arith.constant 0 : i32
    %c0_i32_0 = arith.constant 0 : i32
    %c0_i32_1 = arith.constant 0 : i32
    return %c0_i32, %c0_i32_0 : i32, i32
  }
  func.func @transform_5(%arg0: i32) -> (i32, i32) {
    %c0_i32 = arith.constant 0 : i32
    %c0_i32_0 = arith.constant 0 : i32
    %c0_i32_1 = arith.constant 0 : i32
    return %c0_i32, %c0_i32_0 : i32, i32
  }
  func.func @transform_6(%arg0: i32) -> (i32, i32) {
    %c0_i32 = arith.constant 0 : i32
    %c0_i32_0 = arith.constant 0 : i32
    %c0_i32_1 = arith.constant 0 : i32
    return %c0_i32, %c0_i32_0 : i32, i32
  }
  func.func @transform_7(%arg0: i32) -> (i32, i32, i32, i32) {
    %c0_i32 = arith.constant 0 : i32
    %c0_i32_0 = arith.constant 0 : i32
    %c0_i32_1 = arith.constant 0 : i32
    %c0_i32_2 = arith.constant 0 : i32
    return %arg0, %c0_i32, %c0_i32_0, %c0_i32_1 : i32, i32, i32, i32
  }
}

</mosaic_0001>

<llo_original>
// kernel: efficientnet_features_forward.12
$region0: #{efficientnet_features_forward.12}
  #allocation0 [shape = 'u32[]', space=smem, size = 0x4, offset = 0x4, fixed_abs, tag = 'smem constant byte address 0x4 - core index']
  #allocation1 [shape = 'u32[144,128]{1,0:T(1,128)}', space=vmem, size = 0x12000, scoped, tag = 'internal scratch']
  %s0 = inlined_call_operand.vmem [shape: bf16[128,128], index: 0, kind: input, shape index: {}]
  %s1 = inlined_call_operand.vmem [shape: bf16[128,128], index: 1, kind: input, shape index: {}]
  %s2 = inlined_call_operand.vmem [shape: f32[1,128], index: 2, kind: input, shape index: {}]
  %s3 = inlined_call_operand.vmem [shape: bf16[128,128], index: 3, kind: output, shape index: {}]
  %s4 = sld [smem:[#allocation0]]
  $region45: #{efficientnet_features_forward.12} parent=0
    _
  %s6 = ssub.s32 1, %s4
  %s7 = scalar_select 0, %s6, %s4
  loop: start=0, step=1, limit=4
  $region2: #{efficientnet_features_forward.12} parent=0 // loop_pre_header
    _
  $region3: #{efficientnet_features_forward.12} parent=0 // loop_header
    %s9 = sphi 0, %s13
    %p10 = scmp.ge.s32.totalorder %s9, 4
    %s19 = sphi 0, %s21
    %s22 = sphi 0, %s19
    %s23 = sphi 0, %s22
    %s39 = sphi 0, %s23
    %s43 = sphi 0, %s43
    %s45 = sphi 0, %s43
    %s46 = sphi 0, %s45
    %s60 = sphi 0, %s46
    %s64 = sphi 0, %s64
    %s66 = sphi 0, %s64
    %s67 = sphi 0, %s66
    %s81 = sphi 0, %s67
    %s87 = sphi 0, %s89
    %s90 = sphi 0, %s87
    %s91 = sphi 0, %s90
    %s107 = sphi 0, %s91
  $region4: #{efficientnet_features_forward.12} parent=0 // loop_header_branch
    %12 = sbr.rel (%p10) target = $region8
  $region5: #{efficientnet_features_forward.12} parent=0 // loop_body
    %s14 = ssub.s32 %s9, 1
    %s15 = ssub.s32 %s9, 2
    %s16 = sadd.s32 %s9, 1
    %s17 = ssub.s32 %s9, %s16
    %p18 = scmp.eq.s32.totalorder %s17, 0
    %s20 = sadd.s32 %s19, 1
    %s21 = scalar_select %p18, %s19, %s20
    %p24 = pneg %p18
    %p25 = scmp.eq.s32.totalorder %s9, 1
    %p26 = por %p24, %p25
    %p27 = scmp.ne.s32.totalorder %s19, %s22
    %p28 = scmp.eq.s32.totalorder %s9, 0
    %p29 = por %p27, %p28
    %p30 = scmp.ne.s32.totalorder %s19, %s22
    %p31 = scmp.eq.s32.totalorder %s14, 1
    %p32 = por %p30, %p31
    %p33 = scmp.ne.s32.totalorder %s22, %s23
    %p34 = scmp.eq.s32.totalorder %s14, 0
    %p35 = por %p33, %p34
    %p36 = scmp.ne.s32.totalorder %s22, %s23
    %p37 = scmp.eq.s32.totalorder %s15, 1
    %p38 = por %p36, %p37
    %p40 = scmp.ne.s32.totalorder %s23, %s39
    %p41 = scmp.eq.s32.totalorder %s15, 0
    %p42 = por %p40, %p41
    %s44 = sadd.s32 %s43, 1
    %p47 = scmp.eq.s32.totalorder %s9, 1
    %p48 = scmp.ne.s32.totalorder %s43, %s45
    %p49 = scmp.eq.s32.totalorder %s9, 0
    %p50 = por %p48, %p49
    %p51 = scmp.ne.s32.totalorder %s43, %s45
    %p52 = scmp.eq.s32.totalorder %s14, 1
    %p53 = por %p51, %p52
    %p54 = scmp.ne.s32.totalorder %s45, %s46
    %p55 = scmp.eq.s32.totalorder %s14, 0
    %p56 = por %p54, %p55
    %p57 = scmp.ne.s32.totalorder %s45, %s46
    %p58 = scmp.eq.s32.totalorder %s15, 1
    %p59 = por %p57, %p58
    %p61 = scmp.ne.s32.totalorder %s46, %s60
    %p62 = scmp.eq.s32.totalorder %s15, 0
    %p63 = por %p61, %p62
    %s65 = sadd.s32 %s64, 1
    %p68 = scmp.eq.s32.totalorder %s9, 1
    %p69 = scmp.ne.s32.totalorder %s64, %s66
    %p70 = scmp.eq.s32.totalorder %s9, 0
    %p71 = por %p69, %p70
    %p72 = scmp.ne.s32.totalorder %s64, %s66
    %p73 = scmp.eq.s32.totalorder %s14, 1
    %p74 = por %p72, %p73
    %p75 = scmp.ne.s32.totalorder %s66, %s67
    %p76 = scmp.eq.s32.totalorder %s14, 0
    %p77 = por %p75, %p76
    %p78 = scmp.ne.s32.totalorder %s66, %s67
    %p79 = scmp.eq.s32.totalorder %s15, 1
    %p80 = por %p78, %p79
    %p82 = scmp.ne.s32.totalorder %s67, %s81
    %p83 = scmp.eq.s32.totalorder %s15, 0
    %p84 = por %p82, %p83
    %s85 = ssub.s32 %s9, %s16
    %p86 = scmp.eq.s32.totalorder %s85, 0
    %s88 = sadd.s32 %s87, 1
    %s89 = scalar_select %p86, %s87, %s88
    %p92 = pneg %p86
    %p93 = scmp.eq.s32.totalorder %s9, 1
    %p94 = por %p92, %p93
    %p95 = scmp.ne.s32.totalorder %s87, %s90
    %p96 = scmp.eq.s32.totalorder %s9, 0
    %p97 = por %p95, %p96
    %p98 = scmp.ne.s32.totalorder %s87, %s90
    %p99 = scmp.eq.s32.totalorder %s14, 1
    %p100 = por %p98, %p99
    %p101 = scmp.ne.s32.totalorder %s90, %s91
    %p102 = scmp.eq.s32.totalorder %s14, 0
    %p103 = por %p101, %p102
    %p104 = scmp.ne.s32.totalorder %s90, %s91
    %p105 = scmp.eq.s32.totalorder %s15, 1
    %p106 = por %p104, %p105
    %p108 = scmp.ne.s32.totalorder %s91, %s107
    %p109 = scmp.eq.s32.totalorder %s15, 0
    %p110 = por %p108, %p109
    %p111 = scmp.le.s32.totalorder 1, %s9
    %p112 = scmp.lt.s32.totalorder %s9, 3
    %p113 = pnand %p111, %p112
    %p114 = pneg %p113
    // Predicated region
    $region9: #{efficientnet_features_forward.12} parent=5 // pred_check
      _
    $region10: #{efficientnet_features_forward.12} parent=5 // pred_check_branch
      %116 = sbr.rel (%p113) target = $region12
    $region11: #{efficientnet_features_forward.12} parent=5 // pred_region
      %s117 = ssub.s32 %s9, 1
      // Predicated region
      $region13: #{efficientnet_features_forward.12} parent=11 // pred_check
        %p118 = pneg %p56
      $region14: #{efficientnet_features_forward.12} parent=11 // pred_check_branch
        %120 = sbr.rel (%p118) target = $region16
      $region15: #{efficientnet_features_forward.12} parent=11 // pred_region
        _
      $region16: #{efficientnet_features_forward.12} parent=11 // pred_fallthru
        _
      // Predicated region
      $region17: #{efficientnet_features_forward.12} parent=11 // pred_check
        %p121 = pneg %p77
      $region18: #{efficientnet_features_forward.12} parent=11 // pred_check_branch
        %123 = sbr.rel (%p121) target = $region20
      $region19: #{efficientnet_features_forward.12} parent=11 // pred_region
        _
      $region20: #{efficientnet_features_forward.12} parent=11 // pred_fallthru
        _
    $region12: #{efficientnet_features_forward.12} parent=5 // pred_fallthru
      _
    %p124 = scmp.lt.s32.totalorder %s9, 2
    // Predicated region
    $region21: #{efficientnet_features_forward.12} parent=5 // pred_check
      %p125 = pneg %p124
    $region22: #{efficientnet_features_forward.12} parent=5 // pred_check_branch
      %127 = sbr.rel (%p125) target = $region24
    $region23: #{efficientnet_features_forward.12} parent=5 // pred_region
      // Predicated region
      $region25: #{efficientnet_features_forward.12} parent=23 // pred_check
        %p128 = pneg %p29
      $region26: #{efficientnet_features_forward.12} parent=23 // pred_check_branch
        %130 = sbr.rel (%p128) target = $region28
      $region27: #{efficientnet_features_forward.12} parent=23 // pred_region
        %s131 = smul.u32 8, %s9
        %p132 = scmp.lt.s32.totalorder %s131, 15
        %s133 = scalar_select %p132, %s131, 15
        %s134 = smul.addr %s133, 4
        %s135 = scalar_lea.vmem %s0, %s134
        %s136 = smul.u32 8, %s9
      $region28: #{efficientnet_features_forward.12} parent=23 // pred_fallthru
        _
    $region24: #{efficientnet_features_forward.12} parent=5 // pred_fallthru
      _
    %p137 = scmp.le.s32.totalorder 1, %s9
    %p138 = scmp.lt.s32.totalorder %s9, 3
    %p139 = pnand %p137, %p138
    %p140 = pneg %p139
    // Predicated region
    $region29: #{efficientnet_features_forward.12} parent=5 // pred_check
      _
    $region30: #{efficientnet_features_forward.12} parent=5 // pred_check_branch
      %142 = sbr.rel (%p139) target = $region32
    $region31: #{efficientnet_features_forward.12} parent=5 // pred_region
      %s143 = ssub.s32 %s9, 1
      %s144 = smul.u32 8, %s14
      %p145 = scmp.lt.s32.totalorder %s144, 15
      %s146 = scalar_select %p145, %s144, 15
      %s147 = smul.addr %s146, 4
      %s148 = scalar_lea.vmem %s0, %s147
      %p149 = pneg %p35
      %p150 = pneg %p32
      %p151 = pneg %p56
      %p152 = pneg %p53
      %p153 = pneg %p77
      %p154 = pneg %p74
      %p155 = pneg %p103
      %p156 = pneg %p100
      %s157 = smul.u32 8, %s14
      %p158 = scmp.lt.s32.totalorder %s157, 15
      %s159 = scalar_select %p158, %s157, 15
      %s160 = smul.addr %s159, 4
      %s161 = scalar_lea.vmem %s3, %s160
      %s162 = smul.u32 8, %s14
      %p163 = scmp.lt.s32.totalorder %s162, 15
      %s164 = scalar_select %p163, %s162, 15
      %s165 = smul.addr %s164, 4
      %s166 = scalar_lea.vmem %s0, %s165
      %s167 = smul.u32 8, %s14
      %s168 = smul.u32 8, %s14
      %p169 = scmp.lt.s32.totalorder %s168, 15
      %s170 = scalar_select %p169, %s168, 15
      %s171 = smul.addr %s170, 4
      %s172 = scalar_lea.vmem %s3, %s171
      %s173 = smul.u32 8, %s14
      %v175 = vld [vmem:[%s166] sm:$0xf]
      %v176 = vld [vmem:[%s166 + $0x4] sm:$0xf]
      %v177 = vld [vmem:[%s166 + $0x8] sm:$0xf]
      %v178 = vld [vmem:[%s166 + $0xc] sm:$0xf]
      %v179 = vld [vmem:[%s166 + $0x10] sm:$0xf]
      %v180 = vld [vmem:[%s166 + $0x14] sm:$0xf]
      %v181 = vld [vmem:[%s166 + $0x18] sm:$0xf]
      %v182 = vld [vmem:[%s166 + $0x1c] sm:$0xf]
      %v183 = vld [vmem:[%s1] sm:$0xf]
      %v184 = vld [vmem:[%s1 + $0x4] sm:$0xf]
      %v185 = vld [vmem:[%s1 + $0x8] sm:$0xf]
      %v186 = vld [vmem:[%s1 + $0xc] sm:$0xf]
      %v187 = vld [vmem:[%s1 + $0x10] sm:$0xf]
      %v188 = vld [vmem:[%s1 + $0x14] sm:$0xf]
      %v189 = vld [vmem:[%s1 + $0x18] sm:$0xf]
      %v190 = vld [vmem:[%s1 + $0x1c] sm:$0xf]
      %v191 = vld [vmem:[%s1 + $0x20] sm:$0xf]
      %v192 = vld [vmem:[%s1 + $0x24] sm:$0xf]
      %v193 = vld [vmem:[%s1 + $0x28] sm:$0xf]
      %v194 = vld [vmem:[%s1 + $0x2c] sm:$0xf]
      %v195 = vld [vmem:[%s1 + $0x30] sm:$0xf]
      %v196 = vld [vmem:[%s1 + $0x34] sm:$0xf]
      %v197 = vld [vmem:[%s1 + $0x38] sm:$0xf]
      %v198 = vld [vmem:[%s1 + $0x3c] sm:$0xf]
      %v199 = vld [vmem:[%s2] sm:$0x1]
      %v201 = vlaneseq
      %v202 = vshrl.u32 %v201, 7
      %v203 = vsub.s32 0, %v202
      %v204 = vrot.slane %v199, %v203
      %v214 = vunpack.c.l.b16 %v175
      %v215 = vunpack.c.l.b16 %v176
      %v216 = vunpack.c.l.b16 %v177
      %v217 = vunpack.c.l.b16 %v178
      %v218 = vunpack.c.l.b16 %v179
      %v219 = vunpack.c.l.b16 %v180
      %v220 = vunpack.c.l.b16 %v181
      %v221 = vunpack.c.l.b16 %v182
      %v222 = vpack.c.b16 %v215, %v214
      %v223 = vpack.c.b16 %v217, %v216
      %v224 = vpack.c.b16 %v219, %v218
      %v225 = vpack.c.b16 %v221, %v220
      %v246 = vunpack.c.l.b16 %v183
      %v247 = vunpack.c.l.b16 %v184
      %v248 = vunpack.c.l.b16 %v185
      %v249 = vunpack.c.l.b16 %v186
      %v250 = vunpack.c.l.b16 %v187
      %v251 = vunpack.c.l.b16 %v188
      %v252 = vunpack.c.l.b16 %v189
      %v253 = vunpack.c.l.b16 %v190
      %v254 = vunpack.c.l.b16 %v191
      %v255 = vunpack.c.l.b16 %v192
      %v256 = vunpack.c.l.b16 %v193
      %v257 = vunpack.c.l.b16 %v194
      %v258 = vunpack.c.l.b16 %v195
      %v259 = vunpack.c.l.b16 %v196
      %v260 = vunpack.c.l.b16 %v197
      %v261 = vunpack.c.l.b16 %v198
      %v262 = vpack.c.b16 %v247, %v246
      %v263 = vpack.c.b16 %v249, %v248
      %v264 = vpack.c.b16 %v251, %v250
      %v265 = vpack.c.b16 %v253, %v252
      %v266 = vpack.c.b16 %v255, %v254
      %v267 = vpack.c.b16 %v257, %v256
      %v268 = vpack.c.b16 %v259, %v258
      %v269 = vpack.c.b16 %v261, %v260
      %278 = vmatprep.subr.bf16.mxu0 0
      %279 = vmatpush1.bf16.msra.mxu0 %v269
      %280 = vmatprep.subr.bf16.mxu0 0
      %281 = vmatpush1.bf16.msra.mxu0 %v268
      %282 = vmatprep.subr.bf16.mxu0 0
      %283 = vmatpush1.bf16.msra.mxu0 %v267
      %284 = vmatprep.subr.bf16.mxu0 0
      %285 = vmatpush1.bf16.msra.mxu0 %v266
      %286 = vmatprep.subr.bf16.mxu0 0
      %287 = vmatpush1.bf16.msra.mxu0 %v265
      %288 = vmatprep.subr.bf16.mxu0 0
      %289 = vmatpush1.bf16.msra.mxu0 %v264
      %290 = vmatprep.subr.bf16.mxu0 0
      %291 = vmatpush1.bf16.msra.mxu0 %v263
      %292 = vmatprep.subr.bf16.mxu0 0
      %293 = vmatpush1.bf16.msra.mxu0 %v262
      %294 = vmatprep.subr.bf16.mxu0 0
      %295 = vmatpush2.bf16.msra.mxu0 0
      %296 = vmatprep.subr.bf16.mxu0 0
      %297 = vmatpush2.bf16.msra.mxu0 0
      %298 = vmatprep.subr.bf16.mxu0 0
      %299 = vmatpush2.bf16.msra.mxu0 0
      %300 = vmatprep.subr.bf16.mxu0 0
      %301 = vmatpush2.bf16.msra.mxu0 0
      %302 = vmatprep.subr.bf16.mxu0 0
      %303 = vmatpush2.bf16.msra.mxu0 0
      %304 = vmatprep.subr.bf16.mxu0 0
      %305 = vmatpush2.bf16.msra.mxu0 0
      %306 = vmatprep.subr.bf16.mxu0 0
      %307 = vmatpush2.bf16.msra.mxu0 0
      %308 = vmatprep.subr.bf16.mxu0 0
      %309 = vmatpush2.bf16.msra.mxu0 0
      %310 = vmatprep.mubr.bf16.mxu0 0
      %311 = vmatmul.mubr.bf16.gmra.mxu0 %v222
      %v312 = vpop.f32.mrf.mxu0
      %v313 = vadd.f32 %v204, %v312
      %v314 = vpop.f32.mrf.mxu0
      %v315 = vpop.f32.mrf.mxu0
      %v316 = vadd.f32 %v204, %v315
      %v317 = vpop.f32.mrf.mxu0
      %318 = vmatprep.mubr.bf16.mxu0 0
      %319 = vmatmul.mubr.bf16.gmra.mxu0 %v223
      %v320 = vpop.f32.mrf.mxu0
      %v321 = vadd.f32 %v204, %v320
      %v322 = vpop.f32.mrf.mxu0
      %v323 = vpop.f32.mrf.mxu0
      %v324 = vadd.f32 %v204, %v323
      %v325 = vpop.f32.mrf.mxu0
      %326 = vmatprep.mubr.bf16.mxu0 0
      %327 = vmatmul.mubr.bf16.gmra.mxu0 %v224
      %v328 = vpop.f32.mrf.mxu0
      %v329 = vadd.f32 %v204, %v328
      %v330 = vpop.f32.mrf.mxu0
      %v331 = vpop.f32.mrf.mxu0
      %v332 = vadd.f32 %v204, %v331
      %v333 = vpop.f32.mrf.mxu0
      %334 = vmatprep.mubr.bf16.mxu0 0
      %335 = vmatmul.mubr.bf16.gmra.mxu0 %v225
      %v336 = vpop.f32.mrf.mxu0
      %v337 = vadd.f32 %v204, %v336
      %v338 = vpop.f32.mrf.mxu0
      %v339 = vpop.f32.mrf.mxu0
      %v340 = vadd.f32 %v204, %v339
      %v341 = vpop.f32.mrf.mxu0
      %342 = vdwg.mxu0
      %v343 = vmax.f32 %v313, 0.0
      %v344 = vmax.f32 %v316, 0.0
      %v345 = vmax.f32 %v321, 0.0
      %v346 = vmax.f32 %v324, 0.0
      %v347 = vmax.f32 %v329, 0.0
      %v348 = vmax.f32 %v332, 0.0
      %v349 = vmax.f32 %v337, 0.0
      %v350 = vmax.f32 %v340, 0.0
      %v351 = vpack.c.bf16 %v344, %v343
      %v352 = vpack.c.bf16 %v346, %v345
      %v353 = vpack.c.bf16 %v348, %v347
      %v354 = vpack.c.bf16 %v350, %v349
      %v359 = vunpack.c.l.b16 %v351
      %v360 = vunpack.c.h.b16 %v351
      %v361 = vunpack.c.l.b16 %v352
      %v362 = vunpack.c.h.b16 %v352
      %v363 = vunpack.c.l.b16 %v353
      %v364 = vunpack.c.h.b16 %v353
      %v365 = vunpack.c.l.b16 %v354
      %v366 = vunpack.c.h.b16 %v354
      %v367 = vpack.c.b16 %v359, %v359
      %v368 = vpack.c.b16 %v360, %v360
      %v369 = vpack.c.b16 %v361, %v361
      %v370 = vpack.c.b16 %v362, %v362
      %v371 = vpack.c.b16 %v363, %v363
      %v372 = vpack.c.b16 %v364, %v364
      %v373 = vpack.c.b16 %v365, %v365
      %v374 = vpack.c.b16 %v366, %v366
      %383 = vst [vmem:[%s172] sm:$0xf] %v367
      %384 = vst [vmem:[%s172 + $0x4] sm:$0xf] %v368
      %385 = vst [vmem:[%s172 + $0x8] sm:$0xf] %v369
      %386 = vst [vmem:[%s172 + $0xc] sm:$0xf] %v370
      %387 = vst [vmem:[%s172 + $0x10] sm:$0xf] %v371
      %388 = vst [vmem:[%s172 + $0x14] sm:$0xf] %v372
      %389 = vst [vmem:[%s172 + $0x18] sm:$0xf] %v373
      %390 = vst [vmem:[%s172 + $0x1c] sm:$0xf] %v374
      %s391 = smul.u32 8, %s14
      %p392 = scmp.lt.s32.totalorder %s391, 15
      %s393 = scalar_select %p392, %s391, 15
      %s394 = smul.addr %s393, 4
      %s395 = scalar_lea.vmem %s3, %s394
      // Predicated region
      $region33: #{efficientnet_features_forward.12} parent=31 // pred_check
        %p396 = pneg %p100
      $region34: #{efficientnet_features_forward.12} parent=31 // pred_check_branch
        %398 = sbr.rel (%p396) target = $region36
      $region35: #{efficientnet_features_forward.12} parent=31 // pred_region
        %s399 = smul.u32 8, %s14
      $region36: #{efficientnet_features_forward.12} parent=31 // pred_fallthru
        _
    $region32: #{efficientnet_features_forward.12} parent=5 // pred_fallthru
      _
    %p400 = scmp.le.s32.totalorder 2, %s9
    // Predicated region
    $region37: #{efficientnet_features_forward.12} parent=5 // pred_check
      %p401 = pneg %p400
    $region38: #{efficientnet_features_forward.12} parent=5 // pred_check_branch
      %403 = sbr.rel (%p401) target = $region40
    $region39: #{efficientnet_features_forward.12} parent=5 // pred_region
      %s404 = ssub.s32 %s9, 2
      // Predicated region
      $region41: #{efficientnet_features_forward.12} parent=39 // pred_check
        %p405 = pneg %p106
      $region42: #{efficientnet_features_forward.12} parent=39 // pred_check_branch
        %407 = sbr.rel (%p405) target = $region44
      $region43: #{efficientnet_features_forward.12} parent=39 // pred_region
        %s408 = smul.u32 8, %s15
        %p409 = scmp.lt.s32.totalorder %s408, 15
        %s410 = scalar_select %p409, %s408, 15
        %s411 = smul.addr %s410, 4
        %s412 = scalar_lea.vmem %s3, %s411
      $region44: #{efficientnet_features_forward.12} parent=39 // pred_fallthru
        _
    $region40: #{efficientnet_features_forward.12} parent=5 // pred_fallthru
      _
  $region6: #{efficientnet_features_forward.12} parent=0 // loop_footer
    %s13 = sadd.s32 1, %s9
  $region7: #{efficientnet_features_forward.12} parent=0 // loop_footer_branch
    %8 = sbr.rel target = $region3
  $region8: #{efficientnet_features_forward.12} parent=0 // loop_exit
    _

// kernel: efficientnet_features_forward.9
$region0: #{efficientnet_features_forward.9}
  #allocation0 [shape = 'u32[]', space=smem, size = 0x4, offset = 0x4, fixed_abs, tag = 'smem constant byte address 0x4 - core index']
  #allocation1 [shape = 'u32[144,128]{1,0:T(1,128)}', space=vmem, size = 0x12000, scoped, tag = 'internal scratch']
  %s0 = inlined_call_operand.vmem [shape: bf16[128,32], index: 0, kind: input, shape index: {}]
  %s1 = inlined_call_operand.vmem [shape: bf16[32,128], index: 1, kind: input, shape index: {}]
  %s2 = inlined_call_operand.vmem [shape: f32[1,128], index: 2, kind: input, shape index: {}]
  %s3 = inlined_call_operand.vmem [shape: bf16[128,128], index: 3, kind: output, shape index: {}]
  %s4 = sld [smem:[#allocation0]]
  $region45: #{efficientnet_features_forward.9} parent=0
    _
  %s6 = ssub.s32 1, %s4
  %s7 = scalar_select 0, %s6, %s4
  loop: start=0, step=1, limit=4
  $region2: #{efficientnet_features_forward.9} parent=0 // loop_pre_header
    _
  $region3: #{efficientnet_features_forward.9} parent=0 // loop_header
    %s9 = sphi 0, %s13
    %p10 = scmp.ge.s32.totalorder %s9, 4
    %s19 = sphi 0, %s21
    %s22 = sphi 0, %s19
    %s23 = sphi 0, %s22
    %s39 = sphi 0, %s23
    %s43 = sphi 0, %s43
    %s45 = sphi 0, %s43
    %s46 = sphi 0, %s45
    %s60 = sphi 0, %s46
    %s64 = sphi 0, %s64
    %s66 = sphi 0, %s64
    %s67 = sphi 0, %s66
    %s81 = sphi 0, %s67
    %s87 = sphi 0, %s89
    %s90 = sphi 0, %s87
    %s91 = sphi 0, %s90
    %s107 = sphi 0, %s91
  $region4: #{efficientnet_features_forward.9} parent=0 // loop_header_branch
    %12 = sbr.rel (%p10) target = $region8
  $region5: #{efficientnet_features_forward.9} parent=0 // loop_body
    %s14 = ssub.s32 %s9, 1
    %s15 = ssub.s32 %s9, 2
    %s16 = sadd.s32 %s9, 1
    %s17 = ssub.s32 %s9, %s16
    %p18 = scmp.eq.s32.totalorder %s17, 0
    %s20 = sadd.s32 %s19, 1
    %s21 = scalar_select %p18, %s19, %s20
    %p24 = pneg %p18
    %p25 = scmp.eq.s32.totalorder %s9, 1
    %p26 = por %p24, %p25
    %p27 = scmp.ne.s32.totalorder %s19, %s22
    %p28 = scmp.eq.s32.totalorder %s9, 0
    %p29 = por %p27, %p28
    %p30 = scmp.ne.s32.totalorder %s19, %s22
    %p31 = scmp.eq.s32.totalorder %s14, 1
    %p32 = por %p30, %p31
    %p33 = scmp.ne.s32.totalorder %s22, %s23
    %p34 = scmp.eq.s32.totalorder %s14, 0
    %p35 = por %p33, %p34
    %p36 = scmp.ne.s32.totalorder %s22, %s23
    %p37 = scmp.eq.s32.totalorder %s15, 1
    %p38 = por %p36, %p37
    %p40 = scmp.ne.s32.totalorder %s23, %s39
    %p41 = scmp.eq.s32.totalorder %s15, 0
    %p42 = por %p40, %p41
    %s44 = sadd.s32 %s43, 1
    %p47 = scmp.eq.s32.totalorder %s9, 1
    %p48 = scmp.ne.s32.totalorder %s43, %s45
    %p49 = scmp.eq.s32.totalorder %s9, 0
    %p50 = por %p48, %p49
    %p51 = scmp.ne.s32.totalorder %s43, %s45
    %p52 = scmp.eq.s32.totalorder %s14, 1
    %p53 = por %p51, %p52
    %p54 = scmp.ne.s32.totalorder %s45, %s46
    %p55 = scmp.eq.s32.totalorder %s14, 0
    %p56 = por %p54, %p55
    %p57 = scmp.ne.s32.totalorder %s45, %s46
    %p58 = scmp.eq.s32.totalorder %s15, 1
    %p59 = por %p57, %p58
    %p61 = scmp.ne.s32.totalorder %s46, %s60
    %p62 = scmp.eq.s32.totalorder %s15, 0
    %p63 = por %p61, %p62
    %s65 = sadd.s32 %s64, 1
    %p68 = scmp.eq.s32.totalorder %s9, 1
    %p69 = scmp.ne.s32.totalorder %s64, %s66
    %p70 = scmp.eq.s32.totalorder %s9, 0
    %p71 = por %p69, %p70
    %p72 = scmp.ne.s32.totalorder %s64, %s66
    %p73 = scmp.eq.s32.totalorder %s14, 1
    %p74 = por %p72, %p73
    %p75 = scmp.ne.s32.totalorder %s66, %s67
    %p76 = scmp.eq.s32.totalorder %s14, 0
    %p77 = por %p75, %p76
    %p78 = scmp.ne.s32.totalorder %s66, %s67
    %p79 = scmp.eq.s32.totalorder %s15, 1
    %p80 = por %p78, %p79
    %p82 = scmp.ne.s32.totalorder %s67, %s81
    %p83 = scmp.eq.s32.totalorder %s15, 0
    %p84 = por %p82, %p83
    %s85 = ssub.s32 %s9, %s16
    %p86 = scmp.eq.s32.totalorder %s85, 0
    %s88 = sadd.s32 %s87, 1
    %s89 = scalar_select %p86, %s87, %s88
    %p92 = pneg %p86
    %p93 = scmp.eq.s32.totalorder %s9, 1
    %p94 = por %p92, %p93
    %p95 = scmp.ne.s32.totalorder %s87, %s90
    %p96 = scmp.eq.s32.totalorder %s9, 0
    %p97 = por %p95, %p96
    %p98 = scmp.ne.s32.totalorder %s87, %s90
    %p99 = scmp.eq.s32.totalorder %s14, 1
    %p100 = por %p98, %p99
    %p101 = scmp.ne.s32.totalorder %s90, %s91
    %p102 = scmp.eq.s32.totalorder %s14, 0
    %p103 = por %p101, %p102
    %p104 = scmp.ne.s32.totalorder %s90, %s91
    %p105 = scmp.eq.s32.totalorder %s15, 1
    %p106 = por %p104, %p105
    %p108 = scmp.ne.s32.totalorder %s91, %s107
    %p109 = scmp.eq.s32.totalorder %s15, 0
    %p110 = por %p108, %p109
    %p111 = scmp.le.s32.totalorder 1, %s9
    %p112 = scmp.lt.s32.totalorder %s9, 3
    %p113 = pnand %p111, %p112
    %p114 = pneg %p113
    // Predicated region
    $region9: #{efficientnet_features_forward.9} parent=5 // pred_check
      _
    $region10: #{efficientnet_features_forward.9} parent=5 // pred_check_branch
      %116 = sbr.rel (%p113) target = $region12
    $region11: #{efficientnet_features_forward.9} parent=5 // pred_region
      %s117 = ssub.s32 %s9, 1
      // Predicated region
      $region13: #{efficientnet_features_forward.9} parent=11 // pred_check
        %p118 = pneg %p56
      $region14: #{efficientnet_features_forward.9} parent=11 // pred_check_branch
        %120 = sbr.rel (%p118) target = $region16
      $region15: #{efficientnet_features_forward.9} parent=11 // pred_region
        _
      $region16: #{efficientnet_features_forward.9} parent=11 // pred_fallthru
        _
      // Predicated region
      $region17: #{efficientnet_features_forward.9} parent=11 // pred_check
        %p121 = pneg %p77
      $region18: #{efficientnet_features_forward.9} parent=11 // pred_check_branch
        %123 = sbr.rel (%p121) target = $region20
      $region19: #{efficientnet_features_forward.9} parent=11 // pred_region
        _
      $region20: #{efficientnet_features_forward.9} parent=11 // pred_fallthru
        _
    $region12: #{efficientnet_features_forward.9} parent=5 // pred_fallthru
      _
    %p124 = scmp.lt.s32.totalorder %s9, 2
    // Predicated region
    $region21: #{efficientnet_features_forward.9} parent=5 // pred_check
      %p125 = pneg %p124
    $region22: #{efficientnet_features_forward.9} parent=5 // pred_check_branch
      %127 = sbr.rel (%p125) target = $region24
    $region23: #{efficientnet_features_forward.9} parent=5 // pred_region
      // Predicated region
      $region25: #{efficientnet_features_forward.9} parent=23 // pred_check
        %p128 = pneg %p29
      $region26: #{efficientnet_features_forward.9} parent=23 // pred_check_branch
        %130 = sbr.rel (%p128) target = $region28
      $region27: #{efficientnet_features_forward.9} parent=23 // pred_region
        %s131 = smul.u32 8, %s9
        %p132 = scmp.lt.s32.totalorder %s131, 15
        %s133 = scalar_select %p132, %s131, 15
        %s134 = smul.addr %s133, 4
        %s135 = scalar_lea.vmem %s0, %s134
        %s136 = smul.u32 8, %s9
      $region28: #{efficientnet_features_forward.9} parent=23 // pred_fallthru
        _
    $region24: #{efficientnet_features_forward.9} parent=5 // pred_fallthru
      _
    %p137 = scmp.le.s32.totalorder 1, %s9
    %p138 = scmp.lt.s32.totalorder %s9, 3
    %p139 = pnand %p137, %p138
    %p140 = pneg %p139
    // Predicated region
    $region29: #{efficientnet_features_forward.9} parent=5 // pred_check
      _
    $region30: #{efficientnet_features_forward.9} parent=5 // pred_check_branch
      %142 = sbr.rel (%p139) target = $region32
    $region31: #{efficientnet_features_forward.9} parent=5 // pred_region
      %s143 = ssub.s32 %s9, 1
      %s144 = smul.u32 8, %s14
      %p145 = scmp.lt.s32.totalorder %s144, 15
      %s146 = scalar_select %p145, %s144, 15
      %s147 = smul.addr %s146, 4
      %s148 = scalar_lea.vmem %s0, %s147
      %p149 = pneg %p35
      %p150 = pneg %p32
      %p151 = pneg %p56
      %p152 = pneg %p53
      %p153 = pneg %p77
      %p154 = pneg %p74
      %p155 = pneg %p103
      %p156 = pneg %p100
      %s157 = smul.u32 8, %s14
      %p158 = scmp.lt.s32.totalorder %s157, 15
      %s159 = scalar_select %p158, %s157, 15
      %s160 = smul.addr %s159, 4
      %s161 = scalar_lea.vmem %s3, %s160
      %s162 = smul.u32 8, %s14
      %p163 = scmp.lt.s32.totalorder %s162, 15
      %s164 = scalar_select %p163, %s162, 15
      %s165 = smul.addr %s164, 4
      %s166 = scalar_lea.vmem %s0, %s165
      %s167 = smul.u32 8, %s14
      %s168 = smul.u32 8, %s14
      %p169 = scmp.lt.s32.totalorder %s168, 15
      %s170 = scalar_select %p169, %s168, 15
      %s171 = smul.addr %s170, 4
      %s172 = scalar_lea.vmem %s3, %s171
      %s173 = smul.u32 8, %s14
      %v175 = vld [vmem:[%s166] sm:$0xf]
      %v176 = vld [vmem:[%s166 + $0x4] sm:$0xf]
      %v177 = vld [vmem:[%s166 + $0x8] sm:$0xf]
      %v178 = vld [vmem:[%s166 + $0xc] sm:$0xf]
      %v179 = vld [vmem:[%s166 + $0x10] sm:$0xf]
      %v180 = vld [vmem:[%s166 + $0x14] sm:$0xf]
      %v181 = vld [vmem:[%s166 + $0x18] sm:$0xf]
      %v182 = vld [vmem:[%s166 + $0x1c] sm:$0xf]
      %v183 = vld [vmem:[%s1] sm:$0xf]
      %v184 = vld [vmem:[%s1 + $0x4] sm:$0xf]
      %v185 = vld [vmem:[%s1 + $0x8] sm:$0xf]
      %v186 = vld [vmem:[%s1 + $0xc] sm:$0xf]
      %v187 = vld [vmem:[%s2] sm:$0x1]
      %v189 = vlaneseq
      %v190 = vshrl.u32 %v189, 7
      %v191 = vsub.s32 0, %v190
      %v192 = vrot.slane %v187, %v191
      %v202 = vunpack.c.l.b16 %v175
      %v203 = vunpack.c.l.b16 %v176
      %v204 = vunpack.c.l.b16 %v177
      %v205 = vunpack.c.l.b16 %v178
      %v206 = vunpack.c.l.b16 %v179
      %v207 = vunpack.c.l.b16 %v180
      %v208 = vunpack.c.l.b16 %v181
      %v209 = vunpack.c.l.b16 %v182
      %v210 = vpack.c.b16 %v203, %v202
      %v211 = vpack.c.b16 %v205, %v204
      %v212 = vpack.c.b16 %v207, %v206
      %v213 = vpack.c.b16 %v209, %v208
      %v218 = vunpack.c.l.b16 %v183
      %v219 = vunpack.c.l.b16 %v184
      %v220 = vunpack.c.l.b16 %v185
      %v221 = vunpack.c.l.b16 %v186
      %v222 = vpack.c.b16 %v219, %v218
      %v223 = vpack.c.b16 %v221, %v220
      %vm226 = vcmask 261120
      %v228 = vsel %vm226, %v210, 0
      %v231 = vsel %vm226, %v211, 0
      %v234 = vsel %vm226, %v212, 0
      %v237 = vsel %vm226, %v213, 0
      %239 = vmatprep.subr.bf16.mxu0 0
      %240 = vmatpush1.bf16.msra.mxu0 0
      %241 = vmatprep.subr.bf16.mxu0 0
      %242 = vmatpush1.bf16.msra.mxu0 0
      %243 = vmatprep.subr.bf16.mxu0 0
      %244 = vmatpush1.bf16.msra.mxu0 0
      %245 = vmatprep.subr.bf16.mxu0 0
      %246 = vmatpush1.bf16.msra.mxu0 0
      %247 = vmatprep.subr.bf16.mxu0 0
      %248 = vmatpush1.bf16.msra.mxu0 0
      %249 = vmatprep.subr.bf16.mxu0 0
      %250 = vmatpush1.bf16.msra.mxu0 0
      %251 = vmatprep.subr.bf16.mxu0 0
      %252 = vmatpush1.bf16.msra.mxu0 %v223
      %253 = vmatprep.subr.bf16.mxu0 0
      %254 = vmatpush1.bf16.msra.mxu0 %v222
      %255 = vmatprep.subr.bf16.mxu0 0
      %256 = vmatpush2.bf16.msra.mxu0 0
      %257 = vmatprep.subr.bf16.mxu0 0
      %258 = vmatpush2.bf16.msra.mxu0 0
      %259 = vmatprep.subr.bf16.mxu0 0
      %260 = vmatpush2.bf16.msra.mxu0 0
      %261 = vmatprep.subr.bf16.mxu0 0
      %262 = vmatpush2.bf16.msra.mxu0 0
      %263 = vmatprep.subr.bf16.mxu0 0
      %264 = vmatpush2.bf16.msra.mxu0 0
      %265 = vmatprep.subr.bf16.mxu0 0
      %266 = vmatpush2.bf16.msra.mxu0 0
      %267 = vmatprep.subr.bf16.mxu0 0
      %268 = vmatpush2.bf16.msra.mxu0 0
      %269 = vmatprep.subr.bf16.mxu0 0
      %270 = vmatpush2.bf16.msra.mxu0 0
      %271 = vmatprep.mubr.bf16.mxu0 0
      %272 = vmatmul.mubr.bf16.gmra.mxu0 %v228
      %v273 = vpop.f32.mrf.mxu0
      %v274 = vadd.f32 %v192, %v273
      %v275 = vpop.f32.mrf.mxu0
      %v276 = vpop.f32.mrf.mxu0
      %v277 = vadd.f32 %v192, %v276
      %v278 = vpop.f32.mrf.mxu0
      %279 = vmatprep.mubr.bf16.mxu0 0
      %280 = vmatmul.mubr.bf16.gmra.mxu0 %v231
      %v281 = vpop.f32.mrf.mxu0
      %v282 = vadd.f32 %v192, %v281
      %v283 = vpop.f32.mrf.mxu0
      %v284 = vpop.f32.mrf.mxu0
      %v285 = vadd.f32 %v192, %v284
      %v286 = vpop.f32.mrf.mxu0
      %287 = vmatprep.mubr.bf16.mxu0 0
      %288 = vmatmul.mubr.bf16.gmra.mxu0 %v234
      %v289 = vpop.f32.mrf.mxu0
      %v290 = vadd.f32 %v192, %v289
      %v291 = vpop.f32.mrf.mxu0
      %v292 = vpop.f32.mrf.mxu0
      %v293 = vadd.f32 %v192, %v292
      %v294 = vpop.f32.mrf.mxu0
      %295 = vmatprep.mubr.bf16.mxu0 0
      %296 = vmatmul.mubr.bf16.gmra.mxu0 %v237
      %v297 = vpop.f32.mrf.mxu0
      %v298 = vadd.f32 %v192, %v297
      %v299 = vpop.f32.mrf.mxu0
      %v300 = vpop.f32.mrf.mxu0
      %v301 = vadd.f32 %v192, %v300
      %v302 = vpop.f32.mrf.mxu0
      %303 = vdwg.mxu0
      %v304 = vmax.f32 %v274, 0.0
      %v305 = vmax.f32 %v277, 0.0
      %v306 = vmax.f32 %v282, 0.0
      %v307 = vmax.f32 %v285, 0.0
      %v308 = vmax.f32 %v290, 0.0
      %v309 = vmax.f32 %v293, 0.0
      %v310 = vmax.f32 %v298, 0.0
      %v311 = vmax.f32 %v301, 0.0
      %v312 = vpack.c.bf16 %v305, %v304
      %v313 = vpack.c.bf16 %v307, %v306
      %v314 = vpack.c.bf16 %v309, %v308
      %v315 = vpack.c.bf16 %v311, %v310
      %v320 = vunpack.c.l.b16 %v312
      %v321 = vunpack.c.h.b16 %v312
      %v322 = vunpack.c.l.b16 %v313
      %v323 = vunpack.c.h.b16 %v313
      %v324 = vunpack.c.l.b16 %v314
      %v325 = vunpack.c.h.b16 %v314
      %v326 = vunpack.c.l.b16 %v315
      %v327 = vunpack.c.h.b16 %v315
      %v328 = vpack.c.b16 %v320, %v320
      %v329 = vpack.c.b16 %v321, %v321
      %v330 = vpack.c.b16 %v322, %v322
      %v331 = vpack.c.b16 %v323, %v323
      %v332 = vpack.c.b16 %v324, %v324
      %v333 = vpack.c.b16 %v325, %v325
      %v334 = vpack.c.b16 %v326, %v326
      %v335 = vpack.c.b16 %v327, %v327
      %344 = vst [vmem:[%s172] sm:$0xf] %v328
      %345 = vst [vmem:[%s172 + $0x4] sm:$0xf] %v329
      %346 = vst [vmem:[%s172 + $0x8] sm:$0xf] %v330
      %347 = vst [vmem:[%s172 + $0xc] sm:$0xf] %v331
      %348 = vst [vmem:[%s172 + $0x10] sm:$0xf] %v332
      %349 = vst [vmem:[%s172 + $0x14] sm:$0xf] %v333
      %350 = vst [vmem:[%s172 + $0x18] sm:$0xf] %v334
      %351 = vst [vmem:[%s172 + $0x1c] sm:$0xf] %v335
      %s352 = smul.u32 8, %s14
      %p353 = scmp.lt.s32.totalorder %s352, 15
      %s354 = scalar_select %p353, %s352, 15
      %s355 = smul.addr %s354, 4
      %s356 = scalar_lea.vmem %s3, %s355
      // Predicated region
      $region33: #{efficientnet_features_forward.9} parent=31 // pred_check
        %p357 = pneg %p100
      $region34: #{efficientnet_features_forward.9} parent=31 // pred_check_branch
        %359 = sbr.rel (%p357) target = $region36
      $region35: #{efficientnet_features_forward.9} parent=31 // pred_region
        %s360 = smul.u32 8, %s14
      $region36: #{efficientnet_features_forward.9} parent=31 // pred_fallthru
        _
    $region32: #{efficientnet_features_forward.9} parent=5 // pred_fallthru
      _
    %p361 = scmp.le.s32.totalorder 2, %s9
    // Predicated region
    $region37: #{efficientnet_features_forward.9} parent=5 // pred_check
      %p362 = pneg %p361
    $region38: #{efficientnet_features_forward.9} parent=5 // pred_check_branch
      %364 = sbr.rel (%p362) target = $region40
    $region39: #{efficientnet_features_forward.9} parent=5 // pred_region
      %s365 = ssub.s32 %s9, 2
      // Predicated region
      $region41: #{efficientnet_features_forward.9} parent=39 // pred_check
        %p366 = pneg %p106
      $region42: #{efficientnet_features_forward.9} parent=39 // pred_check_branch
        %368 = sbr.rel (%p366) target = $region44
      $region43: #{efficientnet_features_forward.9} parent=39 // pred_region
        %s369 = smul.u32 8, %s15
        %p370 = scmp.lt.s32.totalorder %s369, 15
        %s371 = scalar_select %p370, %s369, 15
        %s372 = smul.addr %s371, 4
        %s373 = scalar_lea.vmem %s3, %s372
      $region44: #{efficientnet_features_forward.9} parent=39 // pred_fallthru
        _
    $region40: #{efficientnet_features_forward.9} parent=5 // pred_fallthru
      _
  $region6: #{efficientnet_features_forward.9} parent=0 // loop_footer
    %s13 = sadd.s32 1, %s9
  $region7: #{efficientnet_features_forward.9} parent=0 // loop_footer_branch
    %8 = sbr.rel target = $region3
  $region8: #{efficientnet_features_forward.9} parent=0 // loop_exit
    _

// kernel: efficientnet_features_forward.11
$region0: #{efficientnet_features_forward.11}
  #allocation0 [shape = 'u32[]', space=smem, size = 0x4, offset = 0x4, fixed_abs, tag = 'smem constant byte address 0x4 - core index']
  #allocation1 [shape = 'u32[144,128]{1,0:T(1,128)}', space=vmem, size = 0x12000, scoped, tag = 'internal scratch']
  %s0 = inlined_call_operand.vmem [shape: bf16[128,128], index: 0, kind: input, shape index: {}]
  %s1 = inlined_call_operand.vmem [shape: bf16[128,128], index: 1, kind: input, shape index: {}]
  %s2 = inlined_call_operand.vmem [shape: f32[1,128], index: 2, kind: input, shape index: {}]
  %s3 = inlined_call_operand.vmem [shape: bf16[128,128], index: 3, kind: output, shape index: {}]
  %s4 = sld [smem:[#allocation0]]
  $region45: #{efficientnet_features_forward.11} parent=0
    _
  %s6 = ssub.s32 1, %s4
  %s7 = scalar_select 0, %s6, %s4
  loop: start=0, step=1, limit=4
  $region2: #{efficientnet_features_forward.11} parent=0 // loop_pre_header
    _
  $region3: #{efficientnet_features_forward.11} parent=0 // loop_header
    %s9 = sphi 0, %s13
    %p10 = scmp.ge.s32.totalorder %s9, 4
    %s19 = sphi 0, %s21
    %s22 = sphi 0, %s19
    %s23 = sphi 0, %s22
    %s39 = sphi 0, %s23
    %s43 = sphi 0, %s43
    %s45 = sphi 0, %s43
    %s46 = sphi 0, %s45
    %s60 = sphi 0, %s46
    %s64 = sphi 0, %s64
    %s66 = sphi 0, %s64
    %s67 = sphi 0, %s66
    %s81 = sphi 0, %s67
    %s87 = sphi 0, %s89
    %s90 = sphi 0, %s87
    %s91 = sphi 0, %s90
    %s107 = sphi 0, %s91
  $region4: #{efficientnet_features_forward.11} parent=0 // loop_header_branch
    %12 = sbr.rel (%p10) target = $region8
  $region5: #{efficientnet_features_forward.11} parent=0 // loop_body
    %s14 = ssub.s32 %s9, 1
    %s15 = ssub.s32 %s9, 2
    %s16 = sadd.s32 %s9, 1
    %s17 = ssub.s32 %s9, %s16
    %p18 = scmp.eq.s32.totalorder %s17, 0
    %s20 = sadd.s32 %s19, 1
    %s21 = scalar_select %p18, %s19, %s20
    %p24 = pneg %p18
    %p25 = scmp.eq.s32.totalorder %s9, 1
    %p26 = por %p24, %p25
    %p27 = scmp.ne.s32.totalorder %s19, %s22
    %p28 = scmp.eq.s32.totalorder %s9, 0
    %p29 = por %p27, %p28
    %p30 = scmp.ne.s32.totalorder %s19, %s22
    %p31 = scmp.eq.s32.totalorder %s14, 1
    %p32 = por %p30, %p31
    %p33 = scmp.ne.s32.totalorder %s22, %s23
    %p34 = scmp.eq.s32.totalorder %s14, 0
    %p35 = por %p33, %p34
    %p36 = scmp.ne.s32.totalorder %s22, %s23
    %p37 = scmp.eq.s32.totalorder %s15, 1
    %p38 = por %p36, %p37
    %p40 = scmp.ne.s32.totalorder %s23, %s39
    %p41 = scmp.eq.s32.totalorder %s15, 0
    %p42 = por %p40, %p41
    %s44 = sadd.s32 %s43, 1
    %p47 = scmp.eq.s32.totalorder %s9, 1
    %p48 = scmp.ne.s32.totalorder %s43, %s45
    %p49 = scmp.eq.s32.totalorder %s9, 0
    %p50 = por %p48, %p49
    %p51 = scmp.ne.s32.totalorder %s43, %s45
    %p52 = scmp.eq.s32.totalorder %s14, 1
    %p53 = por %p51, %p52
    %p54 = scmp.ne.s32.totalorder %s45, %s46
    %p55 = scmp.eq.s32.totalorder %s14, 0
    %p56 = por %p54, %p55
    %p57 = scmp.ne.s32.totalorder %s45, %s46
    %p58 = scmp.eq.s32.totalorder %s15, 1
    %p59 = por %p57, %p58
    %p61 = scmp.ne.s32.totalorder %s46, %s60
    %p62 = scmp.eq.s32.totalorder %s15, 0
    %p63 = por %p61, %p62
    %s65 = sadd.s32 %s64, 1
    %p68 = scmp.eq.s32.totalorder %s9, 1
    %p69 = scmp.ne.s32.totalorder %s64, %s66
    %p70 = scmp.eq.s32.totalorder %s9, 0
    %p71 = por %p69, %p70
    %p72 = scmp.ne.s32.totalorder %s64, %s66
    %p73 = scmp.eq.s32.totalorder %s14, 1
    %p74 = por %p72, %p73
    %p75 = scmp.ne.s32.totalorder %s66, %s67
    %p76 = scmp.eq.s32.totalorder %s14, 0
    %p77 = por %p75, %p76
    %p78 = scmp.ne.s32.totalorder %s66, %s67
    %p79 = scmp.eq.s32.totalorder %s15, 1
    %p80 = por %p78, %p79
    %p82 = scmp.ne.s32.totalorder %s67, %s81
    %p83 = scmp.eq.s32.totalorder %s15, 0
    %p84 = por %p82, %p83
    %s85 = ssub.s32 %s9, %s16
    %p86 = scmp.eq.s32.totalorder %s85, 0
    %s88 = sadd.s32 %s87, 1
    %s89 = scalar_select %p86, %s87, %s88
    %p92 = pneg %p86
    %p93 = scmp.eq.s32.totalorder %s9, 1
    %p94 = por %p92, %p93
    %p95 = scmp.ne.s32.totalorder %s87, %s90
    %p96 = scmp.eq.s32.totalorder %s9, 0
    %p97 = por %p95, %p96
    %p98 = scmp.ne.s32.totalorder %s87, %s90
    %p99 = scmp.eq.s32.totalorder %s14, 1
    %p100 = por %p98, %p99
    %p101 = scmp.ne.s32.totalorder %s90, %s91
    %p102 = scmp.eq.s32.totalorder %s14, 0
    %p103 = por %p101, %p102
    %p104 = scmp.ne.s32.totalorder %s90, %s91
    %p105 = scmp.eq.s32.totalorder %s15, 1
    %p106 = por %p104, %p105
    %p108 = scmp.ne.s32.totalorder %s91, %s107
    %p109 = scmp.eq.s32.totalorder %s15, 0
    %p110 = por %p108, %p109
    %p111 = scmp.le.s32.totalorder 1, %s9
    %p112 = scmp.lt.s32.totalorder %s9, 3
    %p113 = pnand %p111, %p112
    %p114 = pneg %p113
    // Predicated region
    $region9: #{efficientnet_features_forward.11} parent=5 // pred_check
      _
    $region10: #{efficientnet_features_forward.11} parent=5 // pred_check_branch
      %116 = sbr.rel (%p113) target = $region12
    $region11: #{efficientnet_features_forward.11} parent=5 // pred_region
      %s117 = ssub.s32 %s9, 1
      // Predicated region
      $region13: #{efficientnet_features_forward.11} parent=11 // pred_check
        %p118 = pneg %p56
      $region14: #{efficientnet_features_forward.11} parent=11 // pred_check_branch
        %120 = sbr.rel (%p118) target = $region16
      $region15: #{efficientnet_features_forward.11} parent=11 // pred_region
        _
      $region16: #{efficientnet_features_forward.11} parent=11 // pred_fallthru
        _
      // Predicated region
      $region17: #{efficientnet_features_forward.11} parent=11 // pred_check
        %p121 = pneg %p77
      $region18: #{efficientnet_features_forward.11} parent=11 // pred_check_branch
        %123 = sbr.rel (%p121) target = $region20
      $region19: #{efficientnet_features_forward.11} parent=11 // pred_region
        _
      $region20: #{efficientnet_features_forward.11} parent=11 // pred_fallthru
        _
    $region12: #{efficientnet_features_forward.11} parent=5 // pred_fallthru
      _
    %p124 = scmp.lt.s32.totalorder %s9, 2
    // Predicated region
    $region21: #{efficientnet_features_forward.11} parent=5 // pred_check
      %p125 = pneg %p124
    $region22: #{efficientnet_features_forward.11} parent=5 // pred_check_branch
      %127 = sbr.rel (%p125) target = $region24
    $region23: #{efficientnet_features_forward.11} parent=5 // pred_region
      // Predicated region
      $region25: #{efficientnet_features_forward.11} parent=23 // pred_check
        %p128 = pneg %p29
      $region26: #{efficientnet_features_forward.11} parent=23 // pred_check_branch
        %130 = sbr.rel (%p128) target = $region28
      $region27: #{efficientnet_features_forward.11} parent=23 // pred_region
        %s131 = smul.u32 8, %s9
        %p132 = scmp.lt.s32.totalorder %s131, 15
        %s133 = scalar_select %p132, %s131, 15
        %s134 = smul.addr %s133, 4
        %s135 = scalar_lea.vmem %s0, %s134
        %s136 = smul.u32 8, %s9
      $region28: #{efficientnet_features_forward.11} parent=23 // pred_fallthru
        _
    $region24: #{efficientnet_features_forward.11} parent=5 // pred_fallthru
      _
    %p137 = scmp.le.s32.totalorder 1, %s9
    %p138 = scmp.lt.s32.totalorder %s9, 3
    %p139 = pnand %p137, %p138
    %p140 = pneg %p139
    // Predicated region
    $region29: #{efficientnet_features_forward.11} parent=5 // pred_check
      _
    $region30: #{efficientnet_features_forward.11} parent=5 // pred_check_branch
      %142 = sbr.rel (%p139) target = $region32
    $region31: #{efficientnet_features_forward.11} parent=5 // pred_region
      %s143 = ssub.s32 %s9, 1
      %s144 = smul.u32 8, %s14
      %p145 = scmp.lt.s32.totalorder %s144, 15
      %s146 = scalar_select %p145, %s144, 15
      %s147 = smul.addr %s146, 4
      %s148 = scalar_lea.vmem %s0, %s147
      %p149 = pneg %p35
      %p150 = pneg %p32
      %p151 = pneg %p56
      %p152 = pneg %p53
      %p153 = pneg %p77
      %p154 = pneg %p74
      %p155 = pneg %p103
      %p156 = pneg %p100
      %s157 = smul.u32 8, %s14
      %p158 = scmp.lt.s32.totalorder %s157, 15
      %s159 = scalar_select %p158, %s157, 15
      %s160 = smul.addr %s159, 4
      %s161 = scalar_lea.vmem %s3, %s160
      %s162 = smul.u32 8, %s14
      %p163 = scmp.lt.s32.totalorder %s162, 15
      %s164 = scalar_select %p163, %s162, 15
      %s165 = smul.addr %s164, 4
      %s166 = scalar_lea.vmem %s0, %s165
      %s167 = smul.u32 8, %s14
      %s168 = smul.u32 8, %s14
      %p169 = scmp.lt.s32.totalorder %s168, 15
      %s170 = scalar_select %p169, %s168, 15
      %s171 = smul.addr %s170, 4
      %s172 = scalar_lea.vmem %s3, %s171
      %s173 = smul.u32 8, %s14
      %v175 = vld [vmem:[%s166] sm:$0xf]
      %v176 = vld [vmem:[%s166 + $0x4] sm:$0xf]
      %v177 = vld [vmem:[%s166 + $0x8] sm:$0xf]
      %v178 = vld [vmem:[%s166 + $0xc] sm:$0xf]
      %v179 = vld [vmem:[%s166 + $0x10] sm:$0xf]
      %v180 = vld [vmem:[%s166 + $0x14] sm:$0xf]
      %v181 = vld [vmem:[%s166 + $0x18] sm:$0xf]
      %v182 = vld [vmem:[%s166 + $0x1c] sm:$0xf]
      %v183 = vld [vmem:[%s1] sm:$0xf]
      %v184 = vld [vmem:[%s1 + $0x4] sm:$0xf]
      %v185 = vld [vmem:[%s1 + $0x8] sm:$0xf]
      %v186 = vld [vmem:[%s1 + $0xc] sm:$0xf]
      %v187 = vld [vmem:[%s1 + $0x10] sm:$0xf]
      %v188 = vld [vmem:[%s1 + $0x14] sm:$0xf]
      %v189 = vld [vmem:[%s1 + $0x18] sm:$0xf]
      %v190 = vld [vmem:[%s1 + $0x1c] sm:$0xf]
      %v191 = vld [vmem:[%s1 + $0x20] sm:$0xf]
      %v192 = vld [vmem:[%s1 + $0x24] sm:$0xf]
      %v193 = vld [vmem:[%s1 + $0x28] sm:$0xf]
      %v194 = vld [vmem:[%s1 + $0x2c] sm:$0xf]
      %v195 = vld [vmem:[%s1 + $0x30] sm:$0xf]
      %v196 = vld [vmem:[%s1 + $0x34] sm:$0xf]
      %v197 = vld [vmem:[%s1 + $0x38] sm:$0xf]
      %v198 = vld [vmem:[%s1 + $0x3c] sm:$0xf]
      %v199 = vld [vmem:[%s2] sm:$0x1]
      %v201 = vlaneseq
      %v202 = vshrl.u32 %v201, 7
      %v203 = vsub.s32 0, %v202
      %v204 = vrot.slane %v199, %v203
      %v214 = vunpack.c.l.b16 %v175
      %v215 = vunpack.c.l.b16 %v176
      %v216 = vunpack.c.l.b16 %v177
      %v217 = vunpack.c.l.b16 %v178
      %v218 = vunpack.c.l.b16 %v179
      %v219 = vunpack.c.l.b16 %v180
      %v220 = vunpack.c.l.b16 %v181
      %v221 = vunpack.c.l.b16 %v182
      %v222 = vpack.c.b16 %v215, %v214
      %v223 = vpack.c.b16 %v217, %v216
      %v224 = vpack.c.b16 %v219, %v218
      %v225 = vpack.c.b16 %v221, %v220
      %v246 = vunpack.c.l.b16 %v183
      %v247 = vunpack.c.l.b16 %v184
      %v248 = vunpack.c.l.b16 %v185
      %v249 = vunpack.c.l.b16 %v186
      %v250 = vunpack.c.l.b16 %v187
      %v251 = vunpack.c.l.b16 %v188
      %v252 = vunpack.c.l.b16 %v189
      %v253 = vunpack.c.l.b16 %v190
      %v254 = vunpack.c.l.b16 %v191
      %v255 = vunpack.c.l.b16 %v192
      %v256 = vunpack.c.l.b16 %v193
      %v257 = vunpack.c.l.b16 %v194
      %v258 = vunpack.c.l.b16 %v195
      %v259 = vunpack.c.l.b16 %v196
      %v260 = vunpack.c.l.b16 %v197
      %v261 = vunpack.c.l.b16 %v198
      %v262 = vpack.c.b16 %v247, %v246
      %v263 = vpack.c.b16 %v249, %v248
      %v264 = vpack.c.b16 %v251, %v250
      %v265 = vpack.c.b16 %v253, %v252
      %v266 = vpack.c.b16 %v255, %v254
      %v267 = vpack.c.b16 %v257, %v256
      %v268 = vpack.c.b16 %v259, %v258
      %v269 = vpack.c.b16 %v261, %v260
      %278 = vmatprep.subr.bf16.mxu0 0
      %279 = vmatpush1.bf16.msra.mxu0 %v269
      %280 = vmatprep.subr.bf16.mxu0 0
      %281 = vmatpush1.bf16.msra.mxu0 %v268
      %282 = vmatprep.subr.bf16.mxu0 0
      %283 = vmatpush1.bf16.msra.mxu0 %v267
      %284 = vmatprep.subr.bf16.mxu0 0
      %285 = vmatpush1.bf16.msra.mxu0 %v266
      %286 = vmatprep.subr.bf16.mxu0 0
      %287 = vmatpush1.bf16.msra.mxu0 %v265
      %288 = vmatprep.subr.bf16.mxu0 0
      %289 = vmatpush1.bf16.msra.mxu0 %v264
      %290 = vmatprep.subr.bf16.mxu0 0
      %291 = vmatpush1.bf16.msra.mxu0 %v263
      %292 = vmatprep.subr.bf16.mxu0 0
      %293 = vmatpush1.bf16.msra.mxu0 %v262
      %294 = vmatprep.subr.bf16.mxu0 0
      %295 = vmatpush2.bf16.msra.mxu0 0
      %296 = vmatprep.subr.bf16.mxu0 0
      %297 = vmatpush2.bf16.msra.mxu0 0
      %298 = vmatprep.subr.bf16.mxu0 0
      %299 = vmatpush2.bf16.msra.mxu0 0
      %300 = vmatprep.subr.bf16.mxu0 0
      %301 = vmatpush2.bf16.msra.mxu0 0
      %302 = vmatprep.subr.bf16.mxu0 0
      %303 = vmatpush2.bf16.msra.mxu0 0
      %304 = vmatprep.subr.bf16.mxu0 0
      %305 = vmatpush2.bf16.msra.mxu0 0
      %306 = vmatprep.subr.bf16.mxu0 0
      %307 = vmatpush2.bf16.msra.mxu0 0
      %308 = vmatprep.subr.bf16.mxu0 0
      %309 = vmatpush2.bf16.msra.mxu0 0
      %310 = vmatprep.mubr.bf16.mxu0 0
      %311 = vmatmul.mubr.bf16.gmra.mxu0 %v222
      %v312 = vpop.f32.mrf.mxu0
      %v313 = vadd.f32 %v204, %v312
      %v314 = vpop.f32.mrf.mxu0
      %v315 = vpop.f32.mrf.mxu0
      %v316 = vadd.f32 %v204, %v315
      %v317 = vpop.f32.mrf.mxu0
      %318 = vmatprep.mubr.bf16.mxu0 0
      %319 = vmatmul.mubr.bf16.gmra.mxu0 %v223
      %v320 = vpop.f32.mrf.mxu0
      %v321 = vadd.f32 %v204, %v320
      %v322 = vpop.f32.mrf.mxu0
      %v323 = vpop.f32.mrf.mxu0
      %v324 = vadd.f32 %v204, %v323
      %v325 = vpop.f32.mrf.mxu0
      %326 = vmatprep.mubr.bf16.mxu0 0
      %327 = vmatmul.mubr.bf16.gmra.mxu0 %v224
      %v328 = vpop.f32.mrf.mxu0
      %v329 = vadd.f32 %v204, %v328
      %v330 = vpop.f32.mrf.mxu0
      %v331 = vpop.f32.mrf.mxu0
      %v332 = vadd.f32 %v204, %v331
      %v333 = vpop.f32.mrf.mxu0
      %334 = vmatprep.mubr.bf16.mxu0 0
      %335 = vmatmul.mubr.bf16.gmra.mxu0 %v225
      %v336 = vpop.f32.mrf.mxu0
      %v337 = vadd.f32 %v204, %v336
      %v338 = vpop.f32.mrf.mxu0
      %v339 = vpop.f32.mrf.mxu0
      %v340 = vadd.f32 %v204, %v339
      %v341 = vpop.f32.mrf.mxu0
      %342 = vdwg.mxu0
      %v343 = vpack.c.bf16 %v316, %v313
      %v344 = vpack.c.bf16 %v324, %v321
      %v345 = vpack.c.bf16 %v332, %v329
      %v346 = vpack.c.bf16 %v340, %v337
      %v351 = vunpack.c.l.b16 %v343
      %v352 = vunpack.c.h.b16 %v343
      %v353 = vunpack.c.l.b16 %v344
      %v354 = vunpack.c.h.b16 %v344
      %v355 = vunpack.c.l.b16 %v345
      %v356 = vunpack.c.h.b16 %v345
      %v357 = vunpack.c.l.b16 %v346
      %v358 = vunpack.c.h.b16 %v346
      %v359 = vpack.c.b16 %v351, %v351
      %v360 = vpack.c.b16 %v352, %v352
      %v361 = vpack.c.b16 %v353, %v353
      %v362 = vpack.c.b16 %v354, %v354
      %v363 = vpack.c.b16 %v355, %v355
      %v364 = vpack.c.b16 %v356, %v356
      %v365 = vpack.c.b16 %v357, %v357
      %v366 = vpack.c.b16 %v358, %v358
      %375 = vst [vmem:[%s172] sm:$0xf] %v359
      %376 = vst [vmem:[%s172 + $0x4] sm:$0xf] %v360
      %377 = vst [vmem:[%s172 + $0x8] sm:$0xf] %v361
      %378 = vst [vmem:[%s172 + $0xc] sm:$0xf] %v362
      %379 = vst [vmem:[%s172 + $0x10] sm:$0xf] %v363
      %380 = vst [vmem:[%s172 + $0x14] sm:$0xf] %v364
      %381 = vst [vmem:[%s172 + $0x18] sm:$0xf] %v365
      %382 = vst [vmem:[%s172 + $0x1c] sm:$0xf] %v366
      %s383 = smul.u32 8, %s14
      %p384 = scmp.lt.s32.totalorder %s383, 15
      %s385 = scalar_select %p384, %s383, 15
      %s386 = smul.addr %s385, 4
      %s387 = scalar_lea.vmem %s3, %s386
      // Predicated region
      $region33: #{efficientnet_features_forward.11} parent=31 // pred_check
        %p388 = pneg %p100
      $region34: #{efficientnet_features_forward.11} parent=31 // pred_check_branch
        %390 = sbr.rel (%p388) target = $region36
      $region35: #{efficientnet_features_forward.11} parent=31 // pred_region
        %s391 = smul.u32 8, %s14
      $region36: #{efficientnet_features_forward.11} parent=31 // pred_fallthru
        _
    $region32: #{efficientnet_features_forward.11} parent=5 // pred_fallthru
      _
    %p392 = scmp.le.s32.totalorder 2, %s9
    // Predicated region
    $region37: #{efficientnet_features_forward.11} parent=5 // pred_check
      %p393 = pneg %p392
    $region38: #{efficientnet_features_forward.11} parent=5 // pred_check_branch
      %395 = sbr.rel (%p393) target = $region40
    $region39: #{efficientnet_features_forward.11} parent=5 // pred_region
      %s396 = ssub.s32 %s9, 2
      // Predicated region
      $region41: #{efficientnet_features_forward.11} parent=39 // pred_check
        %p397 = pneg %p106
      $region42: #{efficientnet_features_forward.11} parent=39 // pred_check_branch
        %399 = sbr.rel (%p397) target = $region44
      $region43: #{efficientnet_features_forward.11} parent=39 // pred_region
        %s400 = smul.u32 8, %s15
        %p401 = scmp.lt.s32.totalorder %s400, 15
        %s402 = scalar_select %p401, %s400, 15
        %s403 = smul.addr %s402, 4
        %s404 = scalar_lea.vmem %s3, %s403
      $region44: #{efficientnet_features_forward.11} parent=39 // pred_fallthru
        _
    $region40: #{efficientnet_features_forward.11} parent=5 // pred_fallthru
      _
  $region6: #{efficientnet_features_forward.11} parent=0 // loop_footer
    %s13 = sadd.s32 1, %s9
  $region7: #{efficientnet_features_forward.11} parent=0 // loop_footer_branch
    %8 = sbr.rel target = $region3
  $region8: #{efficientnet_features_forward.11} parent=0 // loop_exit
    _

// kernel: efficientnet_features_forward.10
$region0: #{efficientnet_features_forward.10}
  #allocation0 [shape = 'u32[]', space=smem, size = 0x4, offset = 0x4, fixed_abs, tag = 'smem constant byte address 0x4 - core index']
  #allocation1 [shape = 'u32[144,128]{1,0:T(1,128)}', space=vmem, size = 0x12000, scoped, tag = 'internal scratch']
  %s0 = inlined_call_operand.vmem [shape: bf16[1,2,10,10,128], index: 0, kind: input, shape index: {}]
  %s1 = inlined_call_operand.vmem [shape: f32[9,1,128], index: 1, kind: input, shape index: {}]
  %s2 = inlined_call_operand.vmem [shape: f32[1,128], index: 2, kind: input, shape index: {}]
  %s3 = inlined_call_operand.vmem [shape: f32[128,128], index: 3, kind: input, shape index: {}]
  %s4 = inlined_call_operand.vmem [shape: f32[1,128], index: 4, kind: input, shape index: {}]
  %s5 = inlined_call_operand.vmem [shape: f32[128,128], index: 5, kind: input, shape index: {}]
  %s6 = inlined_call_operand.vmem [shape: f32[1,128], index: 6, kind: input, shape index: {}]
  %s7 = inlined_call_operand.vmem [shape: bf16[2,8,8,128], index: 7, kind: output, shape index: {}]
  %s8 = sld [smem:[#allocation0]]
  $region61: #{efficientnet_features_forward.10} parent=0
    _
  %s10 = ssub.s32 1, %s8
  %s11 = scalar_select 0, %s10, %s8
  loop: start=0, step=1, limit=4
  $region2: #{efficientnet_features_forward.10} parent=0 // loop_pre_header
    _
  $region3: #{efficientnet_features_forward.10} parent=0 // loop_header
    %s13 = sphi 0, %s17
    %p14 = scmp.ge.s32.totalorder %s13, 4
    %s23 = sphi 0, %s25
    %s26 = sphi 0, %s23
    %s27 = sphi 0, %s26
    %s43 = sphi 0, %s27
    %s47 = sphi 0, %s47
    %s49 = sphi 0, %s47
    %s50 = sphi 0, %s49
    %s64 = sphi 0, %s50
    %s68 = sphi 0, %s68
    %s70 = sphi 0, %s68
    %s71 = sphi 0, %s70
    %s85 = sphi 0, %s71
    %s89 = sphi 0, %s89
    %s91 = sphi 0, %s89
    %s92 = sphi 0, %s91
    %s106 = sphi 0, %s92
    %s110 = sphi 0, %s110
    %s112 = sphi 0, %s110
    %s113 = sphi 0, %s112
    %s127 = sphi 0, %s113
    %s131 = sphi 0, %s131
    %s133 = sphi 0, %s131
    %s134 = sphi 0, %s133
    %s148 = sphi 0, %s134
    %s152 = sphi 0, %s152
    %s154 = sphi 0, %s152
    %s155 = sphi 0, %s154
    %s169 = sphi 0, %s155
    %s175 = sphi 0, %s177
    %s178 = sphi 0, %s175
    %s179 = sphi 0, %s178
    %s195 = sphi 0, %s179
  $region4: #{efficientnet_features_forward.10} parent=0 // loop_header_branch
    %16 = sbr.rel (%p14) target = $region8
  $region5: #{efficientnet_features_forward.10} parent=0 // loop_body
    %s18 = ssub.s32 %s13, 1
    %s19 = ssub.s32 %s13, 2
    %s20 = sadd.s32 %s13, 1
    %s21 = ssub.s32 %s13, %s20
    %p22 = scmp.eq.s32.totalorder %s21, 0
    %s24 = sadd.s32 %s23, 1
    %s25 = scalar_select %p22, %s23, %s24
    %p28 = pneg %p22
    %p29 = scmp.eq.s32.totalorder %s13, 1
    %p30 = por %p28, %p29
    %p31 = scmp.ne.s32.totalorder %s23, %s26
    %p32 = scmp.eq.s32.totalorder %s13, 0
    %p33 = por %p31, %p32
    %p34 = scmp.ne.s32.totalorder %s23, %s26
    %p35 = scmp.eq.s32.totalorder %s18, 1
    %p36 = por %p34, %p35
    %p37 = scmp.ne.s32.totalorder %s26, %s27
    %p38 = scmp.eq.s32.totalorder %s18, 0
    %p39 = por %p37, %p38
    %p40 = scmp.ne.s32.totalorder %s26, %s27
    %p41 = scmp.eq.s32.totalorder %s19, 1
    %p42 = por %p40, %p41
    %p44 = scmp.ne.s32.totalorder %s27, %s43
    %p45 = scmp.eq.s32.totalorder %s19, 0
    %p46 = por %p44, %p45
    %s48 = sadd.s32 %s47, 1
    %p51 = scmp.eq.s32.totalorder %s13, 1
    %p52 = scmp.ne.s32.totalorder %s47, %s49
    %p53 = scmp.eq.s32.totalorder %s13, 0
    %p54 = por %p52, %p53
    %p55 = scmp.ne.s32.totalorder %s47, %s49
    %p56 = scmp.eq.s32.totalorder %s18, 1
    %p57 = por %p55, %p56
    %p58 = scmp.ne.s32.totalorder %s49, %s50
    %p59 = scmp.eq.s32.totalorder %s18, 0
    %p60 = por %p58, %p59
    %p61 = scmp.ne.s32.totalorder %s49, %s50
    %p62 = scmp.eq.s32.totalorder %s19, 1
    %p63 = por %p61, %p62
    %p65 = scmp.ne.s32.totalorder %s50, %s64
    %p66 = scmp.eq.s32.totalorder %s19, 0
    %p67 = por %p65, %p66
    %s69 = sadd.s32 %s68, 1
    %p72 = scmp.eq.s32.totalorder %s13, 1
    %p73 = scmp.ne.s32.totalorder %s68, %s70
    %p74 = scmp.eq.s32.totalorder %s13, 0
    %p75 = por %p73, %p74
    %p76 = scmp.ne.s32.totalorder %s68, %s70
    %p77 = scmp.eq.s32.totalorder %s18, 1
    %p78 = por %p76, %p77
    %p79 = scmp.ne.s32.totalorder %s70, %s71
    %p80 = scmp.eq.s32.totalorder %s18, 0
    %p81 = por %p79, %p80
    %p82 = scmp.ne.s32.totalorder %s70, %s71
    %p83 = scmp.eq.s32.totalorder %s19, 1
    %p84 = por %p82, %p83
    %p86 = scmp.ne.s32.totalorder %s71, %s85
    %p87 = scmp.eq.s32.totalorder %s19, 0
    %p88 = por %p86, %p87
    %s90 = sadd.s32 %s89, 1
    %p93 = scmp.eq.s32.totalorder %s13, 1
    %p94 = scmp.ne.s32.totalorder %s89, %s91
    %p95 = scmp.eq.s32.totalorder %s13, 0
    %p96 = por %p94, %p95
    %p97 = scmp.ne.s32.totalorder %s89, %s91
    %p98 = scmp.eq.s32.totalorder %s18, 1
    %p99 = por %p97, %p98
    %p100 = scmp.ne.s32.totalorder %s91, %s92
    %p101 = scmp.eq.s32.totalorder %s18, 0
    %p102 = por %p100, %p101
    %p103 = scmp.ne.s32.totalorder %s91, %s92
    %p104 = scmp.eq.s32.totalorder %s19, 1
    %p105 = por %p103, %p104
    %p107 = scmp.ne.s32.totalorder %s92, %s106
    %p108 = scmp.eq.s32.totalorder %s19, 0
    %p109 = por %p107, %p108
    %s111 = sadd.s32 %s110, 1
    %p114 = scmp.eq.s32.totalorder %s13, 1
    %p115 = scmp.ne.s32.totalorder %s110, %s112
    %p116 = scmp.eq.s32.totalorder %s13, 0
    %p117 = por %p115, %p116
    %p118 = scmp.ne.s32.totalorder %s110, %s112
    %p119 = scmp.eq.s32.totalorder %s18, 1
    %p120 = por %p118, %p119
    %p121 = scmp.ne.s32.totalorder %s112, %s113
    %p122 = scmp.eq.s32.totalorder %s18, 0
    %p123 = por %p121, %p122
    %p124 = scmp.ne.s32.totalorder %s112, %s113
    %p125 = scmp.eq.s32.totalorder %s19, 1
    %p126 = por %p124, %p125
    %p128 = scmp.ne.s32.totalorder %s113, %s127
    %p129 = scmp.eq.s32.totalorder %s19, 0
    %p130 = por %p128, %p129
    %s132 = sadd.s32 %s131, 1
    %p135 = scmp.eq.s32.totalorder %s13, 1
    %p136 = scmp.ne.s32.totalorder %s131, %s133
    %p137 = scmp.eq.s32.totalorder %s13, 0
    %p138 = por %p136, %p137
    %p139 = scmp.ne.s32.totalorder %s131, %s133
    %p140 = scmp.eq.s32.totalorder %s18, 1
    %p141 = por %p139, %p140
    %p142 = scmp.ne.s32.totalorder %s133, %s134
    %p143 = scmp.eq.s32.totalorder %s18, 0
    %p144 = por %p142, %p143
    %p145 = scmp.ne.s32.totalorder %s133, %s134
    %p146 = scmp.eq.s32.totalorder %s19, 1
    %p147 = por %p145, %p146
    %p149 = scmp.ne.s32.totalorder %s134, %s148
    %p150 = scmp.eq.s32.totalorder %s19, 0
    %p151 = por %p149, %p150
    %s153 = sadd.s32 %s152, 1
    %p156 = scmp.eq.s32.totalorder %s13, 1
    %p157 = scmp.ne.s32.totalorder %s152, %s154
    %p158 = scmp.eq.s32.totalorder %s13, 0
    %p159 = por %p157, %p158
    %p160 = scmp.ne.s32.totalorder %s152, %s154
    %p161 = scmp.eq.s32.totalorder %s18, 1
    %p162 = por %p160, %p161
    %p163 = scmp.ne.s32.totalorder %s154, %s155
    %p164 = scmp.eq.s32.totalorder %s18, 0
    %p165 = por %p163, %p164
    %p166 = scmp.ne.s32.totalorder %s154, %s155
    %p167 = scmp.eq.s32.totalorder %s19, 1
    %p168 = por %p166, %p167
    %p170 = scmp.ne.s32.totalorder %s155, %s169
    %p171 = scmp.eq.s32.totalorder %s19, 0
    %p172 = por %p170, %p171
    %s173 = ssub.s32 %s13, %s20
    %p174 = scmp.eq.s32.totalorder %s173, 0
    %s176 = sadd.s32 %s175, 1
    %s177 = scalar_select %p174, %s175, %s176
    %p180 = pneg %p174
    %p181 = scmp.eq.s32.totalorder %s13, 1
    %p182 = por %p180, %p181
    %p183 = scmp.ne.s32.totalorder %s175, %s178
    %p184 = scmp.eq.s32.totalorder %s13, 0
    %p185 = por %p183, %p184
    %p186 = scmp.ne.s32.totalorder %s175, %s178
    %p187 = scmp.eq.s32.totalorder %s18, 1
    %p188 = por %p186, %p187
    %p189 = scmp.ne.s32.totalorder %s178, %s179
    %p190 = scmp.eq.s32.totalorder %s18, 0
    %p191 = por %p189, %p190
    %p192 = scmp.ne.s32.totalorder %s178, %s179
    %p193 = scmp.eq.s32.totalorder %s19, 1
    %p194 = por %p192, %p193
    %p196 = scmp.ne.s32.totalorder %s179, %s195
    %p197 = scmp.eq.s32.totalorder %s19, 0
    %p198 = por %p196, %p197
    %p199 = scmp.le.s32.totalorder 1, %s13
    %p200 = scmp.lt.s32.totalorder %s13, 3
    %p201 = pnand %p199, %p200
    %p202 = pneg %p201
    // Predicated region
    $region9: #{efficientnet_features_forward.10} parent=5 // pred_check
      _
    $region10: #{efficientnet_features_forward.10} parent=5 // pred_check_branch
      %204 = sbr.rel (%p201) target = $region12
    $region11: #{efficientnet_features_forward.10} parent=5 // pred_region
      %s205 = ssub.s32 %s13, 1
      // Predicated region
      $region13: #{efficientnet_features_forward.10} parent=11 // pred_check
        %p206 = pneg %p60
      $region14: #{efficientnet_features_forward.10} parent=11 // pred_check_branch
        %208 = sbr.rel (%p206) target = $region16
      $region15: #{efficientnet_features_forward.10} parent=11 // pred_region
        _
      $region16: #{efficientnet_features_forward.10} parent=11 // pred_fallthru
        _
      // Predicated region
      $region17: #{efficientnet_features_forward.10} parent=11 // pred_check
        %p209 = pneg %p81
      $region18: #{efficientnet_features_forward.10} parent=11 // pred_check_branch
        %211 = sbr.rel (%p209) target = $region20
      $region19: #{efficientnet_features_forward.10} parent=11 // pred_region
        _
      $region20: #{efficientnet_features_forward.10} parent=11 // pred_fallthru
        _
      // Predicated region
      $region21: #{efficientnet_features_forward.10} parent=11 // pred_check
        %p212 = pneg %p102
      $region22: #{efficientnet_features_forward.10} parent=11 // pred_check_branch
        %214 = sbr.rel (%p212) target = $region24
      $region23: #{efficientnet_features_forward.10} parent=11 // pred_region
        _
      $region24: #{efficientnet_features_forward.10} parent=11 // pred_fallthru
        _
      // Predicated region
      $region25: #{efficientnet_features_forward.10} parent=11 // pred_check
        %p215 = pneg %p123
      $region26: #{efficientnet_features_forward.10} parent=11 // pred_check_branch
        %217 = sbr.rel (%p215) target = $region28
      $region27: #{efficientnet_features_forward.10} parent=11 // pred_region
        _
      $region28: #{efficientnet_features_forward.10} parent=11 // pred_fallthru
        _
      // Predicated region
      $region29: #{efficientnet_features_forward.10} parent=11 // pred_check
        %p218 = pneg %p144
      $region30: #{efficientnet_features_forward.10} parent=11 // pred_check_branch
        %220 = sbr.rel (%p218) target = $region32
      $region31: #{efficientnet_features_forward.10} parent=11 // pred_region
        _
      $region32: #{efficientnet_features_forward.10} parent=11 // pred_fallthru
        _
      // Predicated region
      $region33: #{efficientnet_features_forward.10} parent=11 // pred_check
        %p221 = pneg %p165
      $region34: #{efficientnet_features_forward.10} parent=11 // pred_check_branch
        %223 = sbr.rel (%p221) target = $region36
      $region35: #{efficientnet_features_forward.10} parent=11 // pred_region
        _
      $region36: #{efficientnet_features_forward.10} parent=11 // pred_fallthru
        _
    $region12: #{efficientnet_features_forward.10} parent=5 // pred_fallthru
      _
    %p224 = scmp.lt.s32.totalorder %s13, 2
    // Predicated region
    $region37: #{efficientnet_features_forward.10} parent=5 // pred_check
      %p225 = pneg %p224
    $region38: #{efficientnet_features_forward.10} parent=5 // pred_check_branch
      %227 = sbr.rel (%p225) target = $region40
    $region39: #{efficientnet_features_forward.10} parent=5 // pred_region
      // Predicated region
      $region41: #{efficientnet_features_forward.10} parent=39 // pred_check
        %p228 = pneg %p33
      $region42: #{efficientnet_features_forward.10} parent=39 // pred_check_branch
        %230 = sbr.rel (%p228) target = $region44
      $region43: #{efficientnet_features_forward.10} parent=39 // pred_region
        %p231 = scmp.lt.s32.totalorder %s13, 1
        %s232 = scalar_select %p231, %s13, 1
        %s233 = smul.addr %s232, 20
        %s234 = smul.addr %s233, 4
        %s235 = scalar_lea.vmem %s0, %s234
      $region44: #{efficientnet_features_forward.10} parent=39 // pred_fallthru
        _
    $region40: #{efficientnet_features_forward.10} parent=5 // pred_fallthru
      _
    %p236 = scmp.le.s32.totalorder 1, %s13
    %p237 = scmp.lt.s32.totalorder %s13, 3
    %p238 = pnand %p236, %p237
    %p239 = pneg %p238
    // Predicated region
    $region45: #{efficientnet_features_forward.10} parent=5 // pred_check
      _
    $region46: #{efficientnet_features_forward.10} parent=5 // pred_check_branch
      %241 = sbr.rel (%p238) target = $region48
    $region47: #{efficientnet_features_forward.10} parent=5 // pred_region
      %s242 = ssub.s32 %s13, 1
      %p243 = scmp.lt.s32.totalorder %s18, 1
      %s244 = scalar_select %p243, %s18, 1
      %s245 = smul.addr %s244, 20
      %s246 = smul.addr %s245, 4
      %s247 = scalar_lea.vmem %s0, %s246
      %p248 = pneg %p39
      %p249 = pneg %p36
      %p250 = pneg %p60
      %p251 = pneg %p57
      %p252 = pneg %p81
      %p253 = pneg %p78
      %p254 = pneg %p102
      %p255 = pneg %p99
      %p256 = pneg %p123
      %p257 = pneg %p120
      %p258 = pneg %p144
      %p259 = pneg %p141
      %p260 = pneg %p165
      %p261 = pneg %p162
      %p262 = pneg %p191
      %p263 = pneg %p188
      %p264 = scmp.lt.s32.totalorder %s18, 1
      %s265 = scalar_select %p264, %s18, 1
      %s266 = smul.addr %s265, 8
      %s267 = smul.addr %s266, 4
      %s268 = scalar_lea.vmem %s7, %s267
      %p269 = scmp.lt.s32.totalorder %s18, 1
      %s270 = scalar_select %p269, %s18, 1
      %s271 = smul.addr %s270, 20
      %s272 = smul.addr %s271, 4
      %s273 = scalar_lea.vmem %s0, %s272
      %p274 = scmp.lt.s32.totalorder %s18, 1
      %s275 = scalar_select %p274, %s18, 1
      %s276 = smul.addr %s275, 8
      %s277 = smul.addr %s276, 4
      %s278 = scalar_lea.vmem %s7, %s277
      %v279 = vld [vmem:[%s273] sm:$0xf]
      %v280 = vld [vmem:[%s273 + $0x8] sm:$0xf]
      %v281 = vld [vmem:[%s273 + $0x10] sm:$0xf]
      %v282 = vld [vmem:[%s273 + $0x18] sm:$0xf]
      %v283 = vld [vmem:[%s273 + $0x20] sm:$0xf]
      %v284 = vld [vmem:[%s273 + $0x28] sm:$0xf]
      %v285 = vld [vmem:[%s273 + $0x30] sm:$0xf]
      %v286 = vld [vmem:[%s273 + $0x38] sm:$0xf]
      %v287 = vunpack.c.l.bf16 %v279
      %v288 = vunpack.c.l.bf16 %v280
      %v289 = vunpack.c.l.bf16 %v281
      %v290 = vunpack.c.l.bf16 %v282
      %v291 = vunpack.c.l.bf16 %v283
      %v292 = vunpack.c.l.bf16 %v284
      %v293 = vunpack.c.l.bf16 %v285
      %v294 = vunpack.c.l.bf16 %v286
      %v295 = vld [vmem:[%s1] sm:$0x1]
      %v297 = vlaneseq
      %v298 = vshrl.u32 %v297, 7
      %v299 = vsub.s32 0, %v298
      %v300 = vrot.slane %v295, %v299
      %v302 = vmul.f32 %v287, %v300
      %v303 = vmul.f32 %v288, %v300
      %v304 = vmul.f32 %v289, %v300
      %v305 = vmul.f32 %v290, %v300
      %v306 = vmul.f32 %v291, %v300
      %v307 = vmul.f32 %v292, %v300
      %v308 = vmul.f32 %v293, %v300
      %v309 = vmul.f32 %v294, %v300
      %v310 = vadd.f32 %v302, 0.0
      %v311 = vadd.f32 %v303, 0.0
      %v312 = vadd.f32 %v304, 0.0
      %v313 = vadd.f32 %v305, 0.0
      %v314 = vadd.f32 %v306, 0.0
      %v315 = vadd.f32 %v307, 0.0
      %v316 = vadd.f32 %v308, 0.0
      %v317 = vadd.f32 %v309, 0.0
      %v318 = vld [vmem:[%s273 + $0x4] sm:$0x1]
      %v319 = vld [vmem:[%s273 + $0xc] sm:$0x1]
      %v320 = vld [vmem:[%s273 + $0x14] sm:$0x1]
      %v321 = vld [vmem:[%s273 + $0x1c] sm:$0x1]
      %v322 = vld [vmem:[%s273 + $0x24] sm:$0x1]
      %v323 = vld [vmem:[%s273 + $0x2c] sm:$0x1]
      %v324 = vld [vmem:[%s273 + $0x34] sm:$0x1]
      %v325 = vld [vmem:[%s273 + $0x3c] sm:$0x1]
      %v326 = vunpack.c.l.bf16 %v318
      %v327 = vunpack.c.l.bf16 %v319
      %v328 = vunpack.c.l.bf16 %v320
      %v329 = vunpack.c.l.bf16 %v321
      %v330 = vunpack.c.l.bf16 %v322
      %v331 = vunpack.c.l.bf16 %v323
      %v332 = vunpack.c.l.bf16 %v324
      %v333 = vunpack.c.l.bf16 %v325
      %s334 = scalar_lea.vmem %s1, 1
      %v335 = vld [vmem:[%s334] sm:$0x1]
      %v337 = vlaneseq
      %v338 = vshrl.u32 %v337, 7
      %v339 = vsub.s32 0, %v338
      %v340 = vrot.slane %v335, %v339
      %v342 = vmul.f32 %v287, %v340
      %v343 = vmul.f32 %v326, %v340
      %v344 = vmul.f32 %v288, %v340
      %v345 = vmul.f32 %v327, %v340
      %v346 = vmul.f32 %v289, %v340
      %v347 = vmul.f32 %v328, %v340
      %v348 = vmul.f32 %v290, %v340
      %v349 = vmul.f32 %v329, %v340
      %v350 = vmul.f32 %v291, %v340
      %v351 = vmul.f32 %v330, %v340
      %v352 = vmul.f32 %v292, %v340
      %v353 = vmul.f32 %v331, %v340
      %v354 = vmul.f32 %v293, %v340
      %v355 = vmul.f32 %v332, %v340
      %v356 = vmul.f32 %v294, %v340
      %v357 = vmul.f32 %v333, %v340
      %vm374 = vcmask 1046528
      %v375 = vrot.slane %v342, 1
      %v376 = vrot.slane %v343, 1
      %v377 = vsel %vm374, %v375, %v376
      %v378 = vrot.slane %v344, 1
      %v379 = vrot.slane %v345, 1
      %v380 = vsel %vm374, %v378, %v379
      %v381 = vrot.slane %v346, 1
      %v382 = vrot.slane %v347, 1
      %v383 = vsel %vm374, %v381, %v382
      %v384 = vrot.slane %v348, 1
      %v385 = vrot.slane %v349, 1
      %v386 = vsel %vm374, %v384, %v385
      %v387 = vrot.slane %v350, 1
      %v388 = vrot.slane %v351, 1
      %v389 = vsel %vm374, %v387, %v388
      %v390 = vrot.slane %v352, 1
      %v391 = vrot.slane %v353, 1
      %v392 = vsel %vm374, %v390, %v391
      %v393 = vrot.slane %v354, 1
      %v394 = vrot.slane %v355, 1
      %v395 = vsel %vm374, %v393, %v394
      %v396 = vrot.slane %v356, 1
      %v397 = vrot.slane %v357, 1
      %v398 = vsel %vm374, %v396, %v397
      %v407 = vadd.f32 %v310, %v377
      %v408 = vadd.f32 %v311, %v380
      %v409 = vadd.f32 %v312, %v383
      %v410 = vadd.f32 %v313, %v386
      %v411 = vadd.f32 %v314, %v389
      %v412 = vadd.f32 %v315, %v392
      %v413 = vadd.f32 %v316, %v395
      %v414 = vadd.f32 %v317, %v398
      %v415 = vld [vmem:[%s273] sm:$0xe]
      %v416 = vld [vmem:[%s273 + $0x8] sm:$0xe]
      %v417 = vld [vmem:[%s273 + $0x10] sm:$0xe]
      %v418 = vld [vmem:[%s273 + $0x18] sm:$0xe]
      %v419 = vld [vmem:[%s273 + $0x20] sm:$0xe]
      %v420 = vld [vmem:[%s273 + $0x28] sm:$0xe]
      %v421 = vld [vmem:[%s273 + $0x30] sm:$0xe]
      %v422 = vld [vmem:[%s273 + $0x38] sm:$0xe]
      %v423 = vunpack.c.l.bf16 %v415
      %v424 = vunpack.c.l.bf16 %v416
      %v425 = vunpack.c.l.bf16 %v417
      %v426 = vunpack.c.l.bf16 %v418
      %v427 = vunpack.c.l.bf16 %v419
      %v428 = vunpack.c.l.bf16 %v420
      %v429 = vunpack.c.l.bf16 %v421
      %v430 = vunpack.c.l.bf16 %v422
      %s431 = scalar_lea.vmem %s1, 2
      %v432 = vld [vmem:[%s431] sm:$0x1]
      %v434 = vlaneseq
      %v435 = vshrl.u32 %v434, 7
      %v436 = vsub.s32 0, %v435
      %v437 = vrot.slane %v432, %v436
      %v439 = vmul.f32 %v423, %v437
      %v440 = vmul.f32 %v326, %v437
      %v441 = vmul.f32 %v424, %v437
      %v442 = vmul.f32 %v327, %v437
      %v443 = vmul.f32 %v425, %v437
      %v444 = vmul.f32 %v328, %v437
      %v445 = vmul.f32 %v426, %v437
      %v446 = vmul.f32 %v329, %v437
      %v447 = vmul.f32 %v427, %v437
      %v448 = vmul.f32 %v330, %v437
      %v449 = vmul.f32 %v428, %v437
      %v450 = vmul.f32 %v331, %v437
      %v451 = vmul.f32 %v429, %v437
      %v452 = vmul.f32 %v332, %v437
      %v453 = vmul.f32 %v430, %v437
      %v454 = vmul.f32 %v333, %v437
      %vm471 = vcmask 1045504
      %v472 = vrot.slane %v439, 2
      %v473 = vrot.slane %v440, 2
      %v474 = vsel %vm471, %v472, %v473
      %v475 = vrot.slane %v441, 2
      %v476 = vrot.slane %v442, 2
      %v477 = vsel %vm471, %v475, %v476
      %v478 = vrot.slane %v443, 2
      %v479 = vrot.slane %v444, 2
      %v480 = vsel %vm471, %v478, %v479
      %v481 = vrot.slane %v445, 2
      %v482 = vrot.slane %v446, 2
      %v483 = vsel %vm471, %v481, %v482
      %v484 = vrot.slane %v447, 2
      %v485 = vrot.slane %v448, 2
      %v486 = vsel %vm471, %v484, %v485
      %v487 = vrot.slane %v449, 2
      %v488 = vrot.slane %v450, 2
      %v489 = vsel %vm471, %v487, %v488
      %v490 = vrot.slane %v451, 2
      %v491 = vrot.slane %v452, 2
      %v492 = vsel %vm471, %v490, %v491
      %v493 = vrot.slane %v453, 2
      %v494 = vrot.slane %v454, 2
      %v495 = vsel %vm471, %v493, %v494
      %v504 = vadd.f32 %v407, %v474
      %v505 = vadd.f32 %v408, %v477
      %v506 = vadd.f32 %v409, %v480
      %v507 = vadd.f32 %v410, %v483
      %v508 = vadd.f32 %v411, %v486
      %v509 = vadd.f32 %v412, %v489
      %v510 = vadd.f32 %v413, %v492
      %v511 = vadd.f32 %v414, %v495
      %s512 = scalar_lea.vmem %s273, 8
      %v513 = vld [vmem:[%s512] sm:$0xf]
      %v514 = vld [vmem:[%s512 + $0x8] sm:$0xf]
      %v515 = vld [vmem:[%s512 + $0x10] sm:$0xf]
      %v516 = vld [vmem:[%s512 + $0x18] sm:$0xf]
      %v517 = vld [vmem:[%s512 + $0x20] sm:$0xf]
      %v518 = vld [vmem:[%s512 + $0x28] sm:$0xf]
      %v519 = vld [vmem:[%s512 + $0x30] sm:$0xf]
      %v520 = vld [vmem:[%s512 + $0x38] sm:$0xf]
      %v521 = vunpack.c.l.bf16 %v513
      %v522 = vunpack.c.l.bf16 %v514
      %v523 = vunpack.c.l.bf16 %v515
      %v524 = vunpack.c.l.bf16 %v516
      %v525 = vunpack.c.l.bf16 %v517
      %v526 = vunpack.c.l.bf16 %v518
      %v527 = vunpack.c.l.bf16 %v519
      %v528 = vunpack.c.l.bf16 %v520
      %s529 = scalar_lea.vmem %s1, 3
      %v530 = vld [vmem:[%s529] sm:$0x1]
      %v532 = vlaneseq
      %v533 = vshrl.u32 %v532, 7
      %v534 = vsub.s32 0, %v533
      %v535 = vrot.slane %v530, %v534
      %v537 = vmul.f32 %v521, %v535
      %v538 = vmul.f32 %v522, %v535
      %v539 = vmul.f32 %v523, %v535
      %v540 = vmul.f32 %v524, %v535
      %v541 = vmul.f32 %v525, %v535
      %v542 = vmul.f32 %v526, %v535
      %v543 = vmul.f32 %v527, %v535
      %v544 = vmul.f32 %v528, %v535
      %v545 = vadd.f32 %v504, %v537
      %v546 = vadd.f32 %v505, %v538
      %v547 = vadd.f32 %v506, %v539
      %v548 = vadd.f32 %v507, %v540
      %v549 = vadd.f32 %v508, %v541
      %v550 = vadd.f32 %v509, %v542
      %v551 = vadd.f32 %v510, %v543
      %v552 = vadd.f32 %v511, %v544
      %v553 = vld [vmem:[%s512 + $0x4] sm:$0x1]
      %v554 = vld [vmem:[%s512 + $0xc] sm:$0x1]
      %v555 = vld [vmem:[%s512 + $0x14] sm:$0x1]
      %v556 = vld [vmem:[%s512 + $0x1c] sm:$0x1]
      %v557 = vld [vmem:[%s512 + $0x24] sm:$0x1]
      %v558 = vld [vmem:[%s512 + $0x2c] sm:$0x1]
      %v559 = vld [vmem:[%s512 + $0x34] sm:$0x1]
      %v560 = vld [vmem:[%s512 + $0x3c] sm:$0x1]
      %v561 = vunpack.c.l.bf16 %v553
      %v562 = vunpack.c.l.bf16 %v554
      %v563 = vunpack.c.l.bf16 %v555
      %v564 = vunpack.c.l.bf16 %v556
      %v565 = vunpack.c.l.bf16 %v557
      %v566 = vunpack.c.l.bf16 %v558
      %v567 = vunpack.c.l.bf16 %v559
      %v568 = vunpack.c.l.bf16 %v560
      %s569 = scalar_lea.vmem %s1, 4
      %v570 = vld [vmem:[%s569] sm:$0x1]
      %v572 = vlaneseq
      %v573 = vshrl.u32 %v572, 7
      %v574 = vsub.s32 0, %v573
      %v575 = vrot.slane %v570, %v574
      %v577 = vmul.f32 %v521, %v575
      %v578 = vmul.f32 %v561, %v575
      %v579 = vmul.f32 %v522, %v575
      %v580 = vmul.f32 %v562, %v575
      %v581 = vmul.f32 %v523, %v575
      %v582 = vmul.f32 %v563, %v575
      %v583 = vmul.f32 %v524, %v575
      %v584 = vmul.f32 %v564, %v575
      %v585 = vmul.f32 %v525, %v575
      %v586 = vmul.f32 %v565, %v575
      %v587 = vmul.f32 %v526, %v575
      %v588 = vmul.f32 %v566, %v575
      %v589 = vmul.f32 %v527, %v575
      %v590 = vmul.f32 %v567, %v575
      %v591 = vmul.f32 %v528, %v575
      %v592 = vmul.f32 %v568, %v575
      %v609 = vrot.slane %v577, 1
      %v610 = vrot.slane %v578, 1
      %v611 = vsel %vm374, %v609, %v610
      %v612 = vrot.slane %v579, 1
      %v613 = vrot.slane %v580, 1
      %v614 = vsel %vm374, %v612, %v613
      %v615 = vrot.slane %v581, 1
      %v616 = vrot.slane %v582, 1
      %v617 = vsel %vm374, %v615, %v616
      %v618 = vrot.slane %v583, 1
      %v619 = vrot.slane %v584, 1
      %v620 = vsel %vm374, %v618, %v619
      %v621 = vrot.slane %v585, 1
      %v622 = vrot.slane %v586, 1
      %v623 = vsel %vm374, %v621, %v622
      %v624 = vrot.slane %v587, 1
      %v625 = vrot.slane %v588, 1
      %v626 = vsel %vm374, %v624, %v625
      %v627 = vrot.slane %v589, 1
      %v628 = vrot.slane %v590, 1
      %v629 = vsel %vm374, %v627, %v628
      %v630 = vrot.slane %v591, 1
      %v631 = vrot.slane %v592, 1
      %v632 = vsel %vm374, %v630, %v631
      %v641 = vadd.f32 %v545, %v611
      %v642 = vadd.f32 %v546, %v614
      %v643 = vadd.f32 %v547, %v617
      %v644 = vadd.f32 %v548, %v620
      %v645 = vadd.f32 %v549, %v623
      %v646 = vadd.f32 %v550, %v626
      %v647 = vadd.f32 %v551, %v629
      %v648 = vadd.f32 %v552, %v632
      %v649 = vld [vmem:[%s512] sm:$0xe]
      %v650 = vld [vmem:[%s512 + $0x8] sm:$0xe]
      %v651 = vld [vmem:[%s512 + $0x10] sm:$0xe]
      %v652 = vld [vmem:[%s512 + $0x18] sm:$0xe]
      %v653 = vld [vmem:[%s512 + $0x20] sm:$0xe]
      %v654 = vld [vmem:[%s512 + $0x28] sm:$0xe]
      %v655 = vld [vmem:[%s512 + $0x30] sm:$0xe]
      %v656 = vld [vmem:[%s512 + $0x38] sm:$0xe]
      %v657 = vunpack.c.l.bf16 %v649
      %v658 = vunpack.c.l.bf16 %v650
      %v659 = vunpack.c.l.bf16 %v651
      %v660 = vunpack.c.l.bf16 %v652
      %v661 = vunpack.c.l.bf16 %v653
      %v662 = vunpack.c.l.bf16 %v654
      %v663 = vunpack.c.l.bf16 %v655
      %v664 = vunpack.c.l.bf16 %v656
      %s665 = scalar_lea.vmem %s1, 5
      %v666 = vld [vmem:[%s665] sm:$0x1]
      %v668 = vlaneseq
      %v669 = vshrl.u32 %v668, 7
      %v670 = vsub.s32 0, %v669
      %v671 = vrot.slane %v666, %v670
      %v673 = vmul.f32 %v657, %v671
      %v674 = vmul.f32 %v561, %v671
      %v675 = vmul.f32 %v658, %v671
      %v676 = vmul.f32 %v562, %v671
      %v677 = vmul.f32 %v659, %v671
      %v678 = vmul.f32 %v563, %v671
      %v679 = vmul.f32 %v660, %v671
      %v680 = vmul.f32 %v564, %v671
      %v681 = vmul.f32 %v661, %v671
      %v682 = vmul.f32 %v565, %v671
      %v683 = vmul.f32 %v662, %v671
      %v684 = vmul.f32 %v566, %v671
      %v685 = vmul.f32 %v663, %v671
      %v686 = vmul.f32 %v567, %v671
      %v687 = vmul.f32 %v664, %v671
      %v688 = vmul.f32 %v568, %v671
      %v705 = vrot.slane %v673, 2
      %v706 = vrot.slane %v674, 2
      %v707 = vsel %vm471, %v705, %v706
      %v708 = vrot.slane %v675, 2
      %v709 = vrot.slane %v676, 2
      %v710 = vsel %vm471, %v708, %v709
      %v711 = vrot.slane %v677, 2
      %v712 = vrot.slane %v678, 2
      %v713 = vsel %vm471, %v711, %v712
      %v714 = vrot.slane %v679, 2
      %v715 = vrot.slane %v680, 2
      %v716 = vsel %vm471, %v714, %v715
      %v717 = vrot.slane %v681, 2
      %v718 = vrot.slane %v682, 2
      %v719 = vsel %vm471, %v717, %v718
      %v720 = vrot.slane %v683, 2
      %v721 = vrot.slane %v684, 2
      %v722 = vsel %vm471, %v720, %v721
      %v723 = vrot.slane %v685, 2
      %v724 = vrot.slane %v686, 2
      %v725 = vsel %vm471, %v723, %v724
      %v726 = vrot.slane %v687, 2
      %v727 = vrot.slane %v688, 2
      %v728 = vsel %vm471, %v726, %v727
      %v737 = vadd.f32 %v641, %v707
      %v738 = vadd.f32 %v642, %v710
      %v739 = vadd.f32 %v643, %v713
      %v740 = vadd.f32 %v644, %v716
      %v741 = vadd.f32 %v645, %v719
      %v742 = vadd.f32 %v646, %v722
      %v743 = vadd.f32 %v647, %v725
      %v744 = vadd.f32 %v648, %v728
      %s745 = scalar_lea.vmem %s273, 16
      %v746 = vld [vmem:[%s745] sm:$0xf]
      %v747 = vld [vmem:[%s745 + $0x8] sm:$0xf]
      %v748 = vld [vmem:[%s745 + $0x10] sm:$0xf]
      %v749 = vld [vmem:[%s745 + $0x18] sm:$0xf]
      %v750 = vld [vmem:[%s745 + $0x20] sm:$0xf]
      %v751 = vld [vmem:[%s745 + $0x28] sm:$0xf]
      %v752 = vld [vmem:[%s745 + $0x30] sm:$0xf]
      %v753 = vld [vmem:[%s745 + $0x38] sm:$0xf]
      %v754 = vunpack.c.l.bf16 %v746
      %v755 = vunpack.c.l.bf16 %v747
      %v756 = vunpack.c.l.bf16 %v748
      %v757 = vunpack.c.l.bf16 %v749
      %v758 = vunpack.c.l.bf16 %v750
      %v759 = vunpack.c.l.bf16 %v751
      %v760 = vunpack.c.l.bf16 %v752
      %v761 = vunpack.c.l.bf16 %v753
      %s762 = scalar_lea.vmem %s1, 6
      %v763 = vld [vmem:[%s762] sm:$0x1]
      %v765 = vlaneseq
      %v766 = vshrl.u32 %v765, 7
      %v767 = vsub.s32 0, %v766
      %v768 = vrot.slane %v763, %v767
      %v770 = vmul.f32 %v754, %v768
      %v771 = vmul.f32 %v755, %v768
      %v772 = vmul.f32 %v756, %v768
      %v773 = vmul.f32 %v757, %v768
      %v774 = vmul.f32 %v758, %v768
      %v775 = vmul.f32 %v759, %v768
      %v776 = vmul.f32 %v760, %v768
      %v777 = vmul.f32 %v761, %v768
      %v778 = vadd.f32 %v737, %v770
      %v779 = vadd.f32 %v738, %v771
      %v780 = vadd.f32 %v739, %v772
      %v781 = vadd.f32 %v740, %v773
      %v782 = vadd.f32 %v741, %v774
      %v783 = vadd.f32 %v742, %v775
      %v784 = vadd.f32 %v743, %v776
      %v785 = vadd.f32 %v744, %v777
      %v786 = vld [vmem:[%s745 + $0x4] sm:$0x1]
      %v787 = vld [vmem:[%s745 + $0xc] sm:$0x1]
      %v788 = vld [vmem:[%s745 + $0x14] sm:$0x1]
      %v789 = vld [vmem:[%s745 + $0x1c] sm:$0x1]
      %v790 = vld [vmem:[%s745 + $0x24] sm:$0x1]
      %v791 = vld [vmem:[%s745 + $0x2c] sm:$0x1]
      %v792 = vld [vmem:[%s745 + $0x34] sm:$0x1]
      %v793 = vld [vmem:[%s745 + $0x3c] sm:$0x1]
      %v794 = vunpack.c.l.bf16 %v786
      %v795 = vunpack.c.l.bf16 %v787
      %v796 = vunpack.c.l.bf16 %v788
      %v797 = vunpack.c.l.bf16 %v789
      %v798 = vunpack.c.l.bf16 %v790
      %v799 = vunpack.c.l.bf16 %v791
      %v800 = vunpack.c.l.bf16 %v792
      %v801 = vunpack.c.l.bf16 %v793
      %s802 = scalar_lea.vmem %s1, 7
      %v803 = vld [vmem:[%s802] sm:$0x1]
      %v805 = vlaneseq
      %v806 = vshrl.u32 %v805, 7
      %v807 = vsub.s32 0, %v806
      %v808 = vrot.slane %v803, %v807
      %v810 = vmul.f32 %v754, %v808
      %v811 = vmul.f32 %v794, %v808
      %v812 = vmul.f32 %v755, %v808
      %v813 = vmul.f32 %v795, %v808
      %v814 = vmul.f32 %v756, %v808
      %v815 = vmul.f32 %v796, %v808
      %v816 = vmul.f32 %v757, %v808
      %v817 = vmul.f32 %v797, %v808
      %v818 = vmul.f32 %v758, %v808
      %v819 = vmul.f32 %v798, %v808
      %v820 = vmul.f32 %v759, %v808
      %v821 = vmul.f32 %v799, %v808
      %v822 = vmul.f32 %v760, %v808
      %v823 = vmul.f32 %v800, %v808
      %v824 = vmul.f32 %v761, %v808
      %v825 = vmul.f32 %v801, %v808
      %v842 = vrot.slane %v810, 1
      %v843 = vrot.slane %v811, 1
      %v844 = vsel %vm374, %v842, %v843
      %v845 = vrot.slane %v812, 1
      %v846 = vrot.slane %v813, 1
      %v847 = vsel %vm374, %v845, %v846
      %v848 = vrot.slane %v814, 1
      %v849 = vrot.slane %v815, 1
      %v850 = vsel %vm374, %v848, %v849
      %v851 = vrot.slane %v816, 1
      %v852 = vrot.slane %v817, 1
      %v853 = vsel %vm374, %v851, %v852
      %v854 = vrot.slane %v818, 1
      %v855 = vrot.slane %v819, 1
      %v856 = vsel %vm374, %v854, %v855
      %v857 = vrot.slane %v820, 1
      %v858 = vrot.slane %v821, 1
      %v859 = vsel %vm374, %v857, %v858
      %v860 = vrot.slane %v822, 1
      %v861 = vrot.slane %v823, 1
      %v862 = vsel %vm374, %v860, %v861
      %v863 = vrot.slane %v824, 1
      %v864 = vrot.slane %v825, 1
      %v865 = vsel %vm374, %v863, %v864
      %v874 = vadd.f32 %v778, %v844
      %v875 = vadd.f32 %v779, %v847
      %v876 = vadd.f32 %v780, %v850
      %v877 = vadd.f32 %v781, %v853
      %v878 = vadd.f32 %v782, %v856
      %v879 = vadd.f32 %v783, %v859
      %v880 = vadd.f32 %v784, %v862
      %v881 = vadd.f32 %v785, %v865
      %v882 = vld [vmem:[%s745] sm:$0xe]
      %v883 = vld [vmem:[%s745 + $0x8] sm:$0xe]
      %v884 = vld [vmem:[%s745 + $0x10] sm:$0xe]
      %v885 = vld [vmem:[%s745 + $0x18] sm:$0xe]
      %v886 = vld [vmem:[%s745 + $0x20] sm:$0xe]
      %v887 = vld [vmem:[%s745 + $0x28] sm:$0xe]
      %v888 = vld [vmem:[%s745 + $0x30] sm:$0xe]
      %v889 = vld [vmem:[%s745 + $0x38] sm:$0xe]
      %v890 = vunpack.c.l.bf16 %v882
      %v891 = vunpack.c.l.bf16 %v883
      %v892 = vunpack.c.l.bf16 %v884
      %v893 = vunpack.c.l.bf16 %v885
      %v894 = vunpack.c.l.bf16 %v886
      %v895 = vunpack.c.l.bf16 %v887
      %v896 = vunpack.c.l.bf16 %v888
      %v897 = vunpack.c.l.bf16 %v889
      %s898 = scalar_lea.vmem %s1, 8
      %v899 = vld [vmem:[%s898] sm:$0x1]
      %v901 = vlaneseq
      %v902 = vshrl.u32 %v901, 7
      %v903 = vsub.s32 0, %v902
      %v904 = vrot.slane %v899, %v903
      %v906 = vmul.f32 %v890, %v904
      %v907 = vmul.f32 %v794, %v904
      %v908 = vmul.f32 %v891, %v904
      %v909 = vmul.f32 %v795, %v904
      %v910 = vmul.f32 %v892, %v904
      %v911 = vmul.f32 %v796, %v904
      %v912 = vmul.f32 %v893, %v904
      %v913 = vmul.f32 %v797, %v904
      %v914 = vmul.f32 %v894, %v904
      %v915 = vmul.f32 %v798, %v904
      %v916 = vmul.f32 %v895, %v904
      %v917 = vmul.f32 %v799, %v904
      %v918 = vmul.f32 %v896, %v904
      %v919 = vmul.f32 %v800, %v904
      %v920 = vmul.f32 %v897, %v904
      %v921 = vmul.f32 %v801, %v904
      %v938 = vrot.slane %v906, 2
      %v939 = vrot.slane %v907, 2
      %v940 = vsel %vm471, %v938, %v939
      %v941 = vrot.slane %v908, 2
      %v942 = vrot.slane %v909, 2
      %v943 = vsel %vm471, %v941, %v942
      %v944 = vrot.slane %v910, 2
      %v945 = vrot.slane %v911, 2
      %v946 = vsel %vm471, %v944, %v945
      %v947 = vrot.slane %v912, 2
      %v948 = vrot.slane %v913, 2
      %v949 = vsel %vm471, %v947, %v948
      %v950 = vrot.slane %v914, 2
      %v951 = vrot.slane %v915, 2
      %v952 = vsel %vm471, %v950, %v951
      %v953 = vrot.slane %v916, 2
      %v954 = vrot.slane %v917, 2
      %v955 = vsel %vm471, %v953, %v954
      %v956 = vrot.slane %v918, 2
      %v957 = vrot.slane %v919, 2
      %v958 = vsel %vm471, %v956, %v957
      %v959 = vrot.slane %v920, 2
      %v960 = vrot.slane %v921, 2
      %v961 = vsel %vm471, %v959, %v960
      %v970 = vadd.f32 %v874, %v940
      %v971 = vadd.f32 %v875, %v943
      %v972 = vadd.f32 %v876, %v946
      %v973 = vadd.f32 %v877, %v949
      %v974 = vadd.f32 %v878, %v952
      %v975 = vadd.f32 %v879, %v955
      %v976 = vadd.f32 %v880, %v958
      %v977 = vadd.f32 %v881, %v961
      %v978 = vld [vmem:[%s2] sm:$0x1]
      %v980 = vlaneseq
      %v981 = vshrl.u32 %v980, 7
      %v982 = vsub.s32 0, %v981
      %v983 = vrot.slane %v978, %v982
      %v985 = vadd.f32 %v970, %v983
      %v986 = vadd.f32 %v971, %v983
      %v987 = vadd.f32 %v972, %v983
      %v988 = vadd.f32 %v973, %v983
      %v989 = vadd.f32 %v974, %v983
      %v990 = vadd.f32 %v975, %v983
      %v991 = vadd.f32 %v976, %v983
      %v992 = vadd.f32 %v977, %v983
      %v993 = vmax.f32 %v985, 0.0
      %v994 = vmax.f32 %v986, 0.0
      %v995 = vmax.f32 %v987, 0.0
      %v996 = vmax.f32 %v988, 0.0
      %v997 = vmax.f32 %v989, 0.0
      %v998 = vmax.f32 %v990, 0.0
      %v999 = vmax.f32 %v991, 0.0
      %v1000 = vmax.f32 %v992, 0.0
      %v1001 = vadd.f32 %v993, %v994
      %v1002 = vadd.f32 %v1001, %v995
      %v1003 = vadd.f32 %v1002, %v996
      %v1004 = vadd.f32 %v1003, %v997
      %v1005 = vadd.f32 %v1004, %v998
      %v1006 = vadd.f32 %v1005, %v999
      %v1007 = vadd.f32 %v1006, %v1000
      %v1008 = vrcp.pop 8.0
      %v1009 = vmul.f32 %v1007, %v1008
      %v1010 = vrot.slane %v1009, 4
      %v1011 = vadd.f32 %v1009, %v1010
      %v1012 = vrot.slane %v1011, 2
      %v1013 = vadd.f32 %v1011, %v1012
      %v1014 = vrot.slane %v1013, 1
      %v1015 = vadd.f32 %v1013, %v1014
      %v1016 = vmul.f32 %v1015, %v1008
      %v1017 = vld [vmem:[%s3] sm:$0xff]
      %v1018 = vld [vmem:[%s3 + $0x8] sm:$0xff]
      %v1019 = vld [vmem:[%s3 + $0x10] sm:$0xff]
      %v1020 = vld [vmem:[%s3 + $0x18] sm:$0xff]
      %v1021 = vld [vmem:[%s3 + $0x20] sm:$0xff]
      %v1022 = vld [vmem:[%s3 + $0x28] sm:$0xff]
      %v1023 = vld [vmem:[%s3 + $0x30] sm:$0xff]
      %v1024 = vld [vmem:[%s3 + $0x38] sm:$0xff]
      %v1025 = vld [vmem:[%s3 + $0x40] sm:$0xff]
      %v1026 = vld [vmem:[%s3 + $0x48] sm:$0xff]
      %v1027 = vld [vmem:[%s3 + $0x50] sm:$0xff]
      %v1028 = vld [vmem:[%s3 + $0x58] sm:$0xff]
      %v1029 = vld [vmem:[%s3 + $0x60] sm:$0xff]
      %v1030 = vld [vmem:[%s3 + $0x68] sm:$0xff]
      %v1031 = vld [vmem:[%s3 + $0x70] sm:$0xff]
      %v1032 = vld [vmem:[%s3 + $0x78] sm:$0xff]
      %v1033 = vld [vmem:[%s4] sm:$0x1]
      %1034 = vmatprep.subr.mxu0 0.0
      %1035 = vmatpush1.msra.mxu0 %v1032
      %1036 = vmatprep.subr.mxu0 0.0
      %1037 = vmatpush1.msra.mxu0 %v1031
      %1038 = vmatprep.subr.mxu0 0.0
      %1039 = vmatpush1.msra.mxu0 %v1030
      %1040 = vmatprep.subr.mxu0 0.0
      %1041 = vmatpush1.msra.mxu0 %v1029
      %1042 = vmatprep.subr.mxu0 0.0
      %1043 = vmatpush1.msra.mxu0 %v1028
      %1044 = vmatprep.subr.mxu0 0.0
      %1045 = vmatpush1.msra.mxu0 %v1027
      %1046 = vmatprep.subr.mxu0 0.0
      %1047 = vmatpush1.msra.mxu0 %v1026
      %1048 = vmatprep.subr.mxu0 0.0
      %1049 = vmatpush1.msra.mxu0 %v1025
      %1050 = vmatprep.subr.mxu0 0.0
      %1051 = vmatpush1.msra.mxu0 %v1024
      %1052 = vmatprep.subr.mxu0 0.0
      %1053 = vmatpush1.msra.mxu0 %v1023
      %1054 = vmatprep.subr.mxu0 0.0
      %1055 = vmatpush1.msra.mxu0 %v1022
      %1056 = vmatprep.subr.mxu0 0.0
      %1057 = vmatpush1.msra.mxu0 %v1021
      %1058 = vmatprep.subr.mxu0 0.0
      %1059 = vmatpush1.msra.mxu0 %v1020
      %1060 = vmatprep.subr.mxu0 0.0
      %1061 = vmatpush1.msra.mxu0 %v1019
      %1062 = vmatprep.subr.mxu0 0.0
      %1063 = vmatpush1.msra.mxu0 %v1018
      %1064 = vmatprep.subr.mxu0 0.0
      %1065 = vmatpush1.msra.mxu0 %v1017
      %1066 = vmatprep.subr.mxu0 0.0
      %1067 = vmatpush2.msra.mxu0 0.0
      %1068 = vmatprep.subr.mxu0 0.0
      %1069 = vmatpush2.msra.mxu0 0.0
      %1070 = vmatprep.subr.mxu0 0.0
      %1071 = vmatpush2.msra.mxu0 0.0
      %1072 = vmatprep.subr.mxu0 0.0
      %1073 = vmatpush2.msra.mxu0 0.0
      %1074 = vmatprep.subr.mxu0 0.0
      %1075 = vmatpush2.msra.mxu0 0.0
      %1076 = vmatprep.subr.mxu0 0.0
      %1077 = vmatpush2.msra.mxu0 0.0
      %1078 = vmatprep.subr.mxu0 0.0
      %1079 = vmatpush2.msra.mxu0 0.0
      %1080 = vmatprep.subr.mxu0 0.0
      %1081 = vmatpush2.msra.mxu0 0.0
      %1082 = vmatprep.subr.mxu0 0.0
      %1083 = vmatpush2.msra.mxu0 0.0
      %1084 = vmatprep.subr.mxu0 0.0
      %1085 = vmatpush2.msra.mxu0 0.0
      %1086 = vmatprep.subr.mxu0 0.0
      %1087 = vmatpush2.msra.mxu0 0.0
      %1088 = vmatprep.subr.mxu0 0.0
      %1089 = vmatpush2.msra.mxu0 0.0
      %1090 = vmatprep.subr.mxu0 0.0
      %1091 = vmatpush2.msra.mxu0 0.0
      %1092 = vmatprep.subr.mxu0 0.0
      %1093 = vmatpush2.msra.mxu0 0.0
      %1094 = vmatprep.subr.mxu0 0.0
      %1095 = vmatpush2.msra.mxu0 0.0
      %1096 = vmatprep.subr.mxu0 0.0
      %1097 = vmatpush2.msra.mxu0 0.0
      %1098 = vmatprep.mubr.f32.mxu0 0.0
      %1099 = vmatmul.mubr.f32.gmra.mxu0 %v1016
      %v1100 = vpop.f32.mrf.mxu0
      %v1101 = vadd.f32 %v1033, %v1100
      %v1102 = vpop.f32.mrf.mxu0
      %1103 = vdwg.mxu0
      %v1104 = vmax.f32 %v1101, 0.0
      %v1105 = vld [vmem:[%s5] sm:$0xff]
      %v1106 = vld [vmem:[%s5 + $0x8] sm:$0xff]
      %v1107 = vld [vmem:[%s5 + $0x10] sm:$0xff]
      %v1108 = vld [vmem:[%s5 + $0x18] sm:$0xff]
      %v1109 = vld [vmem:[%s5 + $0x20] sm:$0xff]
      %v1110 = vld [vmem:[%s5 + $0x28] sm:$0xff]
      %v1111 = vld [vmem:[%s5 + $0x30] sm:$0xff]
      %v1112 = vld [vmem:[%s5 + $0x38] sm:$0xff]
      %v1113 = vld [vmem:[%s5 + $0x40] sm:$0xff]
      %v1114 = vld [vmem:[%s5 + $0x48] sm:$0xff]
      %v1115 = vld [vmem:[%s5 + $0x50] sm:$0xff]
      %v1116 = vld [vmem:[%s5 + $0x58] sm:$0xff]
      %v1117 = vld [vmem:[%s5 + $0x60] sm:$0xff]
      %v1118 = vld [vmem:[%s5 + $0x68] sm:$0xff]
      %v1119 = vld [vmem:[%s5 + $0x70] sm:$0xff]
      %v1120 = vld [vmem:[%s5 + $0x78] sm:$0xff]
      %v1121 = vld [vmem:[%s6] sm:$0x1]
      %1122 = vmatprep.subr.mxu0 0.0
      %1123 = vmatpush1.msra.mxu0 %v1120
      %1124 = vmatprep.subr.mxu0 0.0
      %1125 = vmatpush1.msra.mxu0 %v1119
      %1126 = vmatprep.subr.mxu0 0.0
      %1127 = vmatpush1.msra.mxu0 %v1118
      %1128 = vmatprep.subr.mxu0 0.0
      %1129 = vmatpush1.msra.mxu0 %v1117
      %1130 = vmatprep.subr.mxu0 0.0
      %1131 = vmatpush1.msra.mxu0 %v1116
      %1132 = vmatprep.subr.mxu0 0.0
      %1133 = vmatpush1.msra.mxu0 %v1115
      %1134 = vmatprep.subr.mxu0 0.0
      %1135 = vmatpush1.msra.mxu0 %v1114
      %1136 = vmatprep.subr.mxu0 0.0
      %1137 = vmatpush1.msra.mxu0 %v1113
      %1138 = vmatprep.subr.mxu0 0.0
      %1139 = vmatpush1.msra.mxu0 %v1112
      %1140 = vmatprep.subr.mxu0 0.0
      %1141 = vmatpush1.msra.mxu0 %v1111
      %1142 = vmatprep.subr.mxu0 0.0
      %1143 = vmatpush1.msra.mxu0 %v1110
      %1144 = vmatprep.subr.mxu0 0.0
      %1145 = vmatpush1.msra.mxu0 %v1109
      %1146 = vmatprep.subr.mxu0 0.0
      %1147 = vmatpush1.msra.mxu0 %v1108
      %1148 = vmatprep.subr.mxu0 0.0
      %1149 = vmatpush1.msra.mxu0 %v1107
      %1150 = vmatprep.subr.mxu0 0.0
      %1151 = vmatpush1.msra.mxu0 %v1106
      %1152 = vmatprep.subr.mxu0 0.0
      %1153 = vmatpush1.msra.mxu0 %v1105
      %1154 = vmatprep.subr.mxu0 0.0
      %1155 = vmatpush2.msra.mxu0 0.0
      %1156 = vmatprep.subr.mxu0 0.0
      %1157 = vmatpush2.msra.mxu0 0.0
      %1158 = vmatprep.subr.mxu0 0.0
      %1159 = vmatpush2.msra.mxu0 0.0
      %1160 = vmatprep.subr.mxu0 0.0
      %1161 = vmatpush2.msra.mxu0 0.0
      %1162 = vmatprep.subr.mxu0 0.0
      %1163 = vmatpush2.msra.mxu0 0.0
      %1164 = vmatprep.subr.mxu0 0.0
      %1165 = vmatpush2.msra.mxu0 0.0
      %1166 = vmatprep.subr.mxu0 0.0
      %1167 = vmatpush2.msra.mxu0 0.0
      %1168 = vmatprep.subr.mxu0 0.0
      %1169 = vmatpush2.msra.mxu0 0.0
      %1170 = vmatprep.subr.mxu0 0.0
      %1171 = vmatpush2.msra.mxu0 0.0
      %1172 = vmatprep.subr.mxu0 0.0
      %1173 = vmatpush2.msra.mxu0 0.0
      %1174 = vmatprep.subr.mxu0 0.0
      %1175 = vmatpush2.msra.mxu0 0.0
      %1176 = vmatprep.subr.mxu0 0.0
      %1177 = vmatpush2.msra.mxu0 0.0
      %1178 = vmatprep.subr.mxu0 0.0
      %1179 = vmatpush2.msra.mxu0 0.0
      %1180 = vmatprep.subr.mxu0 0.0
      %1181 = vmatpush2.msra.mxu0 0.0
      %1182 = vmatprep.subr.mxu0 0.0
      %1183 = vmatpush2.msra.mxu0 0.0
      %1184 = vmatprep.subr.mxu0 0.0
      %1185 = vmatpush2.msra.mxu0 0.0
      %1186 = vmatprep.mubr.f32.mxu0 0.0
      %1187 = vmatmul.mubr.f32.gmra.mxu0 %v1104
      %v1188 = vpop.f32.mrf.mxu0
      %v1189 = vadd.f32 %v1121, %v1188
      %v1190 = vpop.f32.mrf.mxu0
      %1191 = vdwg.mxu0
      %v1192 = vsub.f32 0.0, %v1189
      %v1193 = vmul.f32 %v1192, 1.442695
      %v1194 = vpow.pop %v1193
      %v1195 = vadd.f32 %v1194, 1.0
      %v1196 = vrcp.pop %v1195
      %v1197 = vmul.f32 1.0, %v1196
      %v1198 = vlaneseq
      %v1199 = vshrl.u32 %v1198, 7
      %v1200 = vsub.s32 0, %v1199
      %v1201 = vrot.slane %v1197, %v1200
      %v1202 = vmul.f32 %v993, %v1201
      %v1203 = vmul.f32 %v994, %v1201
      %v1204 = vmul.f32 %v995, %v1201
      %v1205 = vmul.f32 %v996, %v1201
      %v1206 = vmul.f32 %v997, %v1201
      %v1207 = vmul.f32 %v998, %v1201
      %v1208 = vmul.f32 %v999, %v1201
      %v1209 = vmul.f32 %v1000, %v1201
      %v1210 = vpack.c.bf16 %v1202, %v1202
      %v1211 = vpack.c.bf16 %v1203, %v1203
      %v1212 = vpack.c.bf16 %v1204, %v1204
      %v1213 = vpack.c.bf16 %v1205, %v1205
      %v1214 = vpack.c.bf16 %v1206, %v1206
      %v1215 = vpack.c.bf16 %v1207, %v1207
      %v1216 = vpack.c.bf16 %v1208, %v1208
      %v1217 = vpack.c.bf16 %v1209, %v1209
      %1218 = vst [vmem:[%s278] sm:$0xf] %v1210
      %1219 = vst [vmem:[%s278 + $0x4] sm:$0xf] %v1211
      %1220 = vst [vmem:[%s278 + $0x8] sm:$0xf] %v1212
      %1221 = vst [vmem:[%s278 + $0xc] sm:$0xf] %v1213
      %1222 = vst [vmem:[%s278 + $0x10] sm:$0xf] %v1214
      %1223 = vst [vmem:[%s278 + $0x14] sm:$0xf] %v1215
      %1224 = vst [vmem:[%s278 + $0x18] sm:$0xf] %v1216
      %1225 = vst [vmem:[%s278 + $0x1c] sm:$0xf] %v1217
      %p1226 = scmp.lt.s32.totalorder %s18, 1
      %s1227 = scalar_select %p1226, %s18, 1
      %s1228 = smul.addr %s1227, 8
      %s1229 = smul.addr %s1228, 4
      %s1230 = scalar_lea.vmem %s7, %s1229
      // Predicated region
      $region49: #{efficientnet_features_forward.10} parent=47 // pred_check
        %p1231 = pneg %p188
      $region50: #{efficientnet_features_forward.10} parent=47 // pred_check_branch
        %1233 = sbr.rel (%p1231) target = $region52
      $region51: #{efficientnet_features_forward.10} parent=47 // pred_region
        _
      $region52: #{efficientnet_features_forward.10} parent=47 // pred_fallthru
        _
    $region48: #{efficientnet_features_forward.10} parent=5 // pred_fallthru
      _
    %p1234 = scmp.le.s32.totalorder 2, %s13
    // Predicated region
    $region53: #{efficientnet_features_forward.10} parent=5 // pred_check
      %p1235 = pneg %p1234
    $region54: #{efficientnet_features_forward.10} parent=5 // pred_check_branch
      %1237 = sbr.rel (%p1235) target = $region56
    $region55: #{efficientnet_features_forward.10} parent=5 // pred_region
      %s1238 = ssub.s32 %s13, 2
      // Predicated region
      $region57: #{efficientnet_features_forward.10} parent=55 // pred_check
        %p1239 = pneg %p194
      $region58: #{efficientnet_features_forward.10} parent=55 // pred_check_branch
        %1241 = sbr.rel (%p1239) target = $region60
      $region59: #{efficientnet_features_forward.10} parent=55 // pred_region
        %p1242 = scmp.lt.s32.totalorder %s19, 1
        %s1243 = scalar_select %p1242, %s19, 1
        %s1244 = smul.addr %s1243, 8
        %s1245 = smul.addr %s1244, 4
        %s1246 = scalar_lea.vmem %s7, %s1245
      $region60: #{efficientnet_features_forward.10} parent=55 // pred_fallthru
        _
    $region56: #{efficientnet_features_forward.10} parent=5 // pred_fallthru
      _
  $region6: #{efficientnet_features_forward.10} parent=0 // loop_footer
    %s17 = sadd.s32 1, %s13
  $region7: #{efficientnet_features_forward.10} parent=0 // loop_footer_branch
    %12 = sbr.rel target = $region3
  $region8: #{efficientnet_features_forward.10} parent=0 // loop_exit
    _

// kernel: efficientnet_features_forward.14
$region0: #{efficientnet_features_forward.14}
  #allocation0 [shape = 'u32[]', space=smem, size = 0x4, offset = 0x4, fixed_abs, tag = 'smem constant byte address 0x4 - core index']
  #allocation1 [shape = 'u32[144,128]{1,0:T(1,128)}', space=vmem, size = 0x12000, scoped, tag = 'internal scratch']
  %s0 = inlined_call_operand.vmem [shape: bf16[32,128], index: 0, kind: input, shape index: {}]
  %s1 = inlined_call_operand.vmem [shape: bf16[128,128], index: 1, kind: input, shape index: {}]
  %s2 = inlined_call_operand.vmem [shape: f32[1,128], index: 2, kind: input, shape index: {}]
  %s3 = inlined_call_operand.vmem [shape: bf16[32,128], index: 3, kind: output, shape index: {}]
  %s4 = sld [smem:[#allocation0]]
  $region45: #{efficientnet_features_forward.14} parent=0
    _
  %s6 = ssub.s32 1, %s4
  %s7 = scalar_select 0, %s6, %s4
  loop: start=0, step=1, limit=4
  $region2: #{efficientnet_features_forward.14} parent=0 // loop_pre_header
    _
  $region3: #{efficientnet_features_forward.14} parent=0 // loop_header
    %s9 = sphi 0, %s13
    %p10 = scmp.ge.s32.totalorder %s9, 4
    %s19 = sphi 0, %s21
    %s22 = sphi 0, %s19
    %s23 = sphi 0, %s22
    %s39 = sphi 0, %s23
    %s43 = sphi 0, %s43
    %s45 = sphi 0, %s43
    %s46 = sphi 0, %s45
    %s60 = sphi 0, %s46
    %s64 = sphi 0, %s64
    %s66 = sphi 0, %s64
    %s67 = sphi 0, %s66
    %s81 = sphi 0, %s67
    %s87 = sphi 0, %s89
    %s90 = sphi 0, %s87
    %s91 = sphi 0, %s90
    %s107 = sphi 0, %s91
  $region4: #{efficientnet_features_forward.14} parent=0 // loop_header_branch
    %12 = sbr.rel (%p10) target = $region8
  $region5: #{efficientnet_features_forward.14} parent=0 // loop_body
    %s14 = ssub.s32 %s9, 1
    %s15 = ssub.s32 %s9, 2
    %s16 = sadd.s32 %s9, 1
    %s17 = ssub.s32 %s9, %s16
    %p18 = scmp.eq.s32.totalorder %s17, 0
    %s20 = sadd.s32 %s19, 1
    %s21 = scalar_select %p18, %s19, %s20
    %p24 = pneg %p18
    %p25 = scmp.eq.s32.totalorder %s9, 1
    %p26 = por %p24, %p25
    %p27 = scmp.ne.s32.totalorder %s19, %s22
    %p28 = scmp.eq.s32.totalorder %s9, 0
    %p29 = por %p27, %p28
    %p30 = scmp.ne.s32.totalorder %s19, %s22
    %p31 = scmp.eq.s32.totalorder %s14, 1
    %p32 = por %p30, %p31
    %p33 = scmp.ne.s32.totalorder %s22, %s23
    %p34 = scmp.eq.s32.totalorder %s14, 0
    %p35 = por %p33, %p34
    %p36 = scmp.ne.s32.totalorder %s22, %s23
    %p37 = scmp.eq.s32.totalorder %s15, 1
    %p38 = por %p36, %p37
    %p40 = scmp.ne.s32.totalorder %s23, %s39
    %p41 = scmp.eq.s32.totalorder %s15, 0
    %p42 = por %p40, %p41
    %s44 = sadd.s32 %s43, 1
    %p47 = scmp.eq.s32.totalorder %s9, 1
    %p48 = scmp.ne.s32.totalorder %s43, %s45
    %p49 = scmp.eq.s32.totalorder %s9, 0
    %p50 = por %p48, %p49
    %p51 = scmp.ne.s32.totalorder %s43, %s45
    %p52 = scmp.eq.s32.totalorder %s14, 1
    %p53 = por %p51, %p52
    %p54 = scmp.ne.s32.totalorder %s45, %s46
    %p55 = scmp.eq.s32.totalorder %s14, 0
    %p56 = por %p54, %p55
    %p57 = scmp.ne.s32.totalorder %s45, %s46
    %p58 = scmp.eq.s32.totalorder %s15, 1
    %p59 = por %p57, %p58
    %p61 = scmp.ne.s32.totalorder %s46, %s60
    %p62 = scmp.eq.s32.totalorder %s15, 0
    %p63 = por %p61, %p62
    %s65 = sadd.s32 %s64, 1
    %p68 = scmp.eq.s32.totalorder %s9, 1
    %p69 = scmp.ne.s32.totalorder %s64, %s66
    %p70 = scmp.eq.s32.totalorder %s9, 0
    %p71 = por %p69, %p70
    %p72 = scmp.ne.s32.totalorder %s64, %s66
    %p73 = scmp.eq.s32.totalorder %s14, 1
    %p74 = por %p72, %p73
    %p75 = scmp.ne.s32.totalorder %s66, %s67
    %p76 = scmp.eq.s32.totalorder %s14, 0
    %p77 = por %p75, %p76
    %p78 = scmp.ne.s32.totalorder %s66, %s67
    %p79 = scmp.eq.s32.totalorder %s15, 1
    %p80 = por %p78, %p79
    %p82 = scmp.ne.s32.totalorder %s67, %s81
    %p83 = scmp.eq.s32.totalorder %s15, 0
    %p84 = por %p82, %p83
    %s85 = ssub.s32 %s9, %s16
    %p86 = scmp.eq.s32.totalorder %s85, 0
    %s88 = sadd.s32 %s87, 1
    %s89 = scalar_select %p86, %s87, %s88
    %p92 = pneg %p86
    %p93 = scmp.eq.s32.totalorder %s9, 1
    %p94 = por %p92, %p93
    %p95 = scmp.ne.s32.totalorder %s87, %s90
    %p96 = scmp.eq.s32.totalorder %s9, 0
    %p97 = por %p95, %p96
    %p98 = scmp.ne.s32.totalorder %s87, %s90
    %p99 = scmp.eq.s32.totalorder %s14, 1
    %p100 = por %p98, %p99
    %p101 = scmp.ne.s32.totalorder %s90, %s91
    %p102 = scmp.eq.s32.totalorder %s14, 0
    %p103 = por %p101, %p102
    %p104 = scmp.ne.s32.totalorder %s90, %s91
    %p105 = scmp.eq.s32.totalorder %s15, 1
    %p106 = por %p104, %p105
    %p108 = scmp.ne.s32.totalorder %s91, %s107
    %p109 = scmp.eq.s32.totalorder %s15, 0
    %p110 = por %p108, %p109
    %p111 = scmp.le.s32.totalorder 1, %s9
    %p112 = scmp.lt.s32.totalorder %s9, 3
    %p113 = pnand %p111, %p112
    %p114 = pneg %p113
    // Predicated region
    $region9: #{efficientnet_features_forward.14} parent=5 // pred_check
      _
    $region10: #{efficientnet_features_forward.14} parent=5 // pred_check_branch
      %116 = sbr.rel (%p113) target = $region12
    $region11: #{efficientnet_features_forward.14} parent=5 // pred_region
      %s117 = ssub.s32 %s9, 1
      // Predicated region
      $region13: #{efficientnet_features_forward.14} parent=11 // pred_check
        %p118 = pneg %p56
      $region14: #{efficientnet_features_forward.14} parent=11 // pred_check_branch
        %120 = sbr.rel (%p118) target = $region16
      $region15: #{efficientnet_features_forward.14} parent=11 // pred_region
        _
      $region16: #{efficientnet_features_forward.14} parent=11 // pred_fallthru
        _
      // Predicated region
      $region17: #{efficientnet_features_forward.14} parent=11 // pred_check
        %p121 = pneg %p77
      $region18: #{efficientnet_features_forward.14} parent=11 // pred_check_branch
        %123 = sbr.rel (%p121) target = $region20
      $region19: #{efficientnet_features_forward.14} parent=11 // pred_region
        _
      $region20: #{efficientnet_features_forward.14} parent=11 // pred_fallthru
        _
    $region12: #{efficientnet_features_forward.14} parent=5 // pred_fallthru
      _
    %p124 = scmp.lt.s32.totalorder %s9, 2
    // Predicated region
    $region21: #{efficientnet_features_forward.14} parent=5 // pred_check
      %p125 = pneg %p124
    $region22: #{efficientnet_features_forward.14} parent=5 // pred_check_branch
      %127 = sbr.rel (%p125) target = $region24
    $region23: #{efficientnet_features_forward.14} parent=5 // pred_region
      // Predicated region
      $region25: #{efficientnet_features_forward.14} parent=23 // pred_check
        %p128 = pneg %p29
      $region26: #{efficientnet_features_forward.14} parent=23 // pred_check_branch
        %130 = sbr.rel (%p128) target = $region28
      $region27: #{efficientnet_features_forward.14} parent=23 // pred_region
        %s131 = smul.u32 2, %s9
        %p132 = scmp.lt.s32.totalorder %s131, 3
        %s133 = scalar_select %p132, %s131, 3
        %s134 = smul.addr %s133, 4
        %s135 = scalar_lea.vmem %s0, %s134
        %s136 = smul.u32 2, %s9
      $region28: #{efficientnet_features_forward.14} parent=23 // pred_fallthru
        _
    $region24: #{efficientnet_features_forward.14} parent=5 // pred_fallthru
      _
    %p137 = scmp.le.s32.totalorder 1, %s9
    %p138 = scmp.lt.s32.totalorder %s9, 3
    %p139 = pnand %p137, %p138
    %p140 = pneg %p139
    // Predicated region
    $region29: #{efficientnet_features_forward.14} parent=5 // pred_check
      _
    $region30: #{efficientnet_features_forward.14} parent=5 // pred_check_branch
      %142 = sbr.rel (%p139) target = $region32
    $region31: #{efficientnet_features_forward.14} parent=5 // pred_region
      %s143 = ssub.s32 %s9, 1
      %s144 = smul.u32 2, %s14
      %p145 = scmp.lt.s32.totalorder %s144, 3
      %s146 = scalar_select %p145, %s144, 3
      %s147 = smul.addr %s146, 4
      %s148 = scalar_lea.vmem %s0, %s147
      %p149 = pneg %p35
      %p150 = pneg %p32
      %p151 = pneg %p56
      %p152 = pneg %p53
      %p153 = pneg %p77
      %p154 = pneg %p74
      %p155 = pneg %p103
      %p156 = pneg %p100
      %s157 = smul.u32 2, %s14
      %p158 = scmp.lt.s32.totalorder %s157, 3
      %s159 = scalar_select %p158, %s157, 3
      %s160 = smul.addr %s159, 4
      %s161 = scalar_lea.vmem %s3, %s160
      %s162 = smul.u32 2, %s14
      %p163 = scmp.lt.s32.totalorder %s162, 3
      %s164 = scalar_select %p163, %s162, 3
      %s165 = smul.addr %s164, 4
      %s166 = scalar_lea.vmem %s0, %s165
      %s167 = smul.u32 2, %s14
      %s168 = smul.u32 2, %s14
      %p169 = scmp.lt.s32.totalorder %s168, 3
      %s170 = scalar_select %p169, %s168, 3
      %s171 = smul.addr %s170, 4
      %s172 = scalar_lea.vmem %s3, %s171
      %s173 = smul.u32 2, %s14
      %v175 = vld [vmem:[%s166] sm:$0xf]
      %v176 = vld [vmem:[%s166 + $0x4] sm:$0xf]
      %v177 = vld [vmem:[%s1] sm:$0xf]
      %v178 = vld [vmem:[%s1 + $0x4] sm:$0xf]
      %v179 = vld [vmem:[%s1 + $0x8] sm:$0xf]
      %v180 = vld [vmem:[%s1 + $0xc] sm:$0xf]
      %v181 = vld [vmem:[%s1 + $0x10] sm:$0xf]
      %v182 = vld [vmem:[%s1 + $0x14] sm:$0xf]
      %v183 = vld [vmem:[%s1 + $0x18] sm:$0xf]
      %v184 = vld [vmem:[%s1 + $0x1c] sm:$0xf]
      %v185 = vld [vmem:[%s1 + $0x20] sm:$0xf]
      %v186 = vld [vmem:[%s1 + $0x24] sm:$0xf]
      %v187 = vld [vmem:[%s1 + $0x28] sm:$0xf]
      %v188 = vld [vmem:[%s1 + $0x2c] sm:$0xf]
      %v189 = vld [vmem:[%s1 + $0x30] sm:$0xf]
      %v190 = vld [vmem:[%s1 + $0x34] sm:$0xf]
      %v191 = vld [vmem:[%s1 + $0x38] sm:$0xf]
      %v192 = vld [vmem:[%s1 + $0x3c] sm:$0xf]
      %v193 = vld [vmem:[%s2] sm:$0x1]
      %v195 = vlaneseq
      %v196 = vshrl.u32 %v195, 7
      %v197 = vsub.s32 0, %v196
      %v198 = vrot.slane %v193, %v197
      %v202 = vunpack.c.l.b16 %v175
      %v203 = vunpack.c.l.b16 %v176
      %v204 = vpack.c.b16 %v203, %v202
      %v222 = vunpack.c.l.b16 %v177
      %v223 = vunpack.c.l.b16 %v178
      %v224 = vunpack.c.l.b16 %v179
      %v225 = vunpack.c.l.b16 %v180
      %v226 = vunpack.c.l.b16 %v181
      %v227 = vunpack.c.l.b16 %v182
      %v228 = vunpack.c.l.b16 %v183
      %v229 = vunpack.c.l.b16 %v184
      %v230 = vunpack.c.l.b16 %v185
      %v231 = vunpack.c.l.b16 %v186
      %v232 = vunpack.c.l.b16 %v187
      %v233 = vunpack.c.l.b16 %v188
      %v234 = vunpack.c.l.b16 %v189
      %v235 = vunpack.c.l.b16 %v190
      %v236 = vunpack.c.l.b16 %v191
      %v237 = vunpack.c.l.b16 %v192
      %v238 = vpack.c.b16 %v223, %v222
      %v239 = vpack.c.b16 %v225, %v224
      %v240 = vpack.c.b16 %v227, %v226
      %v241 = vpack.c.b16 %v229, %v228
      %v242 = vpack.c.b16 %v231, %v230
      %v243 = vpack.c.b16 %v233, %v232
      %v244 = vpack.c.b16 %v235, %v234
      %v245 = vpack.c.b16 %v237, %v236
      %254 = vmatprep.subr.bf16.mxu0 0
      %255 = vmatpush1.bf16.msra.mxu0 %v245
      %256 = vmatprep.subr.bf16.mxu0 0
      %257 = vmatpush1.bf16.msra.mxu0 %v244
      %258 = vmatprep.subr.bf16.mxu0 0
      %259 = vmatpush1.bf16.msra.mxu0 %v243
      %260 = vmatprep.subr.bf16.mxu0 0
      %261 = vmatpush1.bf16.msra.mxu0 %v242
      %262 = vmatprep.subr.bf16.mxu0 0
      %263 = vmatpush1.bf16.msra.mxu0 %v241
      %264 = vmatprep.subr.bf16.mxu0 0
      %265 = vmatpush1.bf16.msra.mxu0 %v240
      %266 = vmatprep.subr.bf16.mxu0 0
      %267 = vmatpush1.bf16.msra.mxu0 %v239
      %268 = vmatprep.subr.bf16.mxu0 0
      %269 = vmatpush1.bf16.msra.mxu0 %v238
      %270 = vmatprep.subr.bf16.mxu0 0
      %271 = vmatpush2.bf16.msra.mxu0 0
      %272 = vmatprep.subr.bf16.mxu0 0
      %273 = vmatpush2.bf16.msra.mxu0 0
      %274 = vmatprep.subr.bf16.mxu0 0
      %275 = vmatpush2.bf16.msra.mxu0 0
      %276 = vmatprep.subr.bf16.mxu0 0
      %277 = vmatpush2.bf16.msra.mxu0 0
      %278 = vmatprep.subr.bf16.mxu0 0
      %279 = vmatpush2.bf16.msra.mxu0 0
      %280 = vmatprep.subr.bf16.mxu0 0
      %281 = vmatpush2.bf16.msra.mxu0 0
      %282 = vmatprep.subr.bf16.mxu0 0
      %283 = vmatpush2.bf16.msra.mxu0 0
      %284 = vmatprep.subr.bf16.mxu0 0
      %285 = vmatpush2.bf16.msra.mxu0 0
      %286 = vmatprep.mubr.bf16.mxu0 0
      %287 = vmatmul.mubr.bf16.gmra.mxu0 %v204
      %v288 = vpop.f32.mrf.mxu0
      %v289 = vadd.f32 %v198, %v288
      %v290 = vpop.f32.mrf.mxu0
      %v291 = vpop.f32.mrf.mxu0
      %v292 = vadd.f32 %v198, %v291
      %v293 = vpop.f32.mrf.mxu0
      %294 = vdwg.mxu0
      %v295 = vpack.c.bf16 %v292, %v289
      %v297 = vunpack.c.l.b16 %v295
      %v298 = vunpack.c.h.b16 %v295
      %v299 = vpack.c.b16 %v297, %v297
      %v300 = vpack.c.b16 %v298, %v298
      %303 = vst [vmem:[%s172] sm:$0xf] %v299
      %304 = vst [vmem:[%s172 + $0x4] sm:$0xf] %v300
      %s305 = smul.u32 2, %s14
      %p306 = scmp.lt.s32.totalorder %s305, 3
      %s307 = scalar_select %p306, %s305, 3
      %s308 = smul.addr %s307, 4
      %s309 = scalar_lea.vmem %s3, %s308
      // Predicated region
      $region33: #{efficientnet_features_forward.14} parent=31 // pred_check
        %p310 = pneg %p100
      $region34: #{efficientnet_features_forward.14} parent=31 // pred_check_branch
        %312 = sbr.rel (%p310) target = $region36
      $region35: #{efficientnet_features_forward.14} parent=31 // pred_region
        %s313 = smul.u32 2, %s14
      $region36: #{efficientnet_features_forward.14} parent=31 // pred_fallthru
        _
    $region32: #{efficientnet_features_forward.14} parent=5 // pred_fallthru
      _
    %p314 = scmp.le.s32.totalorder 2, %s9
    // Predicated region
    $region37: #{efficientnet_features_forward.14} parent=5 // pred_check
      %p315 = pneg %p314
    $region38: #{efficientnet_features_forward.14} parent=5 // pred_check_branch
      %317 = sbr.rel (%p315) target = $region40
    $region39: #{efficientnet_features_forward.14} parent=5 // pred_region
      %s318 = ssub.s32 %s9, 2
      // Predicated region
      $region41: #{efficientnet_features_forward.14} parent=39 // pred_check
        %p319 = pneg %p106
      $region42: #{efficientnet_features_forward.14} parent=39 // pred_check_branch
        %321 = sbr.rel (%p319) target = $region44
      $region43: #{efficientnet_features_forward.14} parent=39 // pred_region
        %s322 = smul.u32 2, %s15
        %p323 = scmp.lt.s32.totalorder %s322, 3
        %s324 = scalar_select %p323, %s322, 3
        %s325 = smul.addr %s324, 4
        %s326 = scalar_lea.vmem %s3, %s325
      $region44: #{efficientnet_features_forward.14} parent=39 // pred_fallthru
        _
    $region40: #{efficientnet_features_forward.14} parent=5 // pred_fallthru
      _
  $region6: #{efficientnet_features_forward.14} parent=0 // loop_footer
    %s13 = sadd.s32 1, %s9
  $region7: #{efficientnet_features_forward.14} parent=0 // loop_footer_branch
    %8 = sbr.rel target = $region3
  $region8: #{efficientnet_features_forward.14} parent=0 // loop_exit
    _

// kernel: efficientnet_features_forward.15
$region0: #{efficientnet_features_forward.15}
  #allocation0 [shape = 'u32[]', space=smem, size = 0x4, offset = 0x4, fixed_abs, tag = 'smem constant byte address 0x4 - core index']
  #allocation1 [shape = 'u32[144,128]{1,0:T(1,128)}', space=vmem, size = 0x12000, scoped, tag = 'internal scratch']
  %s0 = inlined_call_operand.vmem [shape: bf16[32,128], index: 0, kind: input, shape index: {}]
  %s1 = inlined_call_operand.vmem [shape: bf16[128,128], index: 1, kind: input, shape index: {}]
  %s2 = inlined_call_operand.vmem [shape: f32[1,128], index: 2, kind: input, shape index: {}]
  %s3 = inlined_call_operand.vmem [shape: bf16[32,128], index: 3, kind: output, shape index: {}]
  %s4 = sld [smem:[#allocation0]]
  $region45: #{efficientnet_features_forward.15} parent=0
    _
  %s6 = ssub.s32 1, %s4
  %s7 = scalar_select 0, %s6, %s4
  loop: start=0, step=1, limit=4
  $region2: #{efficientnet_features_forward.15} parent=0 // loop_pre_header
    _
  $region3: #{efficientnet_features_forward.15} parent=0 // loop_header
    %s9 = sphi 0, %s13
    %p10 = scmp.ge.s32.totalorder %s9, 4
    %s19 = sphi 0, %s21
    %s22 = sphi 0, %s19
    %s23 = sphi 0, %s22
    %s39 = sphi 0, %s23
    %s43 = sphi 0, %s43
    %s45 = sphi 0, %s43
    %s46 = sphi 0, %s45
    %s60 = sphi 0, %s46
    %s64 = sphi 0, %s64
    %s66 = sphi 0, %s64
    %s67 = sphi 0, %s66
    %s81 = sphi 0, %s67
    %s87 = sphi 0, %s89
    %s90 = sphi 0, %s87
    %s91 = sphi 0, %s90
    %s107 = sphi 0, %s91
  $region4: #{efficientnet_features_forward.15} parent=0 // loop_header_branch
    %12 = sbr.rel (%p10) target = $region8
  $region5: #{efficientnet_features_forward.15} parent=0 // loop_body
    %s14 = ssub.s32 %s9, 1
    %s15 = ssub.s32 %s9, 2
    %s16 = sadd.s32 %s9, 1
    %s17 = ssub.s32 %s9, %s16
    %p18 = scmp.eq.s32.totalorder %s17, 0
    %s20 = sadd.s32 %s19, 1
    %s21 = scalar_select %p18, %s19, %s20
    %p24 = pneg %p18
    %p25 = scmp.eq.s32.totalorder %s9, 1
    %p26 = por %p24, %p25
    %p27 = scmp.ne.s32.totalorder %s19, %s22
    %p28 = scmp.eq.s32.totalorder %s9, 0
    %p29 = por %p27, %p28
    %p30 = scmp.ne.s32.totalorder %s19, %s22
    %p31 = scmp.eq.s32.totalorder %s14, 1
    %p32 = por %p30, %p31
    %p33 = scmp.ne.s32.totalorder %s22, %s23
    %p34 = scmp.eq.s32.totalorder %s14, 0
    %p35 = por %p33, %p34
    %p36 = scmp.ne.s32.totalorder %s22, %s23
    %p37 = scmp.eq.s32.totalorder %s15, 1
    %p38 = por %p36, %p37
    %p40 = scmp.ne.s32.totalorder %s23, %s39
    %p41 = scmp.eq.s32.totalorder %s15, 0
    %p42 = por %p40, %p41
    %s44 = sadd.s32 %s43, 1
    %p47 = scmp.eq.s32.totalorder %s9, 1
    %p48 = scmp.ne.s32.totalorder %s43, %s45
    %p49 = scmp.eq.s32.totalorder %s9, 0
    %p50 = por %p48, %p49
    %p51 = scmp.ne.s32.totalorder %s43, %s45
    %p52 = scmp.eq.s32.totalorder %s14, 1
    %p53 = por %p51, %p52
    %p54 = scmp.ne.s32.totalorder %s45, %s46
    %p55 = scmp.eq.s32.totalorder %s14, 0
    %p56 = por %p54, %p55
    %p57 = scmp.ne.s32.totalorder %s45, %s46
    %p58 = scmp.eq.s32.totalorder %s15, 1
    %p59 = por %p57, %p58
    %p61 = scmp.ne.s32.totalorder %s46, %s60
    %p62 = scmp.eq.s32.totalorder %s15, 0
    %p63 = por %p61, %p62
    %s65 = sadd.s32 %s64, 1
    %p68 = scmp.eq.s32.totalorder %s9, 1
    %p69 = scmp.ne.s32.totalorder %s64, %s66
    %p70 = scmp.eq.s32.totalorder %s9, 0
    %p71 = por %p69, %p70
    %p72 = scmp.ne.s32.totalorder %s64, %s66
    %p73 = scmp.eq.s32.totalorder %s14, 1
    %p74 = por %p72, %p73
    %p75 = scmp.ne.s32.totalorder %s66, %s67
    %p76 = scmp.eq.s32.totalorder %s14, 0
    %p77 = por %p75, %p76
    %p78 = scmp.ne.s32.totalorder %s66, %s67
    %p79 = scmp.eq.s32.totalorder %s15, 1
    %p80 = por %p78, %p79
    %p82 = scmp.ne.s32.totalorder %s67, %s81
    %p83 = scmp.eq.s32.totalorder %s15, 0
    %p84 = por %p82, %p83
    %s85 = ssub.s32 %s9, %s16
    %p86 = scmp.eq.s32.totalorder %s85, 0
    %s88 = sadd.s32 %s87, 1
    %s89 = scalar_select %p86, %s87, %s88
    %p92 = pneg %p86
    %p93 = scmp.eq.s32.totalorder %s9, 1
    %p94 = por %p92, %p93
    %p95 = scmp.ne.s32.totalorder %s87, %s90
    %p96 = scmp.eq.s32.totalorder %s9, 0
    %p97 = por %p95, %p96
    %p98 = scmp.ne.s32.totalorder %s87, %s90
    %p99 = scmp.eq.s32.totalorder %s14, 1
    %p100 = por %p98, %p99
    %p101 = scmp.ne.s32.totalorder %s90, %s91
    %p102 = scmp.eq.s32.totalorder %s14, 0
    %p103 = por %p101, %p102
    %p104 = scmp.ne.s32.totalorder %s90, %s91
    %p105 = scmp.eq.s32.totalorder %s15, 1
    %p106 = por %p104, %p105
    %p108 = scmp.ne.s32.totalorder %s91, %s107
    %p109 = scmp.eq.s32.totalorder %s15, 0
    %p110 = por %p108, %p109
    %p111 = scmp.le.s32.totalorder 1, %s9
    %p112 = scmp.lt.s32.totalorder %s9, 3
    %p113 = pnand %p111, %p112
    %p114 = pneg %p113
    // Predicated region
    $region9: #{efficientnet_features_forward.15} parent=5 // pred_check
      _
    $region10: #{efficientnet_features_forward.15} parent=5 // pred_check_branch
      %116 = sbr.rel (%p113) target = $region12
    $region11: #{efficientnet_features_forward.15} parent=5 // pred_region
      %s117 = ssub.s32 %s9, 1
      // Predicated region
      $region13: #{efficientnet_features_forward.15} parent=11 // pred_check
        %p118 = pneg %p56
      $region14: #{efficientnet_features_forward.15} parent=11 // pred_check_branch
        %120 = sbr.rel (%p118) target = $region16
      $region15: #{efficientnet_features_forward.15} parent=11 // pred_region
        _
      $region16: #{efficientnet_features_forward.15} parent=11 // pred_fallthru
        _
      // Predicated region
      $region17: #{efficientnet_features_forward.15} parent=11 // pred_check
        %p121 = pneg %p77
      $region18: #{efficientnet_features_forward.15} parent=11 // pred_check_branch
        %123 = sbr.rel (%p121) target = $region20
      $region19: #{efficientnet_features_forward.15} parent=11 // pred_region
        _
      $region20: #{efficientnet_features_forward.15} parent=11 // pred_fallthru
        _
    $region12: #{efficientnet_features_forward.15} parent=5 // pred_fallthru
      _
    %p124 = scmp.lt.s32.totalorder %s9, 2
    // Predicated region
    $region21: #{efficientnet_features_forward.15} parent=5 // pred_check
      %p125 = pneg %p124
    $region22: #{efficientnet_features_forward.15} parent=5 // pred_check_branch
      %127 = sbr.rel (%p125) target = $region24
    $region23: #{efficientnet_features_forward.15} parent=5 // pred_region
      // Predicated region
      $region25: #{efficientnet_features_forward.15} parent=23 // pred_check
        %p128 = pneg %p29
      $region26: #{efficientnet_features_forward.15} parent=23 // pred_check_branch
        %130 = sbr.rel (%p128) target = $region28
      $region27: #{efficientnet_features_forward.15} parent=23 // pred_region
        %s131 = smul.u32 2, %s9
        %p132 = scmp.lt.s32.totalorder %s131, 3
        %s133 = scalar_select %p132, %s131, 3
        %s134 = smul.addr %s133, 4
        %s135 = scalar_lea.vmem %s0, %s134
        %s136 = smul.u32 2, %s9
      $region28: #{efficientnet_features_forward.15} parent=23 // pred_fallthru
        _
    $region24: #{efficientnet_features_forward.15} parent=5 // pred_fallthru
      _
    %p137 = scmp.le.s32.totalorder 1, %s9
    %p138 = scmp.lt.s32.totalorder %s9, 3
    %p139 = pnand %p137, %p138
    %p140 = pneg %p139
    // Predicated region
    $region29: #{efficientnet_features_forward.15} parent=5 // pred_check
      _
    $region30: #{efficientnet_features_forward.15} parent=5 // pred_check_branch
      %142 = sbr.rel (%p139) target = $region32
    $region31: #{efficientnet_features_forward.15} parent=5 // pred_region
      %s143 = ssub.s32 %s9, 1
      %s144 = smul.u32 2, %s14
      %p145 = scmp.lt.s32.totalorder %s144, 3
      %s146 = scalar_select %p145, %s144, 3
      %s147 = smul.addr %s146, 4
      %s148 = scalar_lea.vmem %s0, %s147
      %p149 = pneg %p35
      %p150 = pneg %p32
      %p151 = pneg %p56
      %p152 = pneg %p53
      %p153 = pneg %p77
      %p154 = pneg %p74
      %p155 = pneg %p103
      %p156 = pneg %p100
      %s157 = smul.u32 2, %s14
      %p158 = scmp.lt.s32.totalorder %s157, 3
      %s159 = scalar_select %p158, %s157, 3
      %s160 = smul.addr %s159, 4
      %s161 = scalar_lea.vmem %s3, %s160
      %s162 = smul.u32 2, %s14
      %p163 = scmp.lt.s32.totalorder %s162, 3
      %s164 = scalar_select %p163, %s162, 3
      %s165 = smul.addr %s164, 4
      %s166 = scalar_lea.vmem %s0, %s165
      %s167 = smul.u32 2, %s14
      %s168 = smul.u32 2, %s14
      %p169 = scmp.lt.s32.totalorder %s168, 3
      %s170 = scalar_select %p169, %s168, 3
      %s171 = smul.addr %s170, 4
      %s172 = scalar_lea.vmem %s3, %s171
      %s173 = smul.u32 2, %s14
      %v175 = vld [vmem:[%s166] sm:$0xf]
      %v176 = vld [vmem:[%s166 + $0x4] sm:$0xf]
      %v177 = vld [vmem:[%s1] sm:$0xf]
      %v178 = vld [vmem:[%s1 + $0x4] sm:$0xf]
      %v179 = vld [vmem:[%s1 + $0x8] sm:$0xf]
      %v180 = vld [vmem:[%s1 + $0xc] sm:$0xf]
      %v181 = vld [vmem:[%s1 + $0x10] sm:$0xf]
      %v182 = vld [vmem:[%s1 + $0x14] sm:$0xf]
      %v183 = vld [vmem:[%s1 + $0x18] sm:$0xf]
      %v184 = vld [vmem:[%s1 + $0x1c] sm:$0xf]
      %v185 = vld [vmem:[%s1 + $0x20] sm:$0xf]
      %v186 = vld [vmem:[%s1 + $0x24] sm:$0xf]
      %v187 = vld [vmem:[%s1 + $0x28] sm:$0xf]
      %v188 = vld [vmem:[%s1 + $0x2c] sm:$0xf]
      %v189 = vld [vmem:[%s1 + $0x30] sm:$0xf]
      %v190 = vld [vmem:[%s1 + $0x34] sm:$0xf]
      %v191 = vld [vmem:[%s1 + $0x38] sm:$0xf]
      %v192 = vld [vmem:[%s1 + $0x3c] sm:$0xf]
      %v193 = vld [vmem:[%s2] sm:$0x1]
      %v195 = vlaneseq
      %v196 = vshrl.u32 %v195, 7
      %v197 = vsub.s32 0, %v196
      %v198 = vrot.slane %v193, %v197
      %v202 = vunpack.c.l.b16 %v175
      %v203 = vunpack.c.l.b16 %v176
      %v204 = vpack.c.b16 %v203, %v202
      %v222 = vunpack.c.l.b16 %v177
      %v223 = vunpack.c.l.b16 %v178
      %v224 = vunpack.c.l.b16 %v179
      %v225 = vunpack.c.l.b16 %v180
      %v226 = vunpack.c.l.b16 %v181
      %v227 = vunpack.c.l.b16 %v182
      %v228 = vunpack.c.l.b16 %v183
      %v229 = vunpack.c.l.b16 %v184
      %v230 = vunpack.c.l.b16 %v185
      %v231 = vunpack.c.l.b16 %v186
      %v232 = vunpack.c.l.b16 %v187
      %v233 = vunpack.c.l.b16 %v188
      %v234 = vunpack.c.l.b16 %v189
      %v235 = vunpack.c.l.b16 %v190
      %v236 = vunpack.c.l.b16 %v191
      %v237 = vunpack.c.l.b16 %v192
      %v238 = vpack.c.b16 %v223, %v222
      %v239 = vpack.c.b16 %v225, %v224
      %v240 = vpack.c.b16 %v227, %v226
      %v241 = vpack.c.b16 %v229, %v228
      %v242 = vpack.c.b16 %v231, %v230
      %v243 = vpack.c.b16 %v233, %v232
      %v244 = vpack.c.b16 %v235, %v234
      %v245 = vpack.c.b16 %v237, %v236
      %254 = vmatprep.subr.bf16.mxu0 0
      %255 = vmatpush1.bf16.msra.mxu0 %v245
      %256 = vmatprep.subr.bf16.mxu0 0
      %257 = vmatpush1.bf16.msra.mxu0 %v244
      %258 = vmatprep.subr.bf16.mxu0 0
      %259 = vmatpush1.bf16.msra.mxu0 %v243
      %260 = vmatprep.subr.bf16.mxu0 0
      %261 = vmatpush1.bf16.msra.mxu0 %v242
      %262 = vmatprep.subr.bf16.mxu0 0
      %263 = vmatpush1.bf16.msra.mxu0 %v241
      %264 = vmatprep.subr.bf16.mxu0 0
      %265 = vmatpush1.bf16.msra.mxu0 %v240
      %266 = vmatprep.subr.bf16.mxu0 0
      %267 = vmatpush1.bf16.msra.mxu0 %v239
      %268 = vmatprep.subr.bf16.mxu0 0
      %269 = vmatpush1.bf16.msra.mxu0 %v238
      %270 = vmatprep.subr.bf16.mxu0 0
      %271 = vmatpush2.bf16.msra.mxu0 0
      %272 = vmatprep.subr.bf16.mxu0 0
      %273 = vmatpush2.bf16.msra.mxu0 0
      %274 = vmatprep.subr.bf16.mxu0 0
      %275 = vmatpush2.bf16.msra.mxu0 0
      %276 = vmatprep.subr.bf16.mxu0 0
      %277 = vmatpush2.bf16.msra.mxu0 0
      %278 = vmatprep.subr.bf16.mxu0 0
      %279 = vmatpush2.bf16.msra.mxu0 0
      %280 = vmatprep.subr.bf16.mxu0 0
      %281 = vmatpush2.bf16.msra.mxu0 0
      %282 = vmatprep.subr.bf16.mxu0 0
      %283 = vmatpush2.bf16.msra.mxu0 0
      %284 = vmatprep.subr.bf16.mxu0 0
      %285 = vmatpush2.bf16.msra.mxu0 0
      %286 = vmatprep.mubr.bf16.mxu0 0
      %287 = vmatmul.mubr.bf16.gmra.mxu0 %v204
      %v288 = vpop.f32.mrf.mxu0
      %v289 = vadd.f32 %v198, %v288
      %v290 = vpop.f32.mrf.mxu0
      %v291 = vpop.f32.mrf.mxu0
      %v292 = vadd.f32 %v198, %v291
      %v293 = vpop.f32.mrf.mxu0
      %294 = vdwg.mxu0
      %v295 = vmax.f32 %v289, 0.0
      %v296 = vmax.f32 %v292, 0.0
      %v297 = vpack.c.bf16 %v296, %v295
      %v299 = vunpack.c.l.b16 %v297
      %v300 = vunpack.c.h.b16 %v297
      %v301 = vpack.c.b16 %v299, %v299
      %v302 = vpack.c.b16 %v300, %v300
      %305 = vst [vmem:[%s172] sm:$0xf] %v301
      %306 = vst [vmem:[%s172 + $0x4] sm:$0xf] %v302
      %s307 = smul.u32 2, %s14
      %p308 = scmp.lt.s32.totalorder %s307, 3
      %s309 = scalar_select %p308, %s307, 3
      %s310 = smul.addr %s309, 4
      %s311 = scalar_lea.vmem %s3, %s310
      // Predicated region
      $region33: #{efficientnet_features_forward.15} parent=31 // pred_check
        %p312 = pneg %p100
      $region34: #{efficientnet_features_forward.15} parent=31 // pred_check_branch
        %314 = sbr.rel (%p312) target = $region36
      $region35: #{efficientnet_features_forward.15} parent=31 // pred_region
        %s315 = smul.u32 2, %s14
      $region36: #{efficientnet_features_forward.15} parent=31 // pred_fallthru
        _
    $region32: #{efficientnet_features_forward.15} parent=5 // pred_fallthru
      _
    %p316 = scmp.le.s32.totalorder 2, %s9
    // Predicated region
    $region37: #{efficientnet_features_forward.15} parent=5 // pred_check
      %p317 = pneg %p316
    $region38: #{efficientnet_features_forward.15} parent=5 // pred_check_branch
      %319 = sbr.rel (%p317) target = $region40
    $region39: #{efficientnet_features_forward.15} parent=5 // pred_region
      %s320 = ssub.s32 %s9, 2
      // Predicated region
      $region41: #{efficientnet_features_forward.15} parent=39 // pred_check
        %p321 = pneg %p106
      $region42: #{efficientnet_features_forward.15} parent=39 // pred_check_branch
        %323 = sbr.rel (%p321) target = $region44
      $region43: #{efficientnet_features_forward.15} parent=39 // pred_region
        %s324 = smul.u32 2, %s15
        %p325 = scmp.lt.s32.totalorder %s324, 3
        %s326 = scalar_select %p325, %s324, 3
        %s327 = smul.addr %s326, 4
        %s328 = scalar_lea.vmem %s3, %s327
      $region44: #{efficientnet_features_forward.15} parent=39 // pred_fallthru
        _
    $region40: #{efficientnet_features_forward.15} parent=5 // pred_fallthru
      _
  $region6: #{efficientnet_features_forward.15} parent=0 // loop_footer
    %s13 = sadd.s32 1, %s9
  $region7: #{efficientnet_features_forward.15} parent=0 // loop_footer_branch
    %8 = sbr.rel target = $region3
  $region8: #{efficientnet_features_forward.15} parent=0 // loop_exit
    _

// kernel: efficientnet_features_forward.13
$region0: #{efficientnet_features_forward.13}
  #allocation0 [shape = 'u32[]', space=smem, size = 0x4, offset = 0x4, fixed_abs, tag = 'smem constant byte address 0x4 - core index']
  #allocation1 [shape = 'u32[144,128]{1,0:T(1,128)}', space=vmem, size = 0x12000, scoped, tag = 'internal scratch']
  %s0 = inlined_call_operand.vmem [shape: bf16[6,2,5,4,128], index: 0, kind: input, shape index: {}]
  %s1 = inlined_call_operand.vmem [shape: f32[9,1,128], index: 1, kind: input, shape index: {}]
  %s2 = inlined_call_operand.vmem [shape: f32[1,128], index: 2, kind: input, shape index: {}]
  %s3 = inlined_call_operand.vmem [shape: f32[128,128], index: 3, kind: input, shape index: {}]
  %s4 = inlined_call_operand.vmem [shape: f32[1,128], index: 4, kind: input, shape index: {}]
  %s5 = inlined_call_operand.vmem [shape: f32[128,128], index: 5, kind: input, shape index: {}]
  %s6 = inlined_call_operand.vmem [shape: f32[1,128], index: 6, kind: input, shape index: {}]
  %s7 = inlined_call_operand.vmem [shape: bf16[2,4,4,128], index: 7, kind: output, shape index: {}]
  %s8 = sld [smem:[#allocation0]]
  $region102: #{efficientnet_features_forward.13} parent=0
    _
  %s10 = ssub.s32 1, %s8
  %s11 = scalar_select 0, %s10, %s8
  $region1: #{efficientnet_features_forward.13} parent=0
    #allocation2 [shape = 'u8[61440]{0}', space=vmem, size = 0xf000, scoped, tag = 'input window, operand 0']
    loop: start=0, step=1, limit=4
    $region2: #{efficientnet_features_forward.13} parent=1 // loop_pre_header
      _
    $region3: #{efficientnet_features_forward.13} parent=1 // loop_header
      %s13 = sphi 0, %s17
      %p14 = scmp.ge.s32.totalorder %s13, 4
      %s23 = sphi 0, %s25
      %s26 = sphi 0, %s23
      %s27 = sphi 0, %s26
      %s43 = sphi 0, %s27
      %s47 = sphi 0, %s47
      %s49 = sphi 0, %s47
      %s50 = sphi 0, %s49
      %s64 = sphi 0, %s50
      %s68 = sphi 0, %s68
      %s70 = sphi 0, %s68
      %s71 = sphi 0, %s70
      %s85 = sphi 0, %s71
      %s89 = sphi 0, %s89
      %s91 = sphi 0, %s89
      %s92 = sphi 0, %s91
      %s106 = sphi 0, %s92
      %s110 = sphi 0, %s110
      %s112 = sphi 0, %s110
      %s113 = sphi 0, %s112
      %s127 = sphi 0, %s113
      %s131 = sphi 0, %s131
      %s133 = sphi 0, %s131
      %s134 = sphi 0, %s133
      %s148 = sphi 0, %s134
      %s152 = sphi 0, %s152
      %s154 = sphi 0, %s152
      %s155 = sphi 0, %s154
      %s169 = sphi 0, %s155
      %s175 = sphi 0, %s177
      %s178 = sphi 0, %s175
      %s179 = sphi 0, %s178
      %s195 = sphi 0, %s179
    $region4: #{efficientnet_features_forward.13} parent=1 // loop_header_branch
      %16 = sbr.rel (%p14) target = $region8
    $region5: #{efficientnet_features_forward.13} parent=1 // loop_body
      %s18 = ssub.s32 %s13, 1
      %s19 = ssub.s32 %s13, 2
      %s20 = sadd.s32 %s13, 1
      %s21 = ssub.s32 %s13, %s20
      %p22 = scmp.eq.s32.totalorder %s21, 0
      %s24 = sadd.s32 %s23, 1
      %s25 = scalar_select %p22, %s23, %s24
      %p28 = pneg %p22
      %p29 = scmp.eq.s32.totalorder %s13, 1
      %p30 = por %p28, %p29
      %p31 = scmp.ne.s32.totalorder %s23, %s26
      %p32 = scmp.eq.s32.totalorder %s13, 0
      %p33 = por %p31, %p32
      %p34 = scmp.ne.s32.totalorder %s23, %s26
      %p35 = scmp.eq.s32.totalorder %s18, 1
      %p36 = por %p34, %p35
      %p37 = scmp.ne.s32.totalorder %s26, %s27
      %p38 = scmp.eq.s32.totalorder %s18, 0
      %p39 = por %p37, %p38
      %p40 = scmp.ne.s32.totalorder %s26, %s27
      %p41 = scmp.eq.s32.totalorder %s19, 1
      %p42 = por %p40, %p41
      %p44 = scmp.ne.s32.totalorder %s27, %s43
      %p45 = scmp.eq.s32.totalorder %s19, 0
      %p46 = por %p44, %p45
      %s48 = sadd.s32 %s47, 1
      %p51 = scmp.eq.s32.totalorder %s13, 1
      %p52 = scmp.ne.s32.totalorder %s47, %s49
      %p53 = scmp.eq.s32.totalorder %s13, 0
      %p54 = por %p52, %p53
      %p55 = scmp.ne.s32.totalorder %s47, %s49
      %p56 = scmp.eq.s32.totalorder %s18, 1
      %p57 = por %p55, %p56
      %p58 = scmp.ne.s32.totalorder %s49, %s50
      %p59 = scmp.eq.s32.totalorder %s18, 0
      %p60 = por %p58, %p59
      %p61 = scmp.ne.s32.totalorder %s49, %s50
      %p62 = scmp.eq.s32.totalorder %s19, 1
      %p63 = por %p61, %p62
      %p65 = scmp.ne.s32.totalorder %s50, %s64
      %p66 = scmp.eq.s32.totalorder %s19, 0
      %p67 = por %p65, %p66
      %s69 = sadd.s32 %s68, 1
      %p72 = scmp.eq.s32.totalorder %s13, 1
      %p73 = scmp.ne.s32.totalorder %s68, %s70
      %p74 = scmp.eq.s32.totalorder %s13, 0
      %p75 = por %p73, %p74
      %p76 = scmp.ne.s32.totalorder %s68, %s70
      %p77 = scmp.eq.s32.totalorder %s18, 1
      %p78 = por %p76, %p77
      %p79 = scmp.ne.s32.totalorder %s70, %s71
      %p80 = scmp.eq.s32.totalorder %s18, 0
      %p81 = por %p79, %p80
      %p82 = scmp.ne.s32.totalorder %s70, %s71
      %p83 = scmp.eq.s32.totalorder %s19, 1
      %p84 = por %p82, %p83
      %p86 = scmp.ne.s32.totalorder %s71, %s85
      %p87 = scmp.eq.s32.totalorder %s19, 0
      %p88 = por %p86, %p87
      %s90 = sadd.s32 %s89, 1
      %p93 = scmp.eq.s32.totalorder %s13, 1
      %p94 = scmp.ne.s32.totalorder %s89, %s91
      %p95 = scmp.eq.s32.totalorder %s13, 0
      %p96 = por %p94, %p95
      %p97 = scmp.ne.s32.totalorder %s89, %s91
      %p98 = scmp.eq.s32.totalorder %s18, 1
      %p99 = por %p97, %p98
      %p100 = scmp.ne.s32.totalorder %s91, %s92
      %p101 = scmp.eq.s32.totalorder %s18, 0
      %p102 = por %p100, %p101
      %p103 = scmp.ne.s32.totalorder %s91, %s92
      %p104 = scmp.eq.s32.totalorder %s19, 1
      %p105 = por %p103, %p104
      %p107 = scmp.ne.s32.totalorder %s92, %s106
      %p108 = scmp.eq.s32.totalorder %s19, 0
      %p109 = por %p107, %p108
      %s111 = sadd.s32 %s110, 1
      %p114 = scmp.eq.s32.totalorder %s13, 1
      %p115 = scmp.ne.s32.totalorder %s110, %s112
      %p116 = scmp.eq.s32.totalorder %s13, 0
      %p117 = por %p115, %p116
      %p118 = scmp.ne.s32.totalorder %s110, %s112
      %p119 = scmp.eq.s32.totalorder %s18, 1
      %p120 = por %p118, %p119
      %p121 = scmp.ne.s32.totalorder %s112, %s113
      %p122 = scmp.eq.s32.totalorder %s18, 0
      %p123 = por %p121, %p122
      %p124 = scmp.ne.s32.totalorder %s112, %s113
      %p125 = scmp.eq.s32.totalorder %s19, 1
      %p126 = por %p124, %p125
      %p128 = scmp.ne.s32.totalorder %s113, %s127
      %p129 = scmp.eq.s32.totalorder %s19, 0
      %p130 = por %p128, %p129
      %s132 = sadd.s32 %s131, 1
      %p135 = scmp.eq.s32.totalorder %s13, 1
      %p136 = scmp.ne.s32.totalorder %s131, %s133
      %p137 = scmp.eq.s32.totalorder %s13, 0
      %p138 = por %p136, %p137
      %p139 = scmp.ne.s32.totalorder %s131, %s133
      %p140 = scmp.eq.s32.totalorder %s18, 1
      %p141 = por %p139, %p140
      %p142 = scmp.ne.s32.totalorder %s133, %s134
      %p143 = scmp.eq.s32.totalorder %s18, 0
      %p144 = por %p142, %p143
      %p145 = scmp.ne.s32.totalorder %s133, %s134
      %p146 = scmp.eq.s32.totalorder %s19, 1
      %p147 = por %p145, %p146
      %p149 = scmp.ne.s32.totalorder %s134, %s148
      %p150 = scmp.eq.s32.totalorder %s19, 0
      %p151 = por %p149, %p150
      %s153 = sadd.s32 %s152, 1
      %p156 = scmp.eq.s32.totalorder %s13, 1
      %p157 = scmp.ne.s32.totalorder %s152, %s154
      %p158 = scmp.eq.s32.totalorder %s13, 0
      %p159 = por %p157, %p158
      %p160 = scmp.ne.s32.totalorder %s152, %s154
      %p161 = scmp.eq.s32.totalorder %s18, 1
      %p162 = por %p160, %p161
      %p163 = scmp.ne.s32.totalorder %s154, %s155
      %p164 = scmp.eq.s32.totalorder %s18, 0
      %p165 = por %p163, %p164
      %p166 = scmp.ne.s32.totalorder %s154, %s155
      %p167 = scmp.eq.s32.totalorder %s19, 1
      %p168 = por %p166, %p167
      %p170 = scmp.ne.s32.totalorder %s155, %s169
      %p171 = scmp.eq.s32.totalorder %s19, 0
      %p172 = por %p170, %p171
      %s173 = ssub.s32 %s13, %s20
      %p174 = scmp.eq.s32.totalorder %s173, 0
      %s176 = sadd.s32 %s175, 1
      %s177 = scalar_select %p174, %s175, %s176
      %p180 = pneg %p174
      %p181 = scmp.eq.s32.totalorder %s13, 1
      %p182 = por %p180, %p181
      %p183 = scmp.ne.s32.totalorder %s175, %s178
      %p184 = scmp.eq.s32.totalorder %s13, 0
      %p185 = por %p183, %p184
      %p186 = scmp.ne.s32.totalorder %s175, %s178
      %p187 = scmp.eq.s32.totalorder %s18, 1
      %p188 = por %p186, %p187
      %p189 = scmp.ne.s32.totalorder %s178, %s179
      %p190 = scmp.eq.s32.totalorder %s18, 0
      %p191 = por %p189, %p190
      %p192 = scmp.ne.s32.totalorder %s178, %s179
      %p193 = scmp.eq.s32.totalorder %s19, 1
      %p194 = por %p192, %p193
      %p196 = scmp.ne.s32.totalorder %s179, %s195
      %p197 = scmp.eq.s32.totalorder %s19, 0
      %p198 = por %p196, %p197
      %p199 = scmp.le.s32.totalorder 1, %s13
      %p200 = scmp.lt.s32.totalorder %s13, 3
      %p201 = pnand %p199, %p200
      %p202 = pneg %p201
      // Predicated region
      $region9: #{efficientnet_features_forward.13} parent=5 // pred_check
        _
      $region10: #{efficientnet_features_forward.13} parent=5 // pred_check_branch
        %204 = sbr.rel (%p201) target = $region12
      $region11: #{efficientnet_features_forward.13} parent=5 // pred_region
        %s205 = ssub.s32 %s13, 1
        // Predicated region
        $region13: #{efficientnet_features_forward.13} parent=11 // pred_check
          %p206 = pneg %p60
        $region14: #{efficientnet_features_forward.13} parent=11 // pred_check_branch
          %208 = sbr.rel (%p206) target = $region16
        $region15: #{efficientnet_features_forward.13} parent=11 // pred_region
          _
        $region16: #{efficientnet_features_forward.13} parent=11 // pred_fallthru
          _
        // Predicated region
        $region17: #{efficientnet_features_forward.13} parent=11 // pred_check
          %p209 = pneg %p81
        $region18: #{efficientnet_features_forward.13} parent=11 // pred_check_branch
          %211 = sbr.rel (%p209) target = $region20
        $region19: #{efficientnet_features_forward.13} parent=11 // pred_region
          _
        $region20: #{efficientnet_features_forward.13} parent=11 // pred_fallthru
          _
        // Predicated region
        $region21: #{efficientnet_features_forward.13} parent=11 // pred_check
          %p212 = pneg %p102
        $region22: #{efficientnet_features_forward.13} parent=11 // pred_check_branch
          %214 = sbr.rel (%p212) target = $region24
        $region23: #{efficientnet_features_forward.13} parent=11 // pred_region
          _
        $region24: #{efficientnet_features_forward.13} parent=11 // pred_fallthru
          _
        // Predicated region
        $region25: #{efficientnet_features_forward.13} parent=11 // pred_check
          %p215 = pneg %p123
        $region26: #{efficientnet_features_forward.13} parent=11 // pred_check_branch
          %217 = sbr.rel (%p215) target = $region28
        $region27: #{efficientnet_features_forward.13} parent=11 // pred_region
          _
        $region28: #{efficientnet_features_forward.13} parent=11 // pred_fallthru
          _
        // Predicated region
        $region29: #{efficientnet_features_forward.13} parent=11 // pred_check
          %p218 = pneg %p144
        $region30: #{efficientnet_features_forward.13} parent=11 // pred_check_branch
          %220 = sbr.rel (%p218) target = $region32
        $region31: #{efficientnet_features_forward.13} parent=11 // pred_region
          _
        $region32: #{efficientnet_features_forward.13} parent=11 // pred_fallthru
          _
        // Predicated region
        $region33: #{efficientnet_features_forward.13} parent=11 // pred_check
          %p221 = pneg %p165
        $region34: #{efficientnet_features_forward.13} parent=11 // pred_check_branch
          %223 = sbr.rel (%p221) target = $region36
        $region35: #{efficientnet_features_forward.13} parent=11 // pred_region
          _
        $region36: #{efficientnet_features_forward.13} parent=11 // pred_fallthru
          _
      $region12: #{efficientnet_features_forward.13} parent=5 // pred_fallthru
        _
      %p224 = scmp.lt.s32.totalorder %s13, 2
      // Predicated region
      $region37: #{efficientnet_features_forward.13} parent=5 // pred_check
        %p225 = pneg %p224
      $region38: #{efficientnet_features_forward.13} parent=5 // pred_check_branch
        %227 = sbr.rel (%p225) target = $region40
      $region39: #{efficientnet_features_forward.13} parent=5 // pred_region
        // Predicated region
        $region41: #{efficientnet_features_forward.13} parent=39 // pred_check
          %p228 = pneg %p33
        $region42: #{efficientnet_features_forward.13} parent=39 // pred_check_branch
          %230 = sbr.rel (%p228) target = $region44
        $region43: #{efficientnet_features_forward.13} parent=39 // pred_region
          %s231 = sand.u32 %s23, 1
          %s232 = sand.u32 %s23, 1
          %s233 = smul.addr %s232, 60
          %s234 = scalar_lea.vmem [#allocation2], %s233
          %s235 = smul.addr %s13, 5
          %s236 = smul.addr %s235, 2
          %s237 = scalar_lea.vmem %s0, %s236
          // Predicated region
          $region45: #{efficientnet_features_forward.13} parent=43 // pred_check
            _
          $region46: #{efficientnet_features_forward.13} parent=43 // pred_check_branch
            %239 = sbr.rel (0) target = $region48
          $region47: #{efficientnet_features_forward.13} parent=43 // pred_region
            // Predicated region
            $region49: #{efficientnet_features_forward.13} parent=47 // pred_check
              _
            $region50: #{efficientnet_features_forward.13} parent=47 // pred_check_branch
              %241 = sbr.rel target = $region52
            $region51: #{efficientnet_features_forward.13} parent=47 // pred_region
              // Predicated region
              $region64: #{efficientnet_features_forward.13} parent=51 // pred_check
                _
              $region65: #{efficientnet_features_forward.13} parent=51 // pred_check_branch
                %315 = sbr.rel (0) target = $region67
              $region66: #{efficientnet_features_forward.13} parent=51 // pred_region
                loop: start=0, step=1, limit=1
                $region68: #{efficientnet_features_forward.13} parent=66 // loop_pre_header
                  _
                $region69: #{efficientnet_features_forward.13} parent=66 // loop_header
                  %s317 = sphi 0, %s321
                  %p318 = scmp.ge.s32.totalorder %s317, 1
                  %s322 = sphi %s237, %s237
                  %s323 = sphi %s234, %s234
                $region70: #{efficientnet_features_forward.13} parent=66 // loop_header_branch
                  %320 = sbr.rel (%p318) target = $region74
                $region71: #{efficientnet_features_forward.13} parent=66 // loop_body
                  _
                $region72: #{efficientnet_features_forward.13} parent=66 // loop_footer
                  %s321 = sadd.s32 1, %s317
                $region73: #{efficientnet_features_forward.13} parent=66 // loop_footer_branch
                  %316 = sbr.rel target = $region69
                $region74: #{efficientnet_features_forward.13} parent=66 // loop_exit
                  _
                %s325 = ssub.s32 4, 1
                loop: start=0, step=1, limit=1
                $region75: #{efficientnet_features_forward.13} parent=66 // loop_pre_header
                  _
                $region76: #{efficientnet_features_forward.13} parent=66 // loop_header
                  %s327 = sphi 0, %s331
                  %p328 = scmp.ge.s32.totalorder %s327, 1
                  %s332 = sphi %s237, %s237
                  %s333 = sphi %s234, %s234
                $region77: #{efficientnet_features_forward.13} parent=66 // loop_header_branch
                  %330 = sbr.rel (%p328) target = $region81
                $region78: #{efficientnet_features_forward.13} parent=66 // loop_body
                  %v334 = vld [vmem:[%s332] sm:%s325]
                  %335 = vst [vmem:[%s333] sm:%s325] %v334
                  %v336 = vld [vmem:[%s332 + $0x2] sm:%s325]
                  %337 = vst [vmem:[%s333 + $0x2] sm:%s325] %v336
                  %v338 = vld [vmem:[%s332 + $0x4] sm:%s325]
                  %339 = vst [vmem:[%s333 + $0x4] sm:%s325] %v338
                  %v340 = vld [vmem:[%s332 + $0x6] sm:%s325]
                  %341 = vst [vmem:[%s333 + $0x6] sm:%s325] %v340
                  %v342 = vld [vmem:[%s332 + $0x8] sm:%s325]
                  %343 = vst [vmem:[%s333 + $0x8] sm:%s325] %v342
                  %v344 = vld [vmem:[%s332 + $0x14] sm:%s325]
                  %345 = vst [vmem:[%s333 + $0xa] sm:%s325] %v344
                  %v346 = vld [vmem:[%s332 + $0x16] sm:%s325]
                  %347 = vst [vmem:[%s333 + $0xc] sm:%s325] %v346
                  %v348 = vld [vmem:[%s332 + $0x18] sm:%s325]
                  %349 = vst [vmem:[%s333 + $0xe] sm:%s325] %v348
                  %v350 = vld [vmem:[%s332 + $0x1a] sm:%s325]
                  %351 = vst [vmem:[%s333 + $0x10] sm:%s325] %v350
                  %v352 = vld [vmem:[%s332 + $0x1c] sm:%s325]
                  %353 = vst [vmem:[%s333 + $0x12] sm:%s325] %v352
                  %v354 = vld [vmem:[%s332 + $0x28] sm:%s325]
                  %355 = vst [vmem:[%s333 + $0x14] sm:%s325] %v354
                  %v356 = vld [vmem:[%s332 + $0x2a] sm:%s325]
                  %357 = vst [vmem:[%s333 + $0x16] sm:%s325] %v356
                  %v358 = vld [vmem:[%s332 + $0x2c] sm:%s325]
                  %359 = vst [vmem:[%s333 + $0x18] sm:%s325] %v358
                  %v360 = vld [vmem:[%s332 + $0x2e] sm:%s325]
                  %361 = vst [vmem:[%s333 + $0x1a] sm:%s325] %v360
                  %v362 = vld [vmem:[%s332 + $0x30] sm:%s325]
                  %363 = vst [vmem:[%s333 + $0x1c] sm:%s325] %v362
                  %v364 = vld [vmem:[%s332 + $0x3c] sm:%s325]
                  %365 = vst [vmem:[%s333 + $0x1e] sm:%s325] %v364
                  %v366 = vld [vmem:[%s332 + $0x3e] sm:%s325]
                  %367 = vst [vmem:[%s333 + $0x20] sm:%s325] %v366
                  %v368 = vld [vmem:[%s332 + $0x40] sm:%s325]
                  %369 = vst [vmem:[%s333 + $0x22] sm:%s325] %v368
                  %v370 = vld [vmem:[%s332 + $0x42] sm:%s325]
                  %371 = vst [vmem:[%s333 + $0x24] sm:%s325] %v370
                  %v372 = vld [vmem:[%s332 + $0x44] sm:%s325]
                  %373 = vst [vmem:[%s333 + $0x26] sm:%s325] %v372
                  %v374 = vld [vmem:[%s332 + $0x50] sm:%s325]
                  %375 = vst [vmem:[%s333 + $0x28] sm:%s325] %v374
                  %v376 = vld [vmem:[%s332 + $0x52] sm:%s325]
                  %377 = vst [vmem:[%s333 + $0x2a] sm:%s325] %v376
                  %v378 = vld [vmem:[%s332 + $0x54] sm:%s325]
                  %379 = vst [vmem:[%s333 + $0x2c] sm:%s325] %v378
                  %v380 = vld [vmem:[%s332 + $0x56] sm:%s325]
                  %381 = vst [vmem:[%s333 + $0x2e] sm:%s325] %v380
                  %v382 = vld [vmem:[%s332 + $0x58] sm:%s325]
                  %383 = vst [vmem:[%s333 + $0x30] sm:%s325] %v382
                  %v384 = vld [vmem:[%s332 + $0x64] sm:%s325]
                  %385 = vst [vmem:[%s333 + $0x32] sm:%s325] %v384
                  %v386 = vld [vmem:[%s332 + $0x66] sm:%s325]
                  %387 = vst [vmem:[%s333 + $0x34] sm:%s325] %v386
                  %v388 = vld [vmem:[%s332 + $0x68] sm:%s325]
                  %389 = vst [vmem:[%s333 + $0x36] sm:%s325] %v388
                  %v390 = vld [vmem:[%s332 + $0x6a] sm:%s325]
                  %391 = vst [vmem:[%s333 + $0x38] sm:%s325] %v390
                  %v392 = vld [vmem:[%s332 + $0x6c] sm:%s325]
                  %393 = vst [vmem:[%s333 + $0x3a] sm:%s325] %v392
                $region79: #{efficientnet_features_forward.13} parent=66 // loop_footer
                  %s331 = sadd.s32 1, %s327
                $region80: #{efficientnet_features_forward.13} parent=66 // loop_footer_branch
                  %326 = sbr.rel target = $region76
                $region81: #{efficientnet_features_forward.13} parent=66 // loop_exit
                  _
              $region67: #{efficientnet_features_forward.13} parent=51 // pred_fallthru
                _
            $region52: #{efficientnet_features_forward.13} parent=47 // pred_fallthru
              _
            // Predicated region
            $region53: #{efficientnet_features_forward.13} parent=47 // pred_check
              _
            $region54: #{efficientnet_features_forward.13} parent=47 // pred_check_branch
              %243 = sbr.rel (0) target = $region56
            $region55: #{efficientnet_features_forward.13} parent=47 // pred_region
              %s245 = ssub.s32 4, 1
              loop: start=0, step=1, limit=1
              $region57: #{efficientnet_features_forward.13} parent=55 // loop_pre_header
                _
              $region58: #{efficientnet_features_forward.13} parent=55 // loop_header
                %s247 = sphi 0, %s251
                %p248 = scmp.ge.s32.totalorder %s247, 1
                %s252 = sphi %s237, %s237
                %s253 = sphi %s234, %s234
              $region59: #{efficientnet_features_forward.13} parent=55 // loop_header_branch
                %250 = sbr.rel (%p248) target = $region63
              $region60: #{efficientnet_features_forward.13} parent=55 // loop_body
                %v254 = vld [vmem:[%s252] sm:%s245]
                %255 = vst [vmem:[%s253] sm:%s245] %v254
                %v256 = vld [vmem:[%s252 + $0x2] sm:%s245]
                %257 = vst [vmem:[%s253 + $0x2] sm:%s245] %v256
                %v258 = vld [vmem:[%s252 + $0x4] sm:%s245]
                %259 = vst [vmem:[%s253 + $0x4] sm:%s245] %v258
                %v260 = vld [vmem:[%s252 + $0x6] sm:%s245]
                %261 = vst [vmem:[%s253 + $0x6] sm:%s245] %v260
                %v262 = vld [vmem:[%s252 + $0x8] sm:%s245]
                %263 = vst [vmem:[%s253 + $0x8] sm:%s245] %v262
                %v264 = vld [vmem:[%s252 + $0x14] sm:%s245]
                %265 = vst [vmem:[%s253 + $0xa] sm:%s245] %v264
                %v266 = vld [vmem:[%s252 + $0x16] sm:%s245]
                %267 = vst [vmem:[%s253 + $0xc] sm:%s245] %v266
                %v268 = vld [vmem:[%s252 + $0x18] sm:%s245]
                %269 = vst [vmem:[%s253 + $0xe] sm:%s245] %v268
                %v270 = vld [vmem:[%s252 + $0x1a] sm:%s245]
                %271 = vst [vmem:[%s253 + $0x10] sm:%s245] %v270
                %v272 = vld [vmem:[%s252 + $0x1c] sm:%s245]
                %273 = vst [vmem:[%s253 + $0x12] sm:%s245] %v272
                %v274 = vld [vmem:[%s252 + $0x28] sm:%s245]
                %275 = vst [vmem:[%s253 + $0x14] sm:%s245] %v274
                %v276 = vld [vmem:[%s252 + $0x2a] sm:%s245]
                %277 = vst [vmem:[%s253 + $0x16] sm:%s245] %v276
                %v278 = vld [vmem:[%s252 + $0x2c] sm:%s245]
                %279 = vst [vmem:[%s253 + $0x18] sm:%s245] %v278
                %v280 = vld [vmem:[%s252 + $0x2e] sm:%s245]
                %281 = vst [vmem:[%s253 + $0x1a] sm:%s245] %v280
                %v282 = vld [vmem:[%s252 + $0x30] sm:%s245]
                %283 = vst [vmem:[%s253 + $0x1c] sm:%s245] %v282
                %v284 = vld [vmem:[%s252 + $0x3c] sm:%s245]
                %285 = vst [vmem:[%s253 + $0x1e] sm:%s245] %v284
                %v286 = vld [vmem:[%s252 + $0x3e] sm:%s245]
                %287 = vst [vmem:[%s253 + $0x20] sm:%s245] %v286
                %v288 = vld [vmem:[%s252 + $0x40] sm:%s245]
                %289 = vst [vmem:[%s253 + $0x22] sm:%s245] %v288
                %v290 = vld [vmem:[%s252 + $0x42] sm:%s245]
                %291 = vst [vmem:[%s253 + $0x24] sm:%s245] %v290
                %v292 = vld [vmem:[%s252 + $0x44] sm:%s245]
                %293 = vst [vmem:[%s253 + $0x26] sm:%s245] %v292
                %v294 = vld [vmem:[%s252 + $0x50] sm:%s245]
                %295 = vst [vmem:[%s253 + $0x28] sm:%s245] %v294
                %v296 = vld [vmem:[%s252 + $0x52] sm:%s245]
                %297 = vst [vmem:[%s253 + $0x2a] sm:%s245] %v296
                %v298 = vld [vmem:[%s252 + $0x54] sm:%s245]
                %299 = vst [vmem:[%s253 + $0x2c] sm:%s245] %v298
                %v300 = vld [vmem:[%s252 + $0x56] sm:%s245]
                %301 = vst [vmem:[%s253 + $0x2e] sm:%s245] %v300
                %v302 = vld [vmem:[%s252 + $0x58] sm:%s245]
                %303 = vst [vmem:[%s253 + $0x30] sm:%s245] %v302
                %v304 = vld [vmem:[%s252 + $0x64] sm:%s245]
                %305 = vst [vmem:[%s253 + $0x32] sm:%s245] %v304
                %v306 = vld [vmem:[%s252 + $0x66] sm:%s245]
                %307 = vst [vmem:[%s253 + $0x34] sm:%s245] %v306
                %v308 = vld [vmem:[%s252 + $0x68] sm:%s245]
                %309 = vst [vmem:[%s253 + $0x36] sm:%s245] %v308
                %v310 = vld [vmem:[%s252 + $0x6a] sm:%s245]
                %311 = vst [vmem:[%s253 + $0x38] sm:%s245] %v310
                %v312 = vld [vmem:[%s252 + $0x6c] sm:%s245]
                %313 = vst [vmem:[%s253 + $0x3a] sm:%s245] %v312
              $region61: #{efficientnet_features_forward.13} parent=55 // loop_footer
                %s251 = sadd.s32 1, %s247
              $region62: #{efficientnet_features_forward.13} parent=55 // loop_footer_branch
                %246 = sbr.rel target = $region58
              $region63: #{efficientnet_features_forward.13} parent=55 // loop_exit
                _
            $region56: #{efficientnet_features_forward.13} parent=47 // pred_fallthru
              _
          $region48: #{efficientnet_features_forward.13} parent=43 // pred_fallthru
            _
          %394 = vnop
        $region44: #{efficientnet_features_forward.13} parent=39 // pred_fallthru
          _
      $region40: #{efficientnet_features_forward.13} parent=5 // pred_fallthru
        _
      %p395 = scmp.le.s32.totalorder 1, %s13
      %p396 = scmp.lt.s32.totalorder %s13, 3
      %p397 = pnand %p395, %p396
      %p398 = pneg %p397
      // Predicated region
      $region82: #{efficientnet_features_forward.13} parent=5 // pred_check
        _
      $region83: #{efficientnet_features_forward.13} parent=5 // pred_check_branch
        %400 = sbr.rel (%p397) target = $region85
      $region84: #{efficientnet_features_forward.13} parent=5 // pred_region
        %s401 = ssub.s32 %s13, 1
        %s402 = sand.u32 %s26, 1
        %s403 = sand.u32 %s26, 1
        %s404 = smul.addr %s403, 60
        %s405 = scalar_lea.vmem [#allocation2], %s404
        // Predicated region
        $region86: #{efficientnet_features_forward.13} parent=84 // pred_check
          %p406 = pneg %p39
        $region87: #{efficientnet_features_forward.13} parent=84 // pred_check_branch
          %408 = sbr.rel (%p406) target = $region89
        $region88: #{efficientnet_features_forward.13} parent=84 // pred_region
          _
        $region89: #{efficientnet_features_forward.13} parent=84 // pred_fallthru
          _
        %s409 = sand.u32 %s26, 1
        %s410 = sand.u32 %s26, 1
        %s411 = smul.addr %s410, 60
        %s412 = scalar_lea.vmem [#allocation2], %s411
        %p413 = pneg %p39
        %p414 = pneg %p36
        %p415 = pneg %p60
        %p416 = pneg %p57
        %p417 = pneg %p81
        %p418 = pneg %p78
        %p419 = pneg %p102
        %p420 = pneg %p99
        %p421 = pneg %p123
        %p422 = pneg %p120
        %p423 = pneg %p144
        %p424 = pneg %p141
        %p425 = pneg %p165
        %p426 = pneg %p162
        %p427 = pneg %p191
        %p428 = pneg %p188
        %p429 = scmp.lt.s32.totalorder %s18, 1
        %s430 = scalar_select %p429, %s18, 1
        %s431 = smul.addr %s430, 4
        %s432 = smul.addr %s431, 2
        %s433 = scalar_lea.vmem %s7, %s432
        %p434 = scmp.lt.s32.totalorder %s18, 1
        %s435 = scalar_select %p434, %s18, 1
        %s436 = smul.addr %s435, 4
        %s437 = smul.addr %s436, 2
        %s438 = scalar_lea.vmem %s7, %s437
        %v439 = vld [vmem:[%s405] sm:$0x3]
        %v440 = vld [vmem:[%s405 + $0x2] sm:$0x3]
        %v441 = vld [vmem:[%s405 + $0x4] sm:$0x3]
        %v442 = vld [vmem:[%s405 + $0x6] sm:$0x3]
        %v443 = vunpack.c.l.bf16 %v439
        %v444 = vunpack.c.l.bf16 %v440
        %v445 = vunpack.c.l.bf16 %v441
        %v446 = vunpack.c.l.bf16 %v442
        %v447 = vld [vmem:[%s1] sm:$0x1]
        %v449 = vlaneseq
        %v450 = vshrl.u32 %v449, 7
        %v451 = vsub.s32 0, %v450
        %v452 = vrot.slane %v447, %v451
        %v454 = vmul.f32 %v443, %v452
        %v455 = vmul.f32 %v444, %v452
        %v456 = vmul.f32 %v445, %v452
        %v457 = vmul.f32 %v446, %v452
        %v458 = vadd.f32 %v454, 0.0
        %v459 = vadd.f32 %v455, 0.0
        %v460 = vadd.f32 %v456, 0.0
        %v461 = vadd.f32 %v457, 0.0
        %s462 = scalar_lea.vmem %s405, 20 [#allocation2]
        %v463 = vld [vmem:[%s462] sm:$0x3]
        %v464 = vld [vmem:[%s462 + $0x2] sm:$0x3]
        %v465 = vld [vmem:[%s462 + $0x4] sm:$0x3]
        %v466 = vld [vmem:[%s462 + $0x6] sm:$0x3]
        %v467 = vunpack.c.l.bf16 %v463
        %v468 = vunpack.c.l.bf16 %v464
        %v469 = vunpack.c.l.bf16 %v465
        %v470 = vunpack.c.l.bf16 %v466
        %s471 = scalar_lea.vmem %s1, 1
        %v472 = vld [vmem:[%s471] sm:$0x1]
        %v474 = vlaneseq
        %v475 = vshrl.u32 %v474, 7
        %v476 = vsub.s32 0, %v475
        %v477 = vrot.slane %v472, %v476
        %v479 = vmul.f32 %v467, %v477
        %v480 = vmul.f32 %v468, %v477
        %v481 = vmul.f32 %v469, %v477
        %v482 = vmul.f32 %v470, %v477
        %v483 = vadd.f32 %v458, %v479
        %v484 = vadd.f32 %v459, %v480
        %v485 = vadd.f32 %v460, %v481
        %v486 = vadd.f32 %v461, %v482
        %s487 = scalar_lea.vmem %s405, 40 [#allocation2]
        %v488 = vld [vmem:[%s487] sm:$0x3]
        %v489 = vld [vmem:[%s487 + $0x2] sm:$0x3]
        %v490 = vld [vmem:[%s487 + $0x4] sm:$0x3]
        %v491 = vld [vmem:[%s487 + $0x6] sm:$0x3]
        %v492 = vunpack.c.l.bf16 %v488
        %v493 = vunpack.c.l.bf16 %v489
        %v494 = vunpack.c.l.bf16 %v490
        %v495 = vunpack.c.l.bf16 %v491
        %s496 = scalar_lea.vmem %s1, 2
        %v497 = vld [vmem:[%s496] sm:$0x1]
        %v499 = vlaneseq
        %v500 = vshrl.u32 %v499, 7
        %v501 = vsub.s32 0, %v500
        %v502 = vrot.slane %v497, %v501
        %v504 = vmul.f32 %v492, %v502
        %v505 = vmul.f32 %v493, %v502
        %v506 = vmul.f32 %v494, %v502
        %v507 = vmul.f32 %v495, %v502
        %v508 = vadd.f32 %v483, %v504
        %v509 = vadd.f32 %v484, %v505
        %v510 = vadd.f32 %v485, %v506
        %v511 = vadd.f32 %v486, %v507
        %s512 = scalar_lea.vmem %s405, 10 [#allocation2]
        %v513 = vld [vmem:[%s512] sm:$0x3]
        %v514 = vld [vmem:[%s512 + $0x2] sm:$0x3]
        %v515 = vld [vmem:[%s512 + $0x4] sm:$0x3]
        %v516 = vld [vmem:[%s512 + $0x6] sm:$0x3]
        %v517 = vunpack.c.l.bf16 %v513
        %v518 = vunpack.c.l.bf16 %v514
        %v519 = vunpack.c.l.bf16 %v515
        %v520 = vunpack.c.l.bf16 %v516
        %s521 = scalar_lea.vmem %s1, 3
        %v522 = vld [vmem:[%s521] sm:$0x1]
        %v524 = vlaneseq
        %v525 = vshrl.u32 %v524, 7
        %v526 = vsub.s32 0, %v525
        %v527 = vrot.slane %v522, %v526
        %v529 = vmul.f32 %v517, %v527
        %v530 = vmul.f32 %v518, %v527
        %v531 = vmul.f32 %v519, %v527
        %v532 = vmul.f32 %v520, %v527
        %v533 = vadd.f32 %v508, %v529
        %v534 = vadd.f32 %v509, %v530
        %v535 = vadd.f32 %v510, %v531
        %v536 = vadd.f32 %v511, %v532
        %s537 = scalar_lea.vmem %s405, 30 [#allocation2]
        %v538 = vld [vmem:[%s537] sm:$0x3]
        %v539 = vld [vmem:[%s537 + $0x2] sm:$0x3]
        %v540 = vld [vmem:[%s537 + $0x4] sm:$0x3]
        %v541 = vld [vmem:[%s537 + $0x6] sm:$0x3]
        %v542 = vunpack.c.l.bf16 %v538
        %v543 = vunpack.c.l.bf16 %v539
        %v544 = vunpack.c.l.bf16 %v540
        %v545 = vunpack.c.l.bf16 %v541
        %s546 = scalar_lea.vmem %s1, 4
        %v547 = vld [vmem:[%s546] sm:$0x1]
        %v549 = vlaneseq
        %v550 = vshrl.u32 %v549, 7
        %v551 = vsub.s32 0, %v550
        %v552 = vrot.slane %v547, %v551
        %v554 = vmul.f32 %v542, %v552
        %v555 = vmul.f32 %v543, %v552
        %v556 = vmul.f32 %v544, %v552
        %v557 = vmul.f32 %v545, %v552
        %v558 = vadd.f32 %v533, %v554
        %v559 = vadd.f32 %v534, %v555
        %v560 = vadd.f32 %v535, %v556
        %v561 = vadd.f32 %v536, %v557
        %s562 = scalar_lea.vmem %s405, 50 [#allocation2]
        %v563 = vld [vmem:[%s562] sm:$0x3]
        %v564 = vld [vmem:[%s562 + $0x2] sm:$0x3]
        %v565 = vld [vmem:[%s562 + $0x4] sm:$0x3]
        %v566 = vld [vmem:[%s562 + $0x6] sm:$0x3]
        %v567 = vunpack.c.l.bf16 %v563
        %v568 = vunpack.c.l.bf16 %v564
        %v569 = vunpack.c.l.bf16 %v565
        %v570 = vunpack.c.l.bf16 %v566
        %s571 = scalar_lea.vmem %s1, 5
        %v572 = vld [vmem:[%s571] sm:$0x1]
        %v574 = vlaneseq
        %v575 = vshrl.u32 %v574, 7
        %v576 = vsub.s32 0, %v575
        %v577 = vrot.slane %v572, %v576
        %v579 = vmul.f32 %v567, %v577
        %v580 = vmul.f32 %v568, %v577
        %v581 = vmul.f32 %v569, %v577
        %v582 = vmul.f32 %v570, %v577
        %v583 = vadd.f32 %v558, %v579
        %v584 = vadd.f32 %v559, %v580
        %v585 = vadd.f32 %v560, %v581
        %v586 = vadd.f32 %v561, %v582
        %s587 = scalar_lea.vmem %s405, 2 [#allocation2]
        %v588 = vld [vmem:[%s587] sm:$0x3]
        %v589 = vld [vmem:[%s587 + $0x2] sm:$0x3]
        %v590 = vld [vmem:[%s587 + $0x4] sm:$0x3]
        %v591 = vld [vmem:[%s587 + $0x6] sm:$0x3]
        %v592 = vunpack.c.l.bf16 %v588
        %v593 = vunpack.c.l.bf16 %v589
        %v594 = vunpack.c.l.bf16 %v590
        %v595 = vunpack.c.l.bf16 %v591
        %s596 = scalar_lea.vmem %s1, 6
        %v597 = vld [vmem:[%s596] sm:$0x1]
        %v599 = vlaneseq
        %v600 = vshrl.u32 %v599, 7
        %v601 = vsub.s32 0, %v600
        %v602 = vrot.slane %v597, %v601
        %v604 = vmul.f32 %v592, %v602
        %v605 = vmul.f32 %v593, %v602
        %v606 = vmul.f32 %v594, %v602
        %v607 = vmul.f32 %v595, %v602
        %v608 = vadd.f32 %v583, %v604
        %v609 = vadd.f32 %v584, %v605
        %v610 = vadd.f32 %v585, %v606
        %v611 = vadd.f32 %v586, %v607
        %s612 = scalar_lea.vmem %s405, 22 [#allocation2]
        %v613 = vld [vmem:[%s612] sm:$0x3]
        %v614 = vld [vmem:[%s612 + $0x2] sm:$0x3]
        %v615 = vld [vmem:[%s612 + $0x4] sm:$0x3]
        %v616 = vld [vmem:[%s612 + $0x6] sm:$0x3]
        %v617 = vunpack.c.l.bf16 %v613
        %v618 = vunpack.c.l.bf16 %v614
        %v619 = vunpack.c.l.bf16 %v615
        %v620 = vunpack.c.l.bf16 %v616
        %s621 = scalar_lea.vmem %s1, 7
        %v622 = vld [vmem:[%s621] sm:$0x1]
        %v624 = vlaneseq
        %v625 = vshrl.u32 %v624, 7
        %v626 = vsub.s32 0, %v625
        %v627 = vrot.slane %v622, %v626
        %v629 = vmul.f32 %v617, %v627
        %v630 = vmul.f32 %v618, %v627
        %v631 = vmul.f32 %v619, %v627
        %v632 = vmul.f32 %v620, %v627
        %v633 = vadd.f32 %v608, %v629
        %v634 = vadd.f32 %v609, %v630
        %v635 = vadd.f32 %v610, %v631
        %v636 = vadd.f32 %v611, %v632
        %s637 = scalar_lea.vmem %s405, 42 [#allocation2]
        %v638 = vld [vmem:[%s637] sm:$0x3]
        %v639 = vld [vmem:[%s637 + $0x2] sm:$0x3]
        %v640 = vld [vmem:[%s637 + $0x4] sm:$0x3]
        %v641 = vld [vmem:[%s637 + $0x6] sm:$0x3]
        %v642 = vunpack.c.l.bf16 %v638
        %v643 = vunpack.c.l.bf16 %v639
        %v644 = vunpack.c.l.bf16 %v640
        %v645 = vunpack.c.l.bf16 %v641
        %s646 = scalar_lea.vmem %s1, 8
        %v647 = vld [vmem:[%s646] sm:$0x1]
        %v649 = vlaneseq
        %v650 = vshrl.u32 %v649, 7
        %v651 = vsub.s32 0, %v650
        %v652 = vrot.slane %v647, %v651
        %v654 = vmul.f32 %v642, %v652
        %v655 = vmul.f32 %v643, %v652
        %v656 = vmul.f32 %v644, %v652
        %v657 = vmul.f32 %v645, %v652
        %v658 = vadd.f32 %v633, %v654
        %v659 = vadd.f32 %v634, %v655
        %v660 = vadd.f32 %v635, %v656
        %v661 = vadd.f32 %v636, %v657
        %v662 = vld [vmem:[%s2] sm:$0x1]
        %v664 = vlaneseq
        %v665 = vshrl.u32 %v664, 7
        %v666 = vsub.s32 0, %v665
        %v667 = vrot.slane %v662, %v666
        %v669 = vadd.f32 %v658, %v667
        %v670 = vadd.f32 %v659, %v667
        %v671 = vadd.f32 %v660, %v667
        %v672 = vadd.f32 %v661, %v667
        %v673 = vmax.f32 %v669, 0.0
        %v674 = vmax.f32 %v670, 0.0
        %v675 = vmax.f32 %v671, 0.0
        %v676 = vmax.f32 %v672, 0.0
        %vm677 = vcmask 1043456
        %v678 = vsel %vm677, %v673, 0.0
        %v679 = vsel %vm677, %v674, 0.0
        %v680 = vadd.f32 %v678, %v679
        %v681 = vsel %vm677, %v675, 0.0
        %v682 = vadd.f32 %v680, %v681
        %v683 = vsel %vm677, %v676, 0.0
        %v684 = vadd.f32 %v682, %v683
        %v685 = vrcp.pop 4.0
        %v686 = vmul.f32 %v684, %v685
        %v687 = vsel %vm677, %v686, 0.0
        %v688 = vrot.slane %v687, 4
        %v689 = vadd.f32 %v687, %v688
        %v690 = vrot.slane %v689, 2
        %v691 = vadd.f32 %v689, %v690
        %v692 = vrot.slane %v691, 1
        %v693 = vadd.f32 %v691, %v692
        %v694 = vmul.f32 %v693, %v685
        %v695 = vld [vmem:[%s3] sm:$0xff]
        %v696 = vld [vmem:[%s3 + $0x8] sm:$0xff]
        %v697 = vld [vmem:[%s3 + $0x10] sm:$0xff]
        %v698 = vld [vmem:[%s3 + $0x18] sm:$0xff]
        %v699 = vld [vmem:[%s3 + $0x20] sm:$0xff]
        %v700 = vld [vmem:[%s3 + $0x28] sm:$0xff]
        %v701 = vld [vmem:[%s3 + $0x30] sm:$0xff]
        %v702 = vld [vmem:[%s3 + $0x38] sm:$0xff]
        %v703 = vld [vmem:[%s3 + $0x40] sm:$0xff]
        %v704 = vld [vmem:[%s3 + $0x48] sm:$0xff]
        %v705 = vld [vmem:[%s3 + $0x50] sm:$0xff]
        %v706 = vld [vmem:[%s3 + $0x58] sm:$0xff]
        %v707 = vld [vmem:[%s3 + $0x60] sm:$0xff]
        %v708 = vld [vmem:[%s3 + $0x68] sm:$0xff]
        %v709 = vld [vmem:[%s3 + $0x70] sm:$0xff]
        %v710 = vld [vmem:[%s3 + $0x78] sm:$0xff]
        %v711 = vld [vmem:[%s4] sm:$0x1]
        %712 = vmatprep.subr.mxu0 0.0
        %713 = vmatpush1.msra.mxu0 %v710
        %714 = vmatprep.subr.mxu0 0.0
        %715 = vmatpush1.msra.mxu0 %v709
        %716 = vmatprep.subr.mxu0 0.0
        %717 = vmatpush1.msra.mxu0 %v708
        %718 = vmatprep.subr.mxu0 0.0
        %719 = vmatpush1.msra.mxu0 %v707
        %720 = vmatprep.subr.mxu0 0.0
        %721 = vmatpush1.msra.mxu0 %v706
        %722 = vmatprep.subr.mxu0 0.0
        %723 = vmatpush1.msra.mxu0 %v705
        %724 = vmatprep.subr.mxu0 0.0
        %725 = vmatpush1.msra.mxu0 %v704
        %726 = vmatprep.subr.mxu0 0.0
        %727 = vmatpush1.msra.mxu0 %v703
        %728 = vmatprep.subr.mxu0 0.0
        %729 = vmatpush1.msra.mxu0 %v702
        %730 = vmatprep.subr.mxu0 0.0
        %731 = vmatpush1.msra.mxu0 %v701
        %732 = vmatprep.subr.mxu0 0.0
        %733 = vmatpush1.msra.mxu0 %v700
        %734 = vmatprep.subr.mxu0 0.0
        %735 = vmatpush1.msra.mxu0 %v699
        %736 = vmatprep.subr.mxu0 0.0
        %737 = vmatpush1.msra.mxu0 %v698
        %738 = vmatprep.subr.mxu0 0.0
        %739 = vmatpush1.msra.mxu0 %v697
        %740 = vmatprep.subr.mxu0 0.0
        %741 = vmatpush1.msra.mxu0 %v696
        %742 = vmatprep.subr.mxu0 0.0
        %743 = vmatpush1.msra.mxu0 %v695
        %744 = vmatprep.subr.mxu0 0.0
        %745 = vmatpush2.msra.mxu0 0.0
        %746 = vmatprep.subr.mxu0 0.0
        %747 = vmatpush2.msra.mxu0 0.0
        %748 = vmatprep.subr.mxu0 0.0
        %749 = vmatpush2.msra.mxu0 0.0
        %750 = vmatprep.subr.mxu0 0.0
        %751 = vmatpush2.msra.mxu0 0.0
        %752 = vmatprep.subr.mxu0 0.0
        %753 = vmatpush2.msra.mxu0 0.0
        %754 = vmatprep.subr.mxu0 0.0
        %755 = vmatpush2.msra.mxu0 0.0
        %756 = vmatprep.subr.mxu0 0.0
        %757 = vmatpush2.msra.mxu0 0.0
        %758 = vmatprep.subr.mxu0 0.0
        %759 = vmatpush2.msra.mxu0 0.0
        %760 = vmatprep.subr.mxu0 0.0
        %761 = vmatpush2.msra.mxu0 0.0
        %762 = vmatprep.subr.mxu0 0.0
        %763 = vmatpush2.msra.mxu0 0.0
        %764 = vmatprep.subr.mxu0 0.0
        %765 = vmatpush2.msra.mxu0 0.0
        %766 = vmatprep.subr.mxu0 0.0
        %767 = vmatpush2.msra.mxu0 0.0
        %768 = vmatprep.subr.mxu0 0.0
        %769 = vmatpush2.msra.mxu0 0.0
        %770 = vmatprep.subr.mxu0 0.0
        %771 = vmatpush2.msra.mxu0 0.0
        %772 = vmatprep.subr.mxu0 0.0
        %773 = vmatpush2.msra.mxu0 0.0
        %774 = vmatprep.subr.mxu0 0.0
        %775 = vmatpush2.msra.mxu0 0.0
        %776 = vmatprep.mubr.f32.mxu0 0.0
        %777 = vmatmul.mubr.f32.gmra.mxu0 %v694
        %v778 = vpop.f32.mrf.mxu0
        %v779 = vadd.f32 %v711, %v778
        %v780 = vpop.f32.mrf.mxu0
        %781 = vdwg.mxu0
        %v782 = vmax.f32 %v779, 0.0
        %v783 = vld [vmem:[%s5] sm:$0xff]
        %v784 = vld [vmem:[%s5 + $0x8] sm:$0xff]
        %v785 = vld [vmem:[%s5 + $0x10] sm:$0xff]
        %v786 = vld [vmem:[%s5 + $0x18] sm:$0xff]
        %v787 = vld [vmem:[%s5 + $0x20] sm:$0xff]
        %v788 = vld [vmem:[%s5 + $0x28] sm:$0xff]
        %v789 = vld [vmem:[%s5 + $0x30] sm:$0xff]
        %v790 = vld [vmem:[%s5 + $0x38] sm:$0xff]
        %v791 = vld [vmem:[%s5 + $0x40] sm:$0xff]
        %v792 = vld [vmem:[%s5 + $0x48] sm:$0xff]
        %v793 = vld [vmem:[%s5 + $0x50] sm:$0xff]
        %v794 = vld [vmem:[%s5 + $0x58] sm:$0xff]
        %v795 = vld [vmem:[%s5 + $0x60] sm:$0xff]
        %v796 = vld [vmem:[%s5 + $0x68] sm:$0xff]
        %v797 = vld [vmem:[%s5 + $0x70] sm:$0xff]
        %v798 = vld [vmem:[%s5 + $0x78] sm:$0xff]
        %v799 = vld [vmem:[%s6] sm:$0x1]
        %800 = vmatprep.subr.mxu0 0.0
        %801 = vmatpush1.msra.mxu0 %v798
        %802 = vmatprep.subr.mxu0 0.0
        %803 = vmatpush1.msra.mxu0 %v797
        %804 = vmatprep.subr.mxu0 0.0
        %805 = vmatpush1.msra.mxu0 %v796
        %806 = vmatprep.subr.mxu0 0.0
        %807 = vmatpush1.msra.mxu0 %v795
        %808 = vmatprep.subr.mxu0 0.0
        %809 = vmatpush1.msra.mxu0 %v794
        %810 = vmatprep.subr.mxu0 0.0
        %811 = vmatpush1.msra.mxu0 %v793
        %812 = vmatprep.subr.mxu0 0.0
        %813 = vmatpush1.msra.mxu0 %v792
        %814 = vmatprep.subr.mxu0 0.0
        %815 = vmatpush1.msra.mxu0 %v791
        %816 = vmatprep.subr.mxu0 0.0
        %817 = vmatpush1.msra.mxu0 %v790
        %818 = vmatprep.subr.mxu0 0.0
        %819 = vmatpush1.msra.mxu0 %v789
        %820 = vmatprep.subr.mxu0 0.0
        %821 = vmatpush1.msra.mxu0 %v788
        %822 = vmatprep.subr.mxu0 0.0
        %823 = vmatpush1.msra.mxu0 %v787
        %824 = vmatprep.subr.mxu0 0.0
        %825 = vmatpush1.msra.mxu0 %v786
        %826 = vmatprep.subr.mxu0 0.0
        %827 = vmatpush1.msra.mxu0 %v785
        %828 = vmatprep.subr.mxu0 0.0
        %829 = vmatpush1.msra.mxu0 %v784
        %830 = vmatprep.subr.mxu0 0.0
        %831 = vmatpush1.msra.mxu0 %v783
        %832 = vmatprep.subr.mxu0 0.0
        %833 = vmatpush2.msra.mxu0 0.0
        %834 = vmatprep.subr.mxu0 0.0
        %835 = vmatpush2.msra.mxu0 0.0
        %836 = vmatprep.subr.mxu0 0.0
        %837 = vmatpush2.msra.mxu0 0.0
        %838 = vmatprep.subr.mxu0 0.0
        %839 = vmatpush2.msra.mxu0 0.0
        %840 = vmatprep.subr.mxu0 0.0
        %841 = vmatpush2.msra.mxu0 0.0
        %842 = vmatprep.subr.mxu0 0.0
        %843 = vmatpush2.msra.mxu0 0.0
        %844 = vmatprep.subr.mxu0 0.0
        %845 = vmatpush2.msra.mxu0 0.0
        %846 = vmatprep.subr.mxu0 0.0
        %847 = vmatpush2.msra.mxu0 0.0
        %848 = vmatprep.subr.mxu0 0.0
        %849 = vmatpush2.msra.mxu0 0.0
        %850 = vmatprep.subr.mxu0 0.0
        %851 = vmatpush2.msra.mxu0 0.0
        %852 = vmatprep.subr.mxu0 0.0
        %853 = vmatpush2.msra.mxu0 0.0
        %854 = vmatprep.subr.mxu0 0.0
        %855 = vmatpush2.msra.mxu0 0.0
        %856 = vmatprep.subr.mxu0 0.0
        %857 = vmatpush2.msra.mxu0 0.0
        %858 = vmatprep.subr.mxu0 0.0
        %859 = vmatpush2.msra.mxu0 0.0
        %860 = vmatprep.subr.mxu0 0.0
        %861 = vmatpush2.msra.mxu0 0.0
        %862 = vmatprep.subr.mxu0 0.0
        %863 = vmatpush2.msra.mxu0 0.0
        %864 = vmatprep.mubr.f32.mxu0 0.0
        %865 = vmatmul.mubr.f32.gmra.mxu0 %v782
        %v866 = vpop.f32.mrf.mxu0
        %v867 = vadd.f32 %v799, %v866
        %v868 = vpop.f32.mrf.mxu0
        %869 = vdwg.mxu0
        %v870 = vsub.f32 0.0, %v867
        %v871 = vmul.f32 %v870, 1.442695
        %v872 = vpow.pop %v871
        %v873 = vadd.f32 %v872, 1.0
        %v874 = vrcp.pop %v873
        %v875 = vmul.f32 1.0, %v874
        %v876 = vlaneseq
        %v877 = vshrl.u32 %v876, 7
        %v878 = vsub.s32 0, %v877
        %v879 = vrot.slane %v875, %v878
        %v880 = vmul.f32 %v673, %v879
        %v881 = vmul.f32 %v674, %v879
        %v882 = vmul.f32 %v675, %v879
        %v883 = vmul.f32 %v676, %v879
        %v884 = vpack.c.bf16 %v880, %v880
        %v885 = vpack.c.bf16 %v881, %v881
        %v886 = vpack.c.bf16 %v882, %v882
        %v887 = vpack.c.bf16 %v883, %v883
        %888 = vst [vmem:[%s438] sm:$0x3] %v884
        %889 = vst [vmem:[%s438 + $0x2] sm:$0x3] %v885
        %890 = vst [vmem:[%s438 + $0x4] sm:$0x3] %v886
        %891 = vst [vmem:[%s438 + $0x6] sm:$0x3] %v887
        %p892 = scmp.lt.s32.totalorder %s18, 1
        %s893 = scalar_select %p892, %s18, 1
        %s894 = smul.addr %s893, 4
        %s895 = smul.addr %s894, 2
        %s896 = scalar_lea.vmem %s7, %s895
        // Predicated region
        $region90: #{efficientnet_features_forward.13} parent=84 // pred_check
          %p897 = pneg %p188
        $region91: #{efficientnet_features_forward.13} parent=84 // pred_check_branch
          %899 = sbr.rel (%p897) target = $region93
        $region92: #{efficientnet_features_forward.13} parent=84 // pred_region
          _
        $region93: #{efficientnet_features_forward.13} parent=84 // pred_fallthru
          _
      $region85: #{efficientnet_features_forward.13} parent=5 // pred_fallthru
        _
      %p900 = scmp.le.s32.totalorder 2, %s13
      // Predicated region
      $region94: #{efficientnet_features_forward.13} parent=5 // pred_check
        %p901 = pneg %p900
      $region95: #{efficientnet_features_forward.13} parent=5 // pred_check_branch
        %903 = sbr.rel (%p901) target = $region97
      $region96: #{efficientnet_features_forward.13} parent=5 // pred_region
        %s904 = ssub.s32 %s13, 2
        // Predicated region
        $region98: #{efficientnet_features_forward.13} parent=96 // pred_check
          %p905 = pneg %p194
        $region99: #{efficientnet_features_forward.13} parent=96 // pred_check_branch
          %907 = sbr.rel (%p905) target = $region101
        $region100: #{efficientnet_features_forward.13} parent=96 // pred_region
          %p908 = scmp.lt.s32.totalorder %s19, 1
          %s909 = scalar_select %p908, %s19, 1
          %s910 = smul.addr %s909, 4
          %s911 = smul.addr %s910, 2
          %s912 = scalar_lea.vmem %s7, %s911
        $region101: #{efficientnet_features_forward.13} parent=96 // pred_fallthru
          _
      $region97: #{efficientnet_features_forward.13} parent=5 // pred_fallthru
        _
    $region6: #{efficientnet_features_forward.13} parent=1 // loop_footer
      %s17 = sadd.s32 1, %s13
    $region7: #{efficientnet_features_forward.13} parent=1 // loop_footer_branch
      %12 = sbr.rel target = $region3
    $region8: #{efficientnet_features_forward.13} parent=1 // loop_exit
      _

// kernel: efficientnet_features_forward.17
$region0: #{efficientnet_features_forward.17}
  #allocation0 [shape = 'u32[]', space=smem, size = 0x4, offset = 0x4, fixed_abs, tag = 'smem constant byte address 0x4 - core index']
  #allocation1 [shape = 'u32[144,128]{1,0:T(1,128)}', space=vmem, size = 0x12000, scoped, tag = 'internal scratch']
  %s0 = inlined_call_operand.vmem [shape: bf16[8,128], index: 0, kind: input, shape index: {}]
  %s1 = inlined_call_operand.vmem [shape: bf16[128,128], index: 1, kind: input, shape index: {}]
  %s2 = inlined_call_operand.vmem [shape: f32[1,128], index: 2, kind: input, shape index: {}]
  %s3 = inlined_call_operand.vmem [shape: bf16[8,128], index: 3, kind: output, shape index: {}]
  %s4 = sld [smem:[#allocation0]]
  $region22: #{efficientnet_features_forward.17} parent=0
    _
  %s6 = ssub.s32 1, %s4
  %s7 = scalar_select 0, %s6, %s4
  // Predicated region
  $region2: #{efficientnet_features_forward.17} parent=0 // pred_check
    _
  $region3: #{efficientnet_features_forward.17} parent=0 // pred_check_branch
    %9 = sbr.rel (0) target = $region5
  $region4: #{efficientnet_features_forward.17} parent=0 // pred_region
    _
  $region5: #{efficientnet_features_forward.17} parent=0 // pred_fallthru
    _
  // Predicated region
  $region6: #{efficientnet_features_forward.17} parent=0 // pred_check
    _
  $region7: #{efficientnet_features_forward.17} parent=0 // pred_check_branch
    %11 = sbr.rel (0) target = $region9
  $region8: #{efficientnet_features_forward.17} parent=0 // pred_region
    _
  $region9: #{efficientnet_features_forward.17} parent=0 // pred_fallthru
    _
  // Predicated region
  $region10: #{efficientnet_features_forward.17} parent=0 // pred_check
    _
  $region11: #{efficientnet_features_forward.17} parent=0 // pred_check_branch
    %13 = sbr.rel (0) target = $region13
  $region12: #{efficientnet_features_forward.17} parent=0 // pred_region
    _
  $region13: #{efficientnet_features_forward.17} parent=0 // pred_fallthru
    _
  %v15 = vld [vmem:[%s0] sm:$0xf]
  %v16 = vld [vmem:[%s1] sm:$0xf]
  %v17 = vld [vmem:[%s1 + $0x4] sm:$0xf]
  %v18 = vld [vmem:[%s1 + $0x8] sm:$0xf]
  %v19 = vld [vmem:[%s1 + $0xc] sm:$0xf]
  %v20 = vld [vmem:[%s1 + $0x10] sm:$0xf]
  %v21 = vld [vmem:[%s1 + $0x14] sm:$0xf]
  %v22 = vld [vmem:[%s1 + $0x18] sm:$0xf]
  %v23 = vld [vmem:[%s1 + $0x1c] sm:$0xf]
  %v24 = vld [vmem:[%s1 + $0x20] sm:$0xf]
  %v25 = vld [vmem:[%s1 + $0x24] sm:$0xf]
  %v26 = vld [vmem:[%s1 + $0x28] sm:$0xf]
  %v27 = vld [vmem:[%s1 + $0x2c] sm:$0xf]
  %v28 = vld [vmem:[%s1 + $0x30] sm:$0xf]
  %v29 = vld [vmem:[%s1 + $0x34] sm:$0xf]
  %v30 = vld [vmem:[%s1 + $0x38] sm:$0xf]
  %v31 = vld [vmem:[%s1 + $0x3c] sm:$0xf]
  %v32 = vld [vmem:[%s2] sm:$0x1]
  %v34 = vlaneseq
  %v35 = vshrl.u32 %v34, 7
  %v36 = vsub.s32 0, %v35
  %v37 = vrot.slane %v32, %v36
  %v55 = vunpack.c.l.b16 %v16
  %v56 = vunpack.c.l.b16 %v17
  %v57 = vunpack.c.l.b16 %v18
  %v58 = vunpack.c.l.b16 %v19
  %v59 = vunpack.c.l.b16 %v20
  %v60 = vunpack.c.l.b16 %v21
  %v61 = vunpack.c.l.b16 %v22
  %v62 = vunpack.c.l.b16 %v23
  %v63 = vunpack.c.l.b16 %v24
  %v64 = vunpack.c.l.b16 %v25
  %v65 = vunpack.c.l.b16 %v26
  %v66 = vunpack.c.l.b16 %v27
  %v67 = vunpack.c.l.b16 %v28
  %v68 = vunpack.c.l.b16 %v29
  %v69 = vunpack.c.l.b16 %v30
  %v70 = vunpack.c.l.b16 %v31
  %v71 = vpack.c.b16 %v56, %v55
  %v72 = vpack.c.b16 %v58, %v57
  %v73 = vpack.c.b16 %v60, %v59
  %v74 = vpack.c.b16 %v62, %v61
  %v75 = vpack.c.b16 %v64, %v63
  %v76 = vpack.c.b16 %v66, %v65
  %v77 = vpack.c.b16 %v68, %v67
  %v78 = vpack.c.b16 %v70, %v69
  %87 = vmatprep.subr.bf16.mxu0 0
  %88 = vmatpush1.bf16.msra.mxu0 %v78
  %89 = vmatprep.subr.bf16.mxu0 0
  %90 = vmatpush1.bf16.msra.mxu0 %v77
  %91 = vmatprep.subr.bf16.mxu0 0
  %92 = vmatpush1.bf16.msra.mxu0 %v76
  %93 = vmatprep.subr.bf16.mxu0 0
  %94 = vmatpush1.bf16.msra.mxu0 %v75
  %95 = vmatprep.subr.bf16.mxu0 0
  %96 = vmatpush1.bf16.msra.mxu0 %v74
  %97 = vmatprep.subr.bf16.mxu0 0
  %98 = vmatpush1.bf16.msra.mxu0 %v73
  %99 = vmatprep.subr.bf16.mxu0 0
  %100 = vmatpush1.bf16.msra.mxu0 %v72
  %101 = vmatprep.subr.bf16.mxu0 0
  %102 = vmatpush1.bf16.msra.mxu0 %v71
  %103 = vmatprep.subr.bf16.mxu0 0
  %104 = vmatpush2.bf16.msra.mxu0 0
  %105 = vmatprep.subr.bf16.mxu0 0
  %106 = vmatpush2.bf16.msra.mxu0 0
  %107 = vmatprep.subr.bf16.mxu0 0
  %108 = vmatpush2.bf16.msra.mxu0 0
  %109 = vmatprep.subr.bf16.mxu0 0
  %110 = vmatpush2.bf16.msra.mxu0 0
  %111 = vmatprep.subr.bf16.mxu0 0
  %112 = vmatpush2.bf16.msra.mxu0 0
  %113 = vmatprep.subr.bf16.mxu0 0
  %114 = vmatpush2.bf16.msra.mxu0 0
  %115 = vmatprep.subr.bf16.mxu0 0
  %116 = vmatpush2.bf16.msra.mxu0 0
  %117 = vmatprep.subr.bf16.mxu0 0
  %118 = vmatpush2.bf16.msra.mxu0 0
  %119 = vmatprep.mubr.bf16.mxu0 0
  %120 = vmatmul.mubr.bf16.gmra.mxu0 %v15
  %v121 = vpop.f32.mrf.mxu0
  %v122 = vadd.f32 %v37, %v121
  %v123 = vpop.f32.mrf.mxu0
  %v124 = vpop.f32.mrf.mxu0
  %v125 = vpop.f32.mrf.mxu0
  %126 = vdwg.mxu0
  %v127 = vpack.c.bf16 %v122, %v122
  %128 = vst [vmem:[%s3] sm:$0xf] %v127
  // Predicated region
  $region14: #{efficientnet_features_forward.17} parent=0 // pred_check
    _
  $region15: #{efficientnet_features_forward.17} parent=0 // pred_check_branch
    %130 = sbr.rel (0) target = $region17
  $region16: #{efficientnet_features_forward.17} parent=0 // pred_region
    _
  $region17: #{efficientnet_features_forward.17} parent=0 // pred_fallthru
    _
  // Predicated region
  $region18: #{efficientnet_features_forward.17} parent=0 // pred_check
    _
  $region19: #{efficientnet_features_forward.17} parent=0 // pred_check_branch
    %132 = sbr.rel (0) target = $region21
  $region20: #{efficientnet_features_forward.17} parent=0 // pred_region
    _
  $region21: #{efficientnet_features_forward.17} parent=0 // pred_fallthru
    _

// kernel: efficientnet_features_forward.16
$region0: #{efficientnet_features_forward.16}
  #allocation0 [shape = 'u32[]', space=smem, size = 0x4, offset = 0x4, fixed_abs, tag = 'smem constant byte address 0x4 - core index']
  #allocation1 [shape = 'u32[144,128]{1,0:T(1,128)}', space=vmem, size = 0x12000, scoped, tag = 'internal scratch']
  %s0 = inlined_call_operand.vmem [shape: bf16[6,2,3,2,128], index: 0, kind: input, shape index: {}]
  %s1 = inlined_call_operand.vmem [shape: f32[9,1,128], index: 1, kind: input, shape index: {}]
  %s2 = inlined_call_operand.vmem [shape: f32[1,128], index: 2, kind: input, shape index: {}]
  %s3 = inlined_call_operand.vmem [shape: f32[128,128], index: 3, kind: input, shape index: {}]
  %s4 = inlined_call_operand.vmem [shape: f32[1,128], index: 4, kind: input, shape index: {}]
  %s5 = inlined_call_operand.vmem [shape: f32[128,128], index: 5, kind: input, shape index: {}]
  %s6 = inlined_call_operand.vmem [shape: f32[1,128], index: 6, kind: input, shape index: {}]
  %s7 = inlined_call_operand.vmem [shape: bf16[2,2,2,128], index: 7, kind: output, shape index: {}]
  %s8 = sld [smem:[#allocation0]]
  $region102: #{efficientnet_features_forward.16} parent=0
    _
  %s10 = ssub.s32 1, %s8
  %s11 = scalar_select 0, %s10, %s8
  $region1: #{efficientnet_features_forward.16} parent=0
    #allocation2 [shape = 'u8[18432]{0}', space=vmem, size = 0x4800, scoped, tag = 'input window, operand 0']
    loop: start=0, step=1, limit=4
    $region2: #{efficientnet_features_forward.16} parent=1 // loop_pre_header
      _
    $region3: #{efficientnet_features_forward.16} parent=1 // loop_header
      %s13 = sphi 0, %s17
      %p14 = scmp.ge.s32.totalorder %s13, 4
      %s23 = sphi 0, %s25
      %s26 = sphi 0, %s23
      %s27 = sphi 0, %s26
      %s43 = sphi 0, %s27
      %s47 = sphi 0, %s47
      %s49 = sphi 0, %s47
      %s50 = sphi 0, %s49
      %s64 = sphi 0, %s50
      %s68 = sphi 0, %s68
      %s70 = sphi 0, %s68
      %s71 = sphi 0, %s70
      %s85 = sphi 0, %s71
      %s89 = sphi 0, %s89
      %s91 = sphi 0, %s89
      %s92 = sphi 0, %s91
      %s106 = sphi 0, %s92
      %s110 = sphi 0, %s110
      %s112 = sphi 0, %s110
      %s113 = sphi 0, %s112
      %s127 = sphi 0, %s113
      %s131 = sphi 0, %s131
      %s133 = sphi 0, %s131
      %s134 = sphi 0, %s133
      %s148 = sphi 0, %s134
      %s152 = sphi 0, %s152
      %s154 = sphi 0, %s152
      %s155 = sphi 0, %s154
      %s169 = sphi 0, %s155
      %s175 = sphi 0, %s177
      %s178 = sphi 0, %s175
      %s179 = sphi 0, %s178
      %s195 = sphi 0, %s179
    $region4: #{efficientnet_features_forward.16} parent=1 // loop_header_branch
      %16 = sbr.rel (%p14) target = $region8
    $region5: #{efficientnet_features_forward.16} parent=1 // loop_body
      %s18 = ssub.s32 %s13, 1
      %s19 = ssub.s32 %s13, 2
      %s20 = sadd.s32 %s13, 1
      %s21 = ssub.s32 %s13, %s20
      %p22 = scmp.eq.s32.totalorder %s21, 0
      %s24 = sadd.s32 %s23, 1
      %s25 = scalar_select %p22, %s23, %s24
      %p28 = pneg %p22
      %p29 = scmp.eq.s32.totalorder %s13, 1
      %p30 = por %p28, %p29
      %p31 = scmp.ne.s32.totalorder %s23, %s26
      %p32 = scmp.eq.s32.totalorder %s13, 0
      %p33 = por %p31, %p32
      %p34 = scmp.ne.s32.totalorder %s23, %s26
      %p35 = scmp.eq.s32.totalorder %s18, 1
      %p36 = por %p34, %p35
      %p37 = scmp.ne.s32.totalorder %s26, %s27
      %p38 = scmp.eq.s32.totalorder %s18, 0
      %p39 = por %p37, %p38
      %p40 = scmp.ne.s32.totalorder %s26, %s27
      %p41 = scmp.eq.s32.totalorder %s19, 1
      %p42 = por %p40, %p41
      %p44 = scmp.ne.s32.totalorder %s27, %s43
      %p45 = scmp.eq.s32.totalorder %s19, 0
      %p46 = por %p44, %p45
      %s48 = sadd.s32 %s47, 1
      %p51 = scmp.eq.s32.totalorder %s13, 1
      %p52 = scmp.ne.s32.totalorder %s47, %s49
      %p53 = scmp.eq.s32.totalorder %s13, 0
      %p54 = por %p52, %p53
      %p55 = scmp.ne.s32.totalorder %s47, %s49
      %p56 = scmp.eq.s32.totalorder %s18, 1
      %p57 = por %p55, %p56
      %p58 = scmp.ne.s32.totalorder %s49, %s50
      %p59 = scmp.eq.s32.totalorder %s18, 0
      %p60 = por %p58, %p59
      %p61 = scmp.ne.s32.totalorder %s49, %s50
      %p62 = scmp.eq.s32.totalorder %s19, 1
      %p63 = por %p61, %p62
      %p65 = scmp.ne.s32.totalorder %s50, %s64
      %p66 = scmp.eq.s32.totalorder %s19, 0
      %p67 = por %p65, %p66
      %s69 = sadd.s32 %s68, 1
      %p72 = scmp.eq.s32.totalorder %s13, 1
      %p73 = scmp.ne.s32.totalorder %s68, %s70
      %p74 = scmp.eq.s32.totalorder %s13, 0
      %p75 = por %p73, %p74
      %p76 = scmp.ne.s32.totalorder %s68, %s70
      %p77 = scmp.eq.s32.totalorder %s18, 1
      %p78 = por %p76, %p77
      %p79 = scmp.ne.s32.totalorder %s70, %s71
      %p80 = scmp.eq.s32.totalorder %s18, 0
      %p81 = por %p79, %p80
      %p82 = scmp.ne.s32.totalorder %s70, %s71
      %p83 = scmp.eq.s32.totalorder %s19, 1
      %p84 = por %p82, %p83
      %p86 = scmp.ne.s32.totalorder %s71, %s85
      %p87 = scmp.eq.s32.totalorder %s19, 0
      %p88 = por %p86, %p87
      %s90 = sadd.s32 %s89, 1
      %p93 = scmp.eq.s32.totalorder %s13, 1
      %p94 = scmp.ne.s32.totalorder %s89, %s91
      %p95 = scmp.eq.s32.totalorder %s13, 0
      %p96 = por %p94, %p95
      %p97 = scmp.ne.s32.totalorder %s89, %s91
      %p98 = scmp.eq.s32.totalorder %s18, 1
      %p99 = por %p97, %p98
      %p100 = scmp.ne.s32.totalorder %s91, %s92
      %p101 = scmp.eq.s32.totalorder %s18, 0
      %p102 = por %p100, %p101
      %p103 = scmp.ne.s32.totalorder %s91, %s92
      %p104 = scmp.eq.s32.totalorder %s19, 1
      %p105 = por %p103, %p104
      %p107 = scmp.ne.s32.totalorder %s92, %s106
      %p108 = scmp.eq.s32.totalorder %s19, 0
      %p109 = por %p107, %p108
      %s111 = sadd.s32 %s110, 1
      %p114 = scmp.eq.s32.totalorder %s13, 1
      %p115 = scmp.ne.s32.totalorder %s110, %s112
      %p116 = scmp.eq.s32.totalorder %s13, 0
      %p117 = por %p115, %p116
      %p118 = scmp.ne.s32.totalorder %s110, %s112
      %p119 = scmp.eq.s32.totalorder %s18, 1
      %p120 = por %p118, %p119
      %p121 = scmp.ne.s32.totalorder %s112, %s113
      %p122 = scmp.eq.s32.totalorder %s18, 0
      %p123 = por %p121, %p122
      %p124 = scmp.ne.s32.totalorder %s112, %s113
      %p125 = scmp.eq.s32.totalorder %s19, 1
      %p126 = por %p124, %p125
      %p128 = scmp.ne.s32.totalorder %s113, %s127
      %p129 = scmp.eq.s32.totalorder %s19, 0
      %p130 = por %p128, %p129
      %s132 = sadd.s32 %s131, 1
      %p135 = scmp.eq.s32.totalorder %s13, 1
      %p136 = scmp.ne.s32.totalorder %s131, %s133
      %p137 = scmp.eq.s32.totalorder %s13, 0
      %p138 = por %p136, %p137
      %p139 = scmp.ne.s32.totalorder %s131, %s133
      %p140 = scmp.eq.s32.totalorder %s18, 1
      %p141 = por %p139, %p140
      %p142 = scmp.ne.s32.totalorder %s133, %s134
      %p143 = scmp.eq.s32.totalorder %s18, 0
      %p144 = por %p142, %p143
      %p145 = scmp.ne.s32.totalorder %s133, %s134
      %p146 = scmp.eq.s32.totalorder %s19, 1
      %p147 = por %p145, %p146
      %p149 = scmp.ne.s32.totalorder %s134, %s148
      %p150 = scmp.eq.s32.totalorder %s19, 0
      %p151 = por %p149, %p150
      %s153 = sadd.s32 %s152, 1
      %p156 = scmp.eq.s32.totalorder %s13, 1
      %p157 = scmp.ne.s32.totalorder %s152, %s154
      %p158 = scmp.eq.s32.totalorder %s13, 0
      %p159 = por %p157, %p158
      %p160 = scmp.ne.s32.totalorder %s152, %s154
      %p161 = scmp.eq.s32.totalorder %s18, 1
      %p162 = por %p160, %p161
      %p163 = scmp.ne.s32.totalorder %s154, %s155
      %p164 = scmp.eq.s32.totalorder %s18, 0
      %p165 = por %p163, %p164
      %p166 = scmp.ne.s32.totalorder %s154, %s155
      %p167 = scmp.eq.s32.totalorder %s19, 1
      %p168 = por %p166, %p167
      %p170 = scmp.ne.s32.totalorder %s155, %s169
      %p171 = scmp.eq.s32.totalorder %s19, 0
      %p172 = por %p170, %p171
      %s173 = ssub.s32 %s13, %s20
      %p174 = scmp.eq.s32.totalorder %s173, 0
      %s176 = sadd.s32 %s175, 1
      %s177 = scalar_select %p174, %s175, %s176
      %p180 = pneg %p174
      %p181 = scmp.eq.s32.totalorder %s13, 1
      %p182 = por %p180, %p181
      %p183 = scmp.ne.s32.totalorder %s175, %s178
      %p184 = scmp.eq.s32.totalorder %s13, 0
      %p185 = por %p183, %p184
      %p186 = scmp.ne.s32.totalorder %s175, %s178
      %p187 = scmp.eq.s32.totalorder %s18, 1
      %p188 = por %p186, %p187
      %p189 = scmp.ne.s32.totalorder %s178, %s179
      %p190 = scmp.eq.s32.totalorder %s18, 0
      %p191 = por %p189, %p190
      %p192 = scmp.ne.s32.totalorder %s178, %s179
      %p193 = scmp.eq.s32.totalorder %s19, 1
      %p194 = por %p192, %p193
      %p196 = scmp.ne.s32.totalorder %s179, %s195
      %p197 = scmp.eq.s32.totalorder %s19, 0
      %p198 = por %p196, %p197
      %p199 = scmp.le.s32.totalorder 1, %s13
      %p200 = scmp.lt.s32.totalorder %s13, 3
      %p201 = pnand %p199, %p200
      %p202 = pneg %p201
      // Predicated region
      $region9: #{efficientnet_features_forward.16} parent=5 // pred_check
        _
      $region10: #{efficientnet_features_forward.16} parent=5 // pred_check_branch
        %204 = sbr.rel (%p201) target = $region12
      $region11: #{efficientnet_features_forward.16} parent=5 // pred_region
        %s205 = ssub.s32 %s13, 1
        // Predicated region
        $region13: #{efficientnet_features_forward.16} parent=11 // pred_check
          %p206 = pneg %p60
        $region14: #{efficientnet_features_forward.16} parent=11 // pred_check_branch
          %208 = sbr.rel (%p206) target = $region16
        $region15: #{efficientnet_features_forward.16} parent=11 // pred_region
          _
        $region16: #{efficientnet_features_forward.16} parent=11 // pred_fallthru
          _
        // Predicated region
        $region17: #{efficientnet_features_forward.16} parent=11 // pred_check
          %p209 = pneg %p81
        $region18: #{efficientnet_features_forward.16} parent=11 // pred_check_branch
          %211 = sbr.rel (%p209) target = $region20
        $region19: #{efficientnet_features_forward.16} parent=11 // pred_region
          _
        $region20: #{efficientnet_features_forward.16} parent=11 // pred_fallthru
          _
        // Predicated region
        $region21: #{efficientnet_features_forward.16} parent=11 // pred_check
          %p212 = pneg %p102
        $region22: #{efficientnet_features_forward.16} parent=11 // pred_check_branch
          %214 = sbr.rel (%p212) target = $region24
        $region23: #{efficientnet_features_forward.16} parent=11 // pred_region
          _
        $region24: #{efficientnet_features_forward.16} parent=11 // pred_fallthru
          _
        // Predicated region
        $region25: #{efficientnet_features_forward.16} parent=11 // pred_check
          %p215 = pneg %p123
        $region26: #{efficientnet_features_forward.16} parent=11 // pred_check_branch
          %217 = sbr.rel (%p215) target = $region28
        $region27: #{efficientnet_features_forward.16} parent=11 // pred_region
          _
        $region28: #{efficientnet_features_forward.16} parent=11 // pred_fallthru
          _
        // Predicated region
        $region29: #{efficientnet_features_forward.16} parent=11 // pred_check
          %p218 = pneg %p144
        $region30: #{efficientnet_features_forward.16} parent=11 // pred_check_branch
          %220 = sbr.rel (%p218) target = $region32
        $region31: #{efficientnet_features_forward.16} parent=11 // pred_region
          _
        $region32: #{efficientnet_features_forward.16} parent=11 // pred_fallthru
          _
        // Predicated region
        $region33: #{efficientnet_features_forward.16} parent=11 // pred_check
          %p221 = pneg %p165
        $region34: #{efficientnet_features_forward.16} parent=11 // pred_check_branch
          %223 = sbr.rel (%p221) target = $region36
        $region35: #{efficientnet_features_forward.16} parent=11 // pred_region
          _
        $region36: #{efficientnet_features_forward.16} parent=11 // pred_fallthru
          _
      $region12: #{efficientnet_features_forward.16} parent=5 // pred_fallthru
        _
      %p224 = scmp.lt.s32.totalorder %s13, 2
      // Predicated region
      $region37: #{efficientnet_features_forward.16} parent=5 // pred_check
        %p225 = pneg %p224
      $region38: #{efficientnet_features_forward.16} parent=5 // pred_check_branch
        %227 = sbr.rel (%p225) target = $region40
      $region39: #{efficientnet_features_forward.16} parent=5 // pred_region
        // Predicated region
        $region41: #{efficientnet_features_forward.16} parent=39 // pred_check
          %p228 = pneg %p33
        $region42: #{efficientnet_features_forward.16} parent=39 // pred_check_branch
          %230 = sbr.rel (%p228) target = $region44
        $region43: #{efficientnet_features_forward.16} parent=39 // pred_region
          %s231 = sand.u32 %s23, 1
          %s232 = sand.u32 %s23, 1
          %s233 = smul.addr %s232, 18
          %s234 = scalar_lea.vmem [#allocation2], %s233
          %s235 = smul.addr %s13, 3
          %s236 = scalar_lea.vmem %s0, %s235
          // Predicated region
          $region45: #{efficientnet_features_forward.16} parent=43 // pred_check
            _
          $region46: #{efficientnet_features_forward.16} parent=43 // pred_check_branch
            %238 = sbr.rel (0) target = $region48
          $region47: #{efficientnet_features_forward.16} parent=43 // pred_region
            // Predicated region
            $region49: #{efficientnet_features_forward.16} parent=47 // pred_check
              _
            $region50: #{efficientnet_features_forward.16} parent=47 // pred_check_branch
              %240 = sbr.rel target = $region52
            $region51: #{efficientnet_features_forward.16} parent=47 // pred_region
              // Predicated region
              $region64: #{efficientnet_features_forward.16} parent=51 // pred_check
                _
              $region65: #{efficientnet_features_forward.16} parent=51 // pred_check_branch
                %266 = sbr.rel (0) target = $region67
              $region66: #{efficientnet_features_forward.16} parent=51 // pred_region
                loop: start=0, step=1, limit=1
                $region68: #{efficientnet_features_forward.16} parent=66 // loop_pre_header
                  _
                $region69: #{efficientnet_features_forward.16} parent=66 // loop_header
                  %s268 = sphi 0, %s272
                  %p269 = scmp.ge.s32.totalorder %s268, 1
                  %s273 = sphi %s236, %s236
                  %s274 = sphi %s234, %s234
                $region70: #{efficientnet_features_forward.16} parent=66 // loop_header_branch
                  %271 = sbr.rel (%p269) target = $region74
                $region71: #{efficientnet_features_forward.16} parent=66 // loop_body
                  _
                $region72: #{efficientnet_features_forward.16} parent=66 // loop_footer
                  %s272 = sadd.s32 1, %s268
                $region73: #{efficientnet_features_forward.16} parent=66 // loop_footer_branch
                  %267 = sbr.rel target = $region69
                $region74: #{efficientnet_features_forward.16} parent=66 // loop_exit
                  _
                %s276 = ssub.s32 8, 1
                loop: start=0, step=1, limit=1
                $region75: #{efficientnet_features_forward.16} parent=66 // loop_pre_header
                  _
                $region76: #{efficientnet_features_forward.16} parent=66 // loop_header
                  %s278 = sphi 0, %s282
                  %p279 = scmp.ge.s32.totalorder %s278, 1
                  %s283 = sphi %s236, %s236
                  %s284 = sphi %s234, %s234
                $region77: #{efficientnet_features_forward.16} parent=66 // loop_header_branch
                  %281 = sbr.rel (%p279) target = $region81
                $region78: #{efficientnet_features_forward.16} parent=66 // loop_body
                  %v285 = vld [vmem:[%s283] sm:%s276]
                  %286 = vst [vmem:[%s284] sm:%s276] %v285
                  %v287 = vld [vmem:[%s283 + $0x6] sm:%s276]
                  %288 = vst [vmem:[%s284 + $0x3] sm:%s276] %v287
                  %v289 = vld [vmem:[%s283 + $0xc] sm:%s276]
                  %290 = vst [vmem:[%s284 + $0x6] sm:%s276] %v289
                  %v291 = vld [vmem:[%s283 + $0x12] sm:%s276]
                  %292 = vst [vmem:[%s284 + $0x9] sm:%s276] %v291
                  %v293 = vld [vmem:[%s283 + $0x18] sm:%s276]
                  %294 = vst [vmem:[%s284 + $0xc] sm:%s276] %v293
                  %v295 = vld [vmem:[%s283 + $0x1e] sm:%s276]
                  %296 = vst [vmem:[%s284 + $0xf] sm:%s276] %v295
                $region79: #{efficientnet_features_forward.16} parent=66 // loop_footer
                  %s282 = sadd.s32 1, %s278
                $region80: #{efficientnet_features_forward.16} parent=66 // loop_footer_branch
                  %277 = sbr.rel target = $region76
                $region81: #{efficientnet_features_forward.16} parent=66 // loop_exit
                  _
              $region67: #{efficientnet_features_forward.16} parent=51 // pred_fallthru
                _
            $region52: #{efficientnet_features_forward.16} parent=47 // pred_fallthru
              _
            // Predicated region
            $region53: #{efficientnet_features_forward.16} parent=47 // pred_check
              _
            $region54: #{efficientnet_features_forward.16} parent=47 // pred_check_branch
              %242 = sbr.rel (0) target = $region56
            $region55: #{efficientnet_features_forward.16} parent=47 // pred_region
              %s244 = ssub.s32 8, 1
              loop: start=0, step=1, limit=1
              $region57: #{efficientnet_features_forward.16} parent=55 // loop_pre_header
                _
              $region58: #{efficientnet_features_forward.16} parent=55 // loop_header
                %s246 = sphi 0, %s250
                %p247 = scmp.ge.s32.totalorder %s246, 1
                %s251 = sphi %s236, %s236
                %s252 = sphi %s234, %s234
              $region59: #{efficientnet_features_forward.16} parent=55 // loop_header_branch
                %249 = sbr.rel (%p247) target = $region63
              $region60: #{efficientnet_features_forward.16} parent=55 // loop_body
                %v253 = vld [vmem:[%s251] sm:%s244]
                %254 = vst [vmem:[%s252] sm:%s244] %v253
                %v255 = vld [vmem:[%s251 + $0x6] sm:%s244]
                %256 = vst [vmem:[%s252 + $0x3] sm:%s244] %v255
                %v257 = vld [vmem:[%s251 + $0xc] sm:%s244]
                %258 = vst [vmem:[%s252 + $0x6] sm:%s244] %v257
                %v259 = vld [vmem:[%s251 + $0x12] sm:%s244]
                %260 = vst [vmem:[%s252 + $0x9] sm:%s244] %v259
                %v261 = vld [vmem:[%s251 + $0x18] sm:%s244]
                %262 = vst [vmem:[%s252 + $0xc] sm:%s244] %v261
                %v263 = vld [vmem:[%s251 + $0x1e] sm:%s244]
                %264 = vst [vmem:[%s252 + $0xf] sm:%s244] %v263
              $region61: #{efficientnet_features_forward.16} parent=55 // loop_footer
                %s250 = sadd.s32 1, %s246
              $region62: #{efficientnet_features_forward.16} parent=55 // loop_footer_branch
                %245 = sbr.rel target = $region58
              $region63: #{efficientnet_features_forward.16} parent=55 // loop_exit
                _
            $region56: #{efficientnet_features_forward.16} parent=47 // pred_fallthru
              _
          $region48: #{efficientnet_features_forward.16} parent=43 // pred_fallthru
            _
          %297 = vnop
        $region44: #{efficientnet_features_forward.16} parent=39 // pred_fallthru
          _
      $region40: #{efficientnet_features_forward.16} parent=5 // pred_fallthru
        _
      %p298 = scmp.le.s32.totalorder 1, %s13
      %p299 = scmp.lt.s32.totalorder %s13, 3
      %p300 = pnand %p298, %p299
      %p301 = pneg %p300
      // Predicated region
      $region82: #{efficientnet_features_forward.16} parent=5 // pred_check
        _
      $region83: #{efficientnet_features_forward.16} parent=5 // pred_check_branch
        %303 = sbr.rel (%p300) target = $region85
      $region84: #{efficientnet_features_forward.16} parent=5 // pred_region
        %s304 = ssub.s32 %s13, 1
        %s305 = sand.u32 %s26, 1
        %s306 = sand.u32 %s26, 1
        %s307 = smul.addr %s306, 18
        %s308 = scalar_lea.vmem [#allocation2], %s307
        // Predicated region
        $region86: #{efficientnet_features_forward.16} parent=84 // pred_check
          %p309 = pneg %p39
        $region87: #{efficientnet_features_forward.16} parent=84 // pred_check_branch
          %311 = sbr.rel (%p309) target = $region89
        $region88: #{efficientnet_features_forward.16} parent=84 // pred_region
          _
        $region89: #{efficientnet_features_forward.16} parent=84 // pred_fallthru
          _
        %s312 = sand.u32 %s26, 1
        %s313 = sand.u32 %s26, 1
        %s314 = smul.addr %s313, 18
        %s315 = scalar_lea.vmem [#allocation2], %s314
        %p316 = pneg %p39
        %p317 = pneg %p36
        %p318 = pneg %p60
        %p319 = pneg %p57
        %p320 = pneg %p81
        %p321 = pneg %p78
        %p322 = pneg %p102
        %p323 = pneg %p99
        %p324 = pneg %p123
        %p325 = pneg %p120
        %p326 = pneg %p144
        %p327 = pneg %p141
        %p328 = pneg %p165
        %p329 = pneg %p162
        %p330 = pneg %p191
        %p331 = pneg %p188
        %p332 = scmp.lt.s32.totalorder %s18, 1
        %s333 = scalar_select %p332, %s18, 1
        %s334 = smul.addr %s333, 2
        %s335 = scalar_lea.vmem %s7, %s334
        %p336 = scmp.lt.s32.totalorder %s18, 1
        %s337 = scalar_select %p336, %s18, 1
        %s338 = smul.addr %s337, 2
        %s339 = scalar_lea.vmem %s7, %s338
        %v340 = vld [vmem:[%s308] sm:$0x1]
        %v341 = vld [vmem:[%s308 + $0x1] sm:$0x1]
        %v342 = vunpack.c.l.bf16 %v340
        %v343 = vunpack.c.l.bf16 %v341
        %v344 = vld [vmem:[%s1] sm:$0x1]
        %v346 = vlaneseq
        %v347 = vshrl.u32 %v346, 7
        %v348 = vsub.s32 0, %v347
        %v349 = vrot.slane %v344, %v348
        %v351 = vmul.f32 %v342, %v349
        %v352 = vmul.f32 %v343, %v349
        %v353 = vadd.f32 %v351, 0.0
        %v354 = vadd.f32 %v352, 0.0
        %s355 = scalar_lea.vmem %s308, 6 [#allocation2]
        %v356 = vld [vmem:[%s355] sm:$0x1]
        %v357 = vld [vmem:[%s355 + $0x1] sm:$0x1]
        %v358 = vunpack.c.l.bf16 %v356
        %v359 = vunpack.c.l.bf16 %v357
        %s360 = scalar_lea.vmem %s1, 1
        %v361 = vld [vmem:[%s360] sm:$0x1]
        %v363 = vlaneseq
        %v364 = vshrl.u32 %v363, 7
        %v365 = vsub.s32 0, %v364
        %v366 = vrot.slane %v361, %v365
        %v368 = vmul.f32 %v358, %v366
        %v369 = vmul.f32 %v359, %v366
        %v370 = vadd.f32 %v353, %v368
        %v371 = vadd.f32 %v354, %v369
        %s372 = scalar_lea.vmem %s308, 12 [#allocation2]
        %v373 = vld [vmem:[%s372] sm:$0x1]
        %v374 = vld [vmem:[%s372 + $0x1] sm:$0x1]
        %v375 = vunpack.c.l.bf16 %v373
        %v376 = vunpack.c.l.bf16 %v374
        %s377 = scalar_lea.vmem %s1, 2
        %v378 = vld [vmem:[%s377] sm:$0x1]
        %v380 = vlaneseq
        %v381 = vshrl.u32 %v380, 7
        %v382 = vsub.s32 0, %v381
        %v383 = vrot.slane %v378, %v382
        %v385 = vmul.f32 %v375, %v383
        %v386 = vmul.f32 %v376, %v383
        %v387 = vadd.f32 %v370, %v385
        %v388 = vadd.f32 %v371, %v386
        %s389 = scalar_lea.vmem %s308, 3 [#allocation2]
        %v390 = vld [vmem:[%s389] sm:$0x1]
        %v391 = vld [vmem:[%s389 + $0x1] sm:$0x1]
        %v392 = vunpack.c.l.bf16 %v390
        %v393 = vunpack.c.l.bf16 %v391
        %s394 = scalar_lea.vmem %s1, 3
        %v395 = vld [vmem:[%s394] sm:$0x1]
        %v397 = vlaneseq
        %v398 = vshrl.u32 %v397, 7
        %v399 = vsub.s32 0, %v398
        %v400 = vrot.slane %v395, %v399
        %v402 = vmul.f32 %v392, %v400
        %v403 = vmul.f32 %v393, %v400
        %v404 = vadd.f32 %v387, %v402
        %v405 = vadd.f32 %v388, %v403
        %s406 = scalar_lea.vmem %s308, 9 [#allocation2]
        %v407 = vld [vmem:[%s406] sm:$0x1]
        %v408 = vld [vmem:[%s406 + $0x1] sm:$0x1]
        %v409 = vunpack.c.l.bf16 %v407
        %v410 = vunpack.c.l.bf16 %v408
        %s411 = scalar_lea.vmem %s1, 4
        %v412 = vld [vmem:[%s411] sm:$0x1]
        %v414 = vlaneseq
        %v415 = vshrl.u32 %v414, 7
        %v416 = vsub.s32 0, %v415
        %v417 = vrot.slane %v412, %v416
        %v419 = vmul.f32 %v409, %v417
        %v420 = vmul.f32 %v410, %v417
        %v421 = vadd.f32 %v404, %v419
        %v422 = vadd.f32 %v405, %v420
        %s423 = scalar_lea.vmem %s308, 15 [#allocation2]
        %v424 = vld [vmem:[%s423] sm:$0x1]
        %v425 = vld [vmem:[%s423 + $0x1] sm:$0x1]
        %v426 = vunpack.c.l.bf16 %v424
        %v427 = vunpack.c.l.bf16 %v425
        %s428 = scalar_lea.vmem %s1, 5
        %v429 = vld [vmem:[%s428] sm:$0x1]
        %v431 = vlaneseq
        %v432 = vshrl.u32 %v431, 7
        %v433 = vsub.s32 0, %v432
        %v434 = vrot.slane %v429, %v433
        %v436 = vmul.f32 %v426, %v434
        %v437 = vmul.f32 %v427, %v434
        %v438 = vadd.f32 %v421, %v436
        %v439 = vadd.f32 %v422, %v437
        %s440 = scalar_lea.vmem %s308, 1 [#allocation2]
        %v441 = vld [vmem:[%s440] sm:$0x1]
        %v442 = vld [vmem:[%s440 + $0x1] sm:$0x1]
        %v443 = vunpack.c.l.bf16 %v441
        %v444 = vunpack.c.l.bf16 %v442
        %s445 = scalar_lea.vmem %s1, 6
        %v446 = vld [vmem:[%s445] sm:$0x1]
        %v448 = vlaneseq
        %v449 = vshrl.u32 %v448, 7
        %v450 = vsub.s32 0, %v449
        %v451 = vrot.slane %v446, %v450
        %v453 = vmul.f32 %v443, %v451
        %v454 = vmul.f32 %v444, %v451
        %v455 = vadd.f32 %v438, %v453
        %v456 = vadd.f32 %v439, %v454
        %s457 = scalar_lea.vmem %s308, 7 [#allocation2]
        %v458 = vld [vmem:[%s457] sm:$0x1]
        %v459 = vld [vmem:[%s457 + $0x1] sm:$0x1]
        %v460 = vunpack.c.l.bf16 %v458
        %v461 = vunpack.c.l.bf16 %v459
        %s462 = scalar_lea.vmem %s1, 7
        %v463 = vld [vmem:[%s462] sm:$0x1]
        %v465 = vlaneseq
        %v466 = vshrl.u32 %v465, 7
        %v467 = vsub.s32 0, %v466
        %v468 = vrot.slane %v463, %v467
        %v470 = vmul.f32 %v460, %v468
        %v471 = vmul.f32 %v461, %v468
        %v472 = vadd.f32 %v455, %v470
        %v473 = vadd.f32 %v456, %v471
        %s474 = scalar_lea.vmem %s308, 13 [#allocation2]
        %v475 = vld [vmem:[%s474] sm:$0x1]
        %v476 = vld [vmem:[%s474 + $0x1] sm:$0x1]
        %v477 = vunpack.c.l.bf16 %v475
        %v478 = vunpack.c.l.bf16 %v476
        %s479 = scalar_lea.vmem %s1, 8
        %v480 = vld [vmem:[%s479] sm:$0x1]
        %v482 = vlaneseq
        %v483 = vshrl.u32 %v482, 7
        %v484 = vsub.s32 0, %v483
        %v485 = vrot.slane %v480, %v484
        %v487 = vmul.f32 %v477, %v485
        %v488 = vmul.f32 %v478, %v485
        %v489 = vadd.f32 %v472, %v487
        %v490 = vadd.f32 %v473, %v488
        %v491 = vld [vmem:[%s2] sm:$0x1]
        %v493 = vlaneseq
        %v494 = vshrl.u32 %v493, 7
        %v495 = vsub.s32 0, %v494
        %v496 = vrot.slane %v491, %v495
        %v498 = vadd.f32 %v489, %v496
        %v499 = vadd.f32 %v490, %v496
        %v500 = vmax.f32 %v498, 0.0
        %v501 = vmax.f32 %v499, 0.0
        %vm502 = vcmask 1041408
        %v503 = vsel %vm502, %v500, 0.0
        %v504 = vsel %vm502, %v501, 0.0
        %v505 = vadd.f32 %v503, %v504
        %v506 = vrcp.pop 2.0
        %v507 = vmul.f32 %v505, %v506
        %v508 = vsel %vm502, %v507, 0.0
        %v509 = vrot.slane %v508, 4
        %v510 = vadd.f32 %v508, %v509
        %v511 = vrot.slane %v510, 2
        %v512 = vadd.f32 %v510, %v511
        %v513 = vrot.slane %v512, 1
        %v514 = vadd.f32 %v512, %v513
        %v515 = vmul.f32 %v514, %v506
        %v516 = vld [vmem:[%s3] sm:$0xff]
        %v517 = vld [vmem:[%s3 + $0x8] sm:$0xff]
        %v518 = vld [vmem:[%s3 + $0x10] sm:$0xff]
        %v519 = vld [vmem:[%s3 + $0x18] sm:$0xff]
        %v520 = vld [vmem:[%s3 + $0x20] sm:$0xff]
        %v521 = vld [vmem:[%s3 + $0x28] sm:$0xff]
        %v522 = vld [vmem:[%s3 + $0x30] sm:$0xff]
        %v523 = vld [vmem:[%s3 + $0x38] sm:$0xff]
        %v524 = vld [vmem:[%s3 + $0x40] sm:$0xff]
        %v525 = vld [vmem:[%s3 + $0x48] sm:$0xff]
        %v526 = vld [vmem:[%s3 + $0x50] sm:$0xff]
        %v527 = vld [vmem:[%s3 + $0x58] sm:$0xff]
        %v528 = vld [vmem:[%s3 + $0x60] sm:$0xff]
        %v529 = vld [vmem:[%s3 + $0x68] sm:$0xff]
        %v530 = vld [vmem:[%s3 + $0x70] sm:$0xff]
        %v531 = vld [vmem:[%s3 + $0x78] sm:$0xff]
        %v532 = vld [vmem:[%s4] sm:$0x1]
        %533 = vmatprep.subr.mxu0 0.0
        %534 = vmatpush1.msra.mxu0 %v531
        %535 = vmatprep.subr.mxu0 0.0
        %536 = vmatpush1.msra.mxu0 %v530
        %537 = vmatprep.subr.mxu0 0.0
        %538 = vmatpush1.msra.mxu0 %v529
        %539 = vmatprep.subr.mxu0 0.0
        %540 = vmatpush1.msra.mxu0 %v528
        %541 = vmatprep.subr.mxu0 0.0
        %542 = vmatpush1.msra.mxu0 %v527
        %543 = vmatprep.subr.mxu0 0.0
        %544 = vmatpush1.msra.mxu0 %v526
        %545 = vmatprep.subr.mxu0 0.0
        %546 = vmatpush1.msra.mxu0 %v525
        %547 = vmatprep.subr.mxu0 0.0
        %548 = vmatpush1.msra.mxu0 %v524
        %549 = vmatprep.subr.mxu0 0.0
        %550 = vmatpush1.msra.mxu0 %v523
        %551 = vmatprep.subr.mxu0 0.0
        %552 = vmatpush1.msra.mxu0 %v522
        %553 = vmatprep.subr.mxu0 0.0
        %554 = vmatpush1.msra.mxu0 %v521
        %555 = vmatprep.subr.mxu0 0.0
        %556 = vmatpush1.msra.mxu0 %v520
        %557 = vmatprep.subr.mxu0 0.0
        %558 = vmatpush1.msra.mxu0 %v519
        %559 = vmatprep.subr.mxu0 0.0
        %560 = vmatpush1.msra.mxu0 %v518
        %561 = vmatprep.subr.mxu0 0.0
        %562 = vmatpush1.msra.mxu0 %v517
        %563 = vmatprep.subr.mxu0 0.0
        %564 = vmatpush1.msra.mxu0 %v516
        %565 = vmatprep.subr.mxu0 0.0
        %566 = vmatpush2.msra.mxu0 0.0
        %567 = vmatprep.subr.mxu0 0.0
        %568 = vmatpush2.msra.mxu0 0.0
        %569 = vmatprep.subr.mxu0 0.0
        %570 = vmatpush2.msra.mxu0 0.0
        %571 = vmatprep.subr.mxu0 0.0
        %572 = vmatpush2.msra.mxu0 0.0
        %573 = vmatprep.subr.mxu0 0.0
        %574 = vmatpush2.msra.mxu0 0.0
        %575 = vmatprep.subr.mxu0 0.0
        %576 = vmatpush2.msra.mxu0 0.0
        %577 = vmatprep.subr.mxu0 0.0
        %578 = vmatpush2.msra.mxu0 0.0
        %579 = vmatprep.subr.mxu0 0.0
        %580 = vmatpush2.msra.mxu0 0.0
        %581 = vmatprep.subr.mxu0 0.0
        %582 = vmatpush2.msra.mxu0 0.0
        %583 = vmatprep.subr.mxu0 0.0
        %584 = vmatpush2.msra.mxu0 0.0
        %585 = vmatprep.subr.mxu0 0.0
        %586 = vmatpush2.msra.mxu0 0.0
        %587 = vmatprep.subr.mxu0 0.0
        %588 = vmatpush2.msra.mxu0 0.0
        %589 = vmatprep.subr.mxu0 0.0
        %590 = vmatpush2.msra.mxu0 0.0
        %591 = vmatprep.subr.mxu0 0.0
        %592 = vmatpush2.msra.mxu0 0.0
        %593 = vmatprep.subr.mxu0 0.0
        %594 = vmatpush2.msra.mxu0 0.0
        %595 = vmatprep.subr.mxu0 0.0
        %596 = vmatpush2.msra.mxu0 0.0
        %597 = vmatprep.mubr.f32.mxu0 0.0
        %598 = vmatmul.mubr.f32.gmra.mxu0 %v515
        %v599 = vpop.f32.mrf.mxu0
        %v600 = vadd.f32 %v532, %v599
        %v601 = vpop.f32.mrf.mxu0
        %602 = vdwg.mxu0
        %v603 = vmax.f32 %v600, 0.0
        %v604 = vld [vmem:[%s5] sm:$0xff]
        %v605 = vld [vmem:[%s5 + $0x8] sm:$0xff]
        %v606 = vld [vmem:[%s5 + $0x10] sm:$0xff]
        %v607 = vld [vmem:[%s5 + $0x18] sm:$0xff]
        %v608 = vld [vmem:[%s5 + $0x20] sm:$0xff]
        %v609 = vld [vmem:[%s5 + $0x28] sm:$0xff]
        %v610 = vld [vmem:[%s5 + $0x30] sm:$0xff]
        %v611 = vld [vmem:[%s5 + $0x38] sm:$0xff]
        %v612 = vld [vmem:[%s5 + $0x40] sm:$0xff]
        %v613 = vld [vmem:[%s5 + $0x48] sm:$0xff]
        %v614 = vld [vmem:[%s5 + $0x50] sm:$0xff]
        %v615 = vld [vmem:[%s5 + $0x58] sm:$0xff]
        %v616 = vld [vmem:[%s5 + $0x60] sm:$0xff]
        %v617 = vld [vmem:[%s5 + $0x68] sm:$0xff]
        %v618 = vld [vmem:[%s5 + $0x70] sm:$0xff]
        %v619 = vld [vmem:[%s5 + $0x78] sm:$0xff]
        %v620 = vld [vmem:[%s6] sm:$0x1]
        %621 = vmatprep.subr.mxu0 0.0
        %622 = vmatpush1.msra.mxu0 %v619
        %623 = vmatprep.subr.mxu0 0.0
        %624 = vmatpush1.msra.mxu0 %v618
        %625 = vmatprep.subr.mxu0 0.0
        %626 = vmatpush1.msra.mxu0 %v617
        %627 = vmatprep.subr.mxu0 0.0
        %628 = vmatpush1.msra.mxu0 %v616
        %629 = vmatprep.subr.mxu0 0.0
        %630 = vmatpush1.msra.mxu0 %v615
        %631 = vmatprep.subr.mxu0 0.0
        %632 = vmatpush1.msra.mxu0 %v614
        %633 = vmatprep.subr.mxu0 0.0
        %634 = vmatpush1.msra.mxu0 %v613
        %635 = vmatprep.subr.mxu0 0.0
        %636 = vmatpush1.msra.mxu0 %v612
        %637 = vmatprep.subr.mxu0 0.0
        %638 = vmatpush1.msra.mxu0 %v611
        %639 = vmatprep.subr.mxu0 0.0
        %640 = vmatpush1.msra.mxu0 %v610
        %641 = vmatprep.subr.mxu0 0.0
        %642 = vmatpush1.msra.mxu0 %v609
        %643 = vmatprep.subr.mxu0 0.0
        %644 = vmatpush1.msra.mxu0 %v608
        %645 = vmatprep.subr.mxu0 0.0
        %646 = vmatpush1.msra.mxu0 %v607
        %647 = vmatprep.subr.mxu0 0.0
        %648 = vmatpush1.msra.mxu0 %v606
        %649 = vmatprep.subr.mxu0 0.0
        %650 = vmatpush1.msra.mxu0 %v605
        %651 = vmatprep.subr.mxu0 0.0
        %652 = vmatpush1.msra.mxu0 %v604
        %653 = vmatprep.subr.mxu0 0.0
        %654 = vmatpush2.msra.mxu0 0.0
        %655 = vmatprep.subr.mxu0 0.0
        %656 = vmatpush2.msra.mxu0 0.0
        %657 = vmatprep.subr.mxu0 0.0
        %658 = vmatpush2.msra.mxu0 0.0
        %659 = vmatprep.subr.mxu0 0.0
        %660 = vmatpush2.msra.mxu0 0.0
        %661 = vmatprep.subr.mxu0 0.0
        %662 = vmatpush2.msra.mxu0 0.0
        %663 = vmatprep.subr.mxu0 0.0
        %664 = vmatpush2.msra.mxu0 0.0
        %665 = vmatprep.subr.mxu0 0.0
        %666 = vmatpush2.msra.mxu0 0.0
        %667 = vmatprep.subr.mxu0 0.0
        %668 = vmatpush2.msra.mxu0 0.0
        %669 = vmatprep.subr.mxu0 0.0
        %670 = vmatpush2.msra.mxu0 0.0
        %671 = vmatprep.subr.mxu0 0.0
        %672 = vmatpush2.msra.mxu0 0.0
        %673 = vmatprep.subr.mxu0 0.0
        %674 = vmatpush2.msra.mxu0 0.0
        %675 = vmatprep.subr.mxu0 0.0
        %676 = vmatpush2.msra.mxu0 0.0
        %677 = vmatprep.subr.mxu0 0.0
        %678 = vmatpush2.msra.mxu0 0.0
        %679 = vmatprep.subr.mxu0 0.0
        %680 = vmatpush2.msra.mxu0 0.0
        %681 = vmatprep.subr.mxu0 0.0
        %682 = vmatpush2.msra.mxu0 0.0
        %683 = vmatprep.subr.mxu0 0.0
        %684 = vmatpush2.msra.mxu0 0.0
        %685 = vmatprep.mubr.f32.mxu0 0.0
        %686 = vmatmul.mubr.f32.gmra.mxu0 %v603
        %v687 = vpop.f32.mrf.mxu0
        %v688 = vadd.f32 %v620, %v687
        %v689 = vpop.f32.mrf.mxu0
        %690 = vdwg.mxu0
        %v691 = vsub.f32 0.0, %v688
        %v692 = vmul.f32 %v691, 1.442695
        %v693 = vpow.pop %v692
        %v694 = vadd.f32 %v693, 1.0
        %v695 = vrcp.pop %v694
        %v696 = vmul.f32 1.0, %v695
        %v697 = vlaneseq
        %v698 = vshrl.u32 %v697, 7
        %v699 = vsub.s32 0, %v698
        %v700 = vrot.slane %v696, %v699
        %v701 = vmul.f32 %v500, %v700
        %v702 = vmul.f32 %v501, %v700
        %v703 = vpack.c.bf16 %v701, %v701
        %v704 = vpack.c.bf16 %v702, %v702
        %705 = vst [vmem:[%s339] sm:$0x1] %v703
        %706 = vst [vmem:[%s339 + $0x1] sm:$0x1] %v704
        %p707 = scmp.lt.s32.totalorder %s18, 1
        %s708 = scalar_select %p707, %s18, 1
        %s709 = smul.addr %s708, 2
        %s710 = scalar_lea.vmem %s7, %s709
        // Predicated region
        $region90: #{efficientnet_features_forward.16} parent=84 // pred_check
          %p711 = pneg %p188
        $region91: #{efficientnet_features_forward.16} parent=84 // pred_check_branch
          %713 = sbr.rel (%p711) target = $region93
        $region92: #{efficientnet_features_forward.16} parent=84 // pred_region
          _
        $region93: #{efficientnet_features_forward.16} parent=84 // pred_fallthru
          _
      $region85: #{efficientnet_features_forward.16} parent=5 // pred_fallthru
        _
      %p714 = scmp.le.s32.totalorder 2, %s13
      // Predicated region
      $region94: #{efficientnet_features_forward.16} parent=5 // pred_check
        %p715 = pneg %p714
      $region95: #{efficientnet_features_forward.16} parent=5 // pred_check_branch
        %717 = sbr.rel (%p715) target = $region97
      $region96: #{efficientnet_features_forward.16} parent=5 // pred_region
        %s718 = ssub.s32 %s13, 2
        // Predicated region
        $region98: #{efficientnet_features_forward.16} parent=96 // pred_check
          %p719 = pneg %p194
        $region99: #{efficientnet_features_forward.16} parent=96 // pred_check_branch
          %721 = sbr.rel (%p719) target = $region101
        $region100: #{efficientnet_features_forward.16} parent=96 // pred_region
          %p722 = scmp.lt.s32.totalorder %s19, 1
          %s723 = scalar_select %p722, %s19, 1
          %s724 = smul.addr %s723, 2
          %s725 = scalar_lea.vmem %s7, %s724
        $region101: #{efficientnet_features_forward.16} parent=96 // pred_fallthru
          _
      $region97: #{efficientnet_features_forward.16} parent=5 // pred_fallthru
        _
    $region6: #{efficientnet_features_forward.16} parent=1 // loop_footer
      %s17 = sadd.s32 1, %s13
    $region7: #{efficientnet_features_forward.16} parent=1 // loop_footer_branch
      %12 = sbr.rel target = $region3
    $region8: #{efficientnet_features_forward.16} parent=1 // loop_exit
      _

</llo_original>
